<compile_context>
chip_gen: v6e
topology: v6e:2x2x1
jax: 0.10.0
libtpu: 0.0.40
codegen_flags: <defaults>
</compile_context>

<pallas_src>
import functools
import math

import jax
import jax.numpy as jnp
from jax.experimental import pallas as pl
from jax.experimental.pallas import tpu as pltpu


# ----------------------------------------------------------------------------
# helpers
# ----------------------------------------------------------------------------
def _round_up(x, m):
    return ((x + m - 1) // m) * m


def _pad_channels(v, cp):
    return jnp.pad(v, (0, cp - v.shape[0])).astype(jnp.float32)


def _vmem_limit(bytes_needed):
    # Footprint-derived limit (review item): generous headroom, but well under
    # v7x's 64 MiB-per-TensorCore physical VMEM.
    return int(min(max(4 * int(bytes_needed), 16 * 1024 * 1024),
                   48 * 1024 * 1024))


# ----------------------------------------------------------------------------
# Fused conv (3x3 / 1x1, stride folded into layout) + BN partial statistics
# ----------------------------------------------------------------------------
def _conv_bn_stats_kernel(x_ref, w_ref, y_ref, s_ref, q_ref, *,
                          taps, stride, Ho, Wo, Cin, Cout_p):
    """One batch element per grid step.

    x_ref : (1, Hp//s, s, Wp//s, s*Cin)  bf16  (stride folded into the layout)
    w_ref : (T, Cin, Cout_p)             bf16  (VMEM resident, constant index)
    y_ref : (1, Ho*Wo, Cout_p)           bf16  conv output
    s_ref : (1, 1, Cout_p)               f32   per-image  sum_m y[m, c]
    q_ref : (1, 1, Cout_p)               f32   per-image  sum_m y[m, c]^2
    """
    M = Ho * Wo
    acc = jnp.zeros((M, Cout_p), jnp.float32)
    for t, (kh, kw) in enumerate(taps):
        a, p = divmod(kh, stride)
        b, q = divmod(kw, stride)
        # Unit-stride window of the stride-folded input, shape (Ho, Wo, Cin).
        xt = x_ref[0, a:a + Ho, p, b:b + Wo, q * Cin:(q + 1) * Cin]
        acc += jnp.dot(xt.reshape(M, Cin), w_ref[t],
                       preferred_element_type=jnp.float32)
    y_ref[0] = acc.astype(y_ref.dtype)
    # BN partial statistics from the f32 accumulator (fused into the flush).
    s_ref[0] = jnp.sum(acc, axis=0, keepdims=True)
    q_ref[0] = jnp.sum(acc * acc, axis=0, keepdims=True)


def conv_bn_stats(x_nhwc, w_taps, *, stride, pad, ksize):
    """Fused conv + BN partial stats.  x: bf16 NHWC;  w: (T, Cin, Cout_p) bf16."""
    N, H, W, Cin = x_nhwc.shape
    T, cin_w, Cout_p = w_taps.shape
    assert cin_w == Cin and T == ksize * ksize
    Ho = (H + 2 * pad - ksize) // stride + 1
    Wo = (W + 2 * pad - ksize) // stride + 1
    M = Ho * Wo

    xp = x_nhwc
    if pad:
        xp = jnp.pad(xp, ((0, 0), (pad, pad), (pad, pad), (0, 0)))
    Hp, Wp = xp.shape[1], xp.shape[2]
    s = stride
    assert Hp % s == 0 and Wp % s == 0, "spatial extent (+pad) must divide stride"

    # Metadata-only (row-major contiguous) reshape that folds the stride:
    # tap (kh, kw) becomes the unit-stride window
    #   [kh//s : kh//s + Ho, kh%s, kw//s : kw//s + Wo, (kw%s)*Cin : +Cin].
    xr = xp.reshape(N, Hp // s, s, Wp // s, s * Cin)
    blk_x = (1, Hp // s, s, Wp // s, s * Cin)

    taps = tuple((kh, kw) for kh in range(ksize) for kw in range(ksize))
    kernel = functools.partial(_conv_bn_stats_kernel, taps=taps, stride=s,
                               Ho=Ho, Wo=Wo, Cin=Cin, Cout_p=Cout_p)

    vmem = _vmem_limit(2 * math.prod(blk_x) * 2            # x block (dbl-buffered)
                       + 2 * w_taps.size * 2               # resident weights
                       + 2 * (M * Cout_p * 2 + 2 * Cout_p * 4)  # outputs
                       + 4 * M * Cout_p * 4)               # f32 acc + relayouts

    y, psum, pssq = pl.pallas_call(
        kernel,
        out_shape=(jax.ShapeDtypeStruct((N, M, Cout_p), jnp.bfloat16),
                   jax.ShapeDtypeStruct((N, 1, Cout_p), jnp.float32),
                   jax.ShapeDtypeStruct((N, 1, Cout_p), jnp.float32)),
        grid_spec=pltpu.PrefetchScalarGridSpec(
            num_scalar_prefetch=0,
            grid=(N,),
            in_specs=[pl.BlockSpec(blk_x, lambda n: (n, 0, 0, 0, 0)),
                      pl.BlockSpec((T, Cin, Cout_p), lambda n: (0, 0, 0))],
            out_specs=[pl.BlockSpec((1, M, Cout_p), lambda n: (n, 0, 0)),
                       pl.BlockSpec((1, 1, Cout_p), lambda n: (n, 0, 0)),
                       pl.BlockSpec((1, 1, Cout_p), lambda n: (n, 0, 0))]),
        compiler_params=pltpu.CompilerParams(
            dimension_semantics=("parallel",),
            vmem_limit_bytes=vmem),
        cost_estimate=pl.CostEstimate(
            flops=2 * N * M * Cin * Cout_p * T + 3 * N * M * Cout_p,
            transcendentals=0,
            bytes_accessed=int(xr.size * 2 + w_taps.size * 2
                               + N * M * Cout_p * 2 + 4 * N * Cout_p * 4)),
    )(xr, w_taps)
    return y, psum, pssq


# ----------------------------------------------------------------------------
# BN finalize + normalize (+ residual) (+ ReLU) in one tiled pass
# ----------------------------------------------------------------------------
def _bn_scale_shift(psum, pssq, g, b, count, eps):
    mean = jnp.sum(psum, axis=0) / count                    # (1, C)
    ex2 = jnp.sum(pssq, axis=0) / count
    var = jnp.maximum(ex2 - mean * mean, 0.0)               # biased (BN training)
    scale = g * jax.lax.rsqrt(var + eps)
    shift = b - mean * scale
    return scale, shift


def _bn_apply_kernel(y_ref, s_ref, q_ref, g_ref, b_ref, o_ref, *,
                     count, eps, relu):
    scale, shift = _bn_scale_shift(s_ref[...], q_ref[...],
                                   g_ref[...], b_ref[...], count, eps)
    v = y_ref[0].astype(jnp.float32) * scale + shift
    if relu:
        v = jnp.maximum(v, 0.0)
    o_ref[0] = v.astype(o_ref.dtype)


def _bn_apply_res_kernel(y_ref, s_ref, q_ref, g_ref, b_ref, r_ref, o_ref, *,
                         count, eps, relu):
    scale, shift = _bn_scale_shift(s_ref[...], q_ref[...],
                                   g_ref[...], b_ref[...], count, eps)
    v = (y_ref[0].astype(jnp.float32) * scale + shift
         + r_ref[0].astype(jnp.float32))
    if relu:
        v = jnp.maximum(v, 0.0)
    o_ref[0] = v.astype(o_ref.dtype)


def bn_apply(y, psum, pssq, gamma_p, beta_p, *, count, relu,
             residual=None, out_dtype=jnp.bfloat16, eps=1e-5):
    N, M, C = y.shape
    g = gamma_p.reshape(1, C).astype(jnp.float32)
    b = beta_p.reshape(1, C).astype(jnp.float32)

    row = pl.BlockSpec((1, M, C), lambda n: (n, 0, 0))
    stat = pl.BlockSpec((N, 1, C), lambda n: (0, 0, 0))     # tiny, full array
    vec = pl.BlockSpec((1, C), lambda n: (0, 0))

    if residual is None:
        kernel = functools.partial(_bn_apply_kernel, count=float(count),
                                   eps=eps, relu=relu)
        in_specs = [row, stat, stat, vec, vec]
        args = (y, psum, pssq, g, b)
        n_row_in = 1
    else:
        kernel = functools.partial(_bn_apply_res_kernel, count=float(count),
                                   eps=eps, relu=relu)
        in_specs = [row, stat, stat, vec, vec, row]
        args = (y, psum, pssq, g, b, residual)
        n_row_in = 2

    out_bytes = jnp.dtype(out_dtype).itemsize
    vmem = _vmem_limit(2 * n_row_in * M * C * 2 + 2 * M * C * out_bytes
                       + 4 * N * C * 4 + 4 * C * 4 + 2 * M * C * 4)

    return pl.pallas_call(
        kernel,
        out_shape=jax.ShapeDtypeStruct((N, M, C), out_dtype),
        grid_spec=pltpu.PrefetchScalarGridSpec(
            num_scalar_prefetch=0,
            grid=(N,),
            in_specs=in_specs,
            out_specs=row),
        compiler_params=pltpu.CompilerParams(
            dimension_semantics=("parallel",),
            vmem_limit_bytes=vmem),
        cost_estimate=pl.CostEstimate(
            flops=8 * N * M * C,
            transcendentals=int(C),
            bytes_accessed=int(n_row_in * N * M * C * 2
                               + N * M * C * out_bytes + 4 * N * C * 4)),
    )(*args)


# ----------------------------------------------------------------------------
# Weight / parameter preparation
# ----------------------------------------------------------------------------
def conv_weight_to_taps(w_oihw, cin_k, cout_p):
    # PyTorch (Cout, Cin, KH, KW) -> (KH*KW, cin_k, cout_p) bf16, tap order
    # t = kh*KW + kw, matching the kernel's tap loop.  Padding is zero.
    cout, cin, kh, kw = w_oihw.shape
    w = jnp.transpose(w_oihw, (2, 3, 1, 0)).reshape(kh * kw, cin, cout)
    w = jnp.pad(w, ((0, 0), (0, cin_k - cin), (0, cout_p - cout)))
    return w.astype(jnp.bfloat16)


def init_params(key, in_channels, out_channels, stride):
    k1, k2, k3 = jax.random.split(key, 3)
    cout_p = _round_up(out_channels, 128)                   # lane-dense channels
    identity_sc = (stride == 1 and in_channels == out_channels)
    cin_k = cout_p if identity_sc else in_channels          # pad x once if identity

    w1 = 0.1 * jax.random.normal(k1, (out_channels, in_channels, 3, 3), jnp.float32)
    w2 = 0.1 * jax.random.normal(k2, (out_channels, out_channels, 3, 3), jnp.float32)
    ones = jnp.ones((out_channels,), jnp.float32)
    zeros = jnp.zeros((out_channels,), jnp.float32)

    raw = {"w1": w1, "g1": ones, "b1": zeros,
           "w2": w2, "g2": ones, "b2": zeros}
    params = {
        "w1": conv_weight_to_taps(w1, cin_k, cout_p),
        "g1": _pad_channels(ones, cout_p), "b1": _pad_channels(zeros, cout_p),
        "w2": conv_weight_to_taps(w2, cout_p, cout_p),
        "g2": _pad_channels(ones, cout_p), "b2": _pad_channels(zeros, cout_p),
    }
    if not identity_sc:
        w_sc = 0.1 * jax.random.normal(k3, (out_channels, in_channels, 1, 1),
                                       jnp.float32)
        raw.update({"w_sc": w_sc, "g_sc": ones, "b_sc": zeros})
        params["w_sc"] = conv_weight_to_taps(w_sc, in_channels, cout_p)
        params["g_sc"] = _pad_channels(ones, cout_p)
        params["b_sc"] = _pad_channels(zeros, cout_p)
    return params, raw


# ----------------------------------------------------------------------------
# BasicBlock forward
# ----------------------------------------------------------------------------
def basic_block_forward(x_nchw, params, *, stride, out_channels):
    x = jnp.transpose(x_nchw, (0, 2, 3, 1))                 # NHWC
    N, H, W, Cin = x.shape
    Cout = out_channels
    cout_p = params["w1"].shape[-1]
    cin_k = params["w1"].shape[1]

    x_bf = x.astype(jnp.bfloat16)
    if cin_k != Cin:   # identity-shortcut block: pad channels once, up front
        x_bf = jnp.pad(x_bf, ((0, 0), (0, 0), (0, 0), (0, cin_k - Cin)))

    Ho = (H + 2 - 3) // stride + 1
    Wo = (W + 2 - 3) // stride + 1
    count = N * Ho * Wo                                     # BN element count

    # conv1 (3x3, stride) + fused BN stats  ->  bn1 + ReLU (bf16)
    y1, s1, q1 = conv_bn_stats(x_bf, params["w1"], stride=stride, pad=1, ksize=3)
    h1 = bn_apply(y1, s1, q1, params["g1"], params["b1"], count=count,
                  relu=True, out_dtype=jnp.bfloat16)        # (N, Ho*Wo, cout_p)

    # shortcut
    if "w_sc" in params:   # projection: 1x1 stride-s conv + BN (no ReLU)
        ys, ss, qs = conv_bn_stats(x_bf, params["w_sc"], stride=stride,
                                   pad=0, ksize=1)
        identity = bn_apply(ys, ss, qs, params["g_sc"], params["b_sc"],
                            count=count, relu=False, out_dtype=jnp.bfloat16)
    else:                  # identity: channels already padded, metadata reshape
        identity = x_bf.reshape(N, H * W, cin_k)

    # conv2 (3x3, stride 1) + fused BN stats -> bn2 + residual + ReLU (f32)
    h1_nhwc = h1.reshape(N, Ho, Wo, cout_p)
    y2, s2, q2 = conv_bn_stats(h1_nhwc, params["w2"], stride=1, pad=1, ksize=3)
    out = bn_apply(y2, s2, q2, params["g2"], params["b2"], count=count,
                   relu=True, residual=identity, out_dtype=jnp.float32)

    out = out.reshape(N, Ho, Wo, cout_p)[..., :Cout]        # strip lane padding
    return jnp.transpose(out, (0, 3, 1, 2))                 # NCHW


# ----------------------------------------------------------------------------
# Pure-JAX reference (training-mode BatchNorm, matching a fresh nn.Module)
# ----------------------------------------------------------------------------
def reference_forward(x_nchw, raw, *, stride, eps=1e-5):
    def conv(x, w, s, p):
        return jax.lax.conv_general_dilated(
            x, w, window_strides=(s, s), padding=[(p, p), (p, p)],
            dimension_numbers=("NCHW", "OIHW", "NCHW"))

    def bn(x, g, b):
        mean = jnp.mean(x, axis=(0, 2, 3), keepdims=True)
        var = jnp.var(x, axis=(0, 2, 3), keepdims=True)     # biased, as BN train
        return ((x - mean) * jax.lax.rsqrt(var + eps)
                * g.reshape(1, -1, 1, 1) + b.reshape(1, -1, 1, 1))

    out = jax.nn.relu(bn(conv(x_nchw, raw["w1"], stride, 1), raw["g1"], raw["b1"]))
    out = bn(conv(out, raw["w2"], 1, 1), raw["g2"], raw["b2"])
    if "w_sc" in raw:
        identity = bn(conv(x_nchw, raw["w_sc"], stride, 0), raw["g_sc"], raw["b_sc"])
    else:
        identity = x_nchw
    return jax.nn.relu(out + identity)


if __name__ == "__main__":
    key = jax.random.PRNGKey(0)
    kx, kp = jax.random.split(key)

    in_channels, out_channels, stride = 4, 8, 2
    x = jax.random.normal(kx, (2, in_channels, 16, 16), jnp.float32)   # NCHW
    params, raw = init_params(kp, in_channels, out_channels, stride)

    fwd = jax.jit(functools.partial(basic_block_forward,
                                    stride=stride, out_channels=out_channels))
    out = fwd(x, params)
    jax.block_until_ready(out)

    assert out.shape == (2, out_channels, 8, 8)
    assert bool(jnp.all(jnp.isfinite(out)))

    ref = reference_forward(x, raw, stride=stride)
    err = float(jnp.max(jnp.abs(out - ref)))
    assert err < 0.25, f"max abs error vs reference too large: {err}"
    print("KERNEL_OK")
</pallas_src>

<mosaic_0001>
module attributes {stable_mosaic.version = 11 : i64} {
  func.func @_conv_bn_stats_kernel(%arg0: i32, %arg1: memref<1x8x2x8x8xbf16, #tpu.memory_space<vmem>>, %arg2: memref<1x4x128xbf16, #tpu.memory_space<vmem>>, %arg3: memref<1x64x128xbf16, #tpu.memory_space<vmem>>, %arg4: memref<1x1x128xf32, #tpu.memory_space<vmem>>, %arg5: memref<1x1x128xf32, #tpu.memory_space<vmem>>) attributes {dimension_semantics = [#tpu.dimension_semantics<parallel>], iteration_bounds = array<i64: 2>, scalar_prefetch = 0 : i64, scratch_operands = 0 : i64, tpu.core_type = #tpu.core_type<tc>, window_params = [{transform_indices = @transform_0, window_bounds = array<i64: 1, 8, 2, 8, 8>}, {pipeline_mode = #tpu.pipeline_mode<synchronous>, transform_indices = @transform_1, window_bounds = array<i64: 1, 4, 128>}, {transform_indices = @transform_2, window_bounds = array<i64: 1, 64, 128>}, {transform_indices = @transform_3, window_bounds = array<i64: 1, 1, 128>}, {transform_indices = @transform_4, window_bounds = array<i64: 1, 1, 128>}]} {
    %cst = arith.constant 0.000000e+00 : f32
    %0 = vector.broadcast %cst : f32 to vector<64x128xf32>
    %c0 = arith.constant 0 : index
    %c0_0 = arith.constant 0 : index
    %c0_1 = arith.constant 0 : index
    %c0_2 = arith.constant 0 : index
    %c0_3 = arith.constant 0 : index
    %1 = vector.load %arg1[%c0, %c0_0, %c0_1, %c0_2, %c0_3] : memref<1x8x2x8x8xbf16, #tpu.memory_space<vmem>>, vector<1x8x1x8x4xbf16>
    %2 = vector.shape_cast %1 : vector<1x8x1x8x4xbf16> to vector<8x8x4xbf16>
    %3 = vector.shape_cast %2 : vector<8x8x4xbf16> to vector<64x4xbf16>
    %c0_4 = arith.constant 0 : index
    %c0_5 = arith.constant 0 : index
    %c0_6 = arith.constant 0 : index
    %4 = vector.load %arg2[%c0_4, %c0_5, %c0_6] : memref<1x4x128xbf16, #tpu.memory_space<vmem>>, vector<1x4x128xbf16>
    %5 = vector.shape_cast %4 : vector<1x4x128xbf16> to vector<4x128xbf16>
    %cst_7 = arith.constant dense<0.000000e+00> : vector<64x128xf32>
    %6 = tpu.matmul %3, %5, %cst_7 {dimension_numbers = #tpu.dot_dimension_numbers<[1], [0], [0], [1], [0, 0, 1, 1], [], []>} : vector<64x4xbf16>, vector<4x128xbf16>, vector<64x128xf32> -> vector<64x128xf32>
    %7 = arith.addf %0, %6 : vector<64x128xf32>
    %8 = arith.truncf %7 : vector<64x128xf32> to vector<64x128xbf16>
    %c0_8 = arith.constant 0 : index
    %c0_9 = arith.constant 0 : index
    %c0_10 = arith.constant 0 : index
    %9 = vector.load %arg3[%c0_8, %c0_9, %c0_10] : memref<1x64x128xbf16, #tpu.memory_space<vmem>>, vector<1x64x128xbf16>
    %10 = vector.shape_cast %9 : vector<1x64x128xbf16> to vector<64x128xbf16>
    %11 = vector.shape_cast %8 : vector<64x128xbf16> to vector<1x64x128xbf16>
    tpu.vector_store %arg3[%c0_8, %c0_9, %c0_10], %11 {strides = array<i32>} : memref<1x64x128xbf16, #tpu.memory_space<vmem>>, vector<1x64x128xbf16>,
    %cst_11 = arith.constant dense<0.000000e+00> : vector<128xf32>
    %12 = vector.multi_reduction <add>, %7, %cst_11 [0] : vector<64x128xf32> to vector<128xf32>
    %13 = vector.shape_cast %12 : vector<128xf32> to vector<1x128xf32>
    %c0_12 = arith.constant 0 : index
    %c0_13 = arith.constant 0 : index
    %c0_14 = arith.constant 0 : index
    %14 = vector.load %arg4[%c0_12, %c0_13, %c0_14] : memref<1x1x128xf32, #tpu.memory_space<vmem>>, vector<1x1x128xf32>
    %15 = vector.shape_cast %14 : vector<1x1x128xf32> to vector<1x128xf32>
    %16 = vector.shape_cast %13 : vector<1x128xf32> to vector<1x1x128xf32>
    tpu.vector_store %arg4[%c0_12, %c0_13, %c0_14], %16 {strides = array<i32>} : memref<1x1x128xf32, #tpu.memory_space<vmem>>, vector<1x1x128xf32>,
    %17 = arith.mulf %7, %7 : vector<64x128xf32>
    %cst_15 = arith.constant dense<0.000000e+00> : vector<128xf32>
    %18 = vector.multi_reduction <add>, %17, %cst_15 [0] : vector<64x128xf32> to vector<128xf32>
    %19 = vector.shape_cast %18 : vector<128xf32> to vector<1x128xf32>
    %c0_16 = arith.constant 0 : index
    %c0_17 = arith.constant 0 : index
    %c0_18 = arith.constant 0 : index
    %20 = vector.load %arg5[%c0_16, %c0_17, %c0_18] : memref<1x1x128xf32, #tpu.memory_space<vmem>>, vector<1x1x128xf32>
    %21 = vector.shape_cast %20 : vector<1x1x128xf32> to vector<1x128xf32>
    %22 = vector.shape_cast %19 : vector<1x128xf32> to vector<1x1x128xf32>
    tpu.vector_store %arg5[%c0_16, %c0_17, %c0_18], %22 {strides = array<i32>} : memref<1x1x128xf32, #tpu.memory_space<vmem>>, vector<1x1x128xf32>,
    return
  }
  func.func @transform_0(%arg0: i32) -> (i32, i32, i32, i32, i32) {
    %c0_i32 = arith.constant 0 : i32
    %c0_i32_0 = arith.constant 0 : i32
    %c0_i32_1 = arith.constant 0 : i32
    %c0_i32_2 = arith.constant 0 : i32
    %c0_i32_3 = arith.constant 0 : i32
    return %arg0, %c0_i32, %c0_i32_0, %c0_i32_1, %c0_i32_2 : i32, i32, i32, i32, i32
  }
  func.func @transform_1(%arg0: i32) -> (i32, i32, i32) {
    %c0_i32 = arith.constant 0 : i32
    %c0_i32_0 = arith.constant 0 : i32
    %c0_i32_1 = arith.constant 0 : i32
    %c0_i32_2 = arith.constant 0 : i32
    return %c0_i32, %c0_i32_0, %c0_i32_1 : i32, i32, i32
  }
  func.func @transform_2(%arg0: i32) -> (i32, i32, i32) {
    %c0_i32 = arith.constant 0 : i32
    %c0_i32_0 = arith.constant 0 : i32
    %c0_i32_1 = arith.constant 0 : i32
    return %arg0, %c0_i32, %c0_i32_0 : i32, i32, i32
  }
  func.func @transform_3(%arg0: i32) -> (i32, i32, i32) {
    %c0_i32 = arith.constant 0 : i32
    %c0_i32_0 = arith.constant 0 : i32
    %c0_i32_1 = arith.constant 0 : i32
    return %arg0, %c0_i32, %c0_i32_0 : i32, i32, i32
  }
  func.func @transform_4(%arg0: i32) -> (i32, i32, i32) {
    %c0_i32 = arith.constant 0 : i32
    %c0_i32_0 = arith.constant 0 : i32
    %c0_i32_1 = arith.constant 0 : i32
    return %arg0, %c0_i32, %c0_i32_0 : i32, i32, i32
  }
}

module attributes {stable_mosaic.version = 11 : i64} {
  func.func @_bn_apply_kernel(%arg0: i32, %arg1: memref<1x64x128xbf16, #tpu.memory_space<vmem>>, %arg2: memref<2x1x128xf32, #tpu.memory_space<vmem>>, %arg3: memref<2x1x128xf32, #tpu.memory_space<vmem>>, %arg4: memref<1x128xf32, #tpu.memory_space<vmem>>, %arg5: memref<1x128xf32, #tpu.memory_space<vmem>>, %arg6: memref<1x64x128xbf16, #tpu.memory_space<vmem>>) attributes {dimension_semantics = [#tpu.dimension_semantics<parallel>], iteration_bounds = array<i64: 2>, scalar_prefetch = 0 : i64, scratch_operands = 0 : i64, tpu.core_type = #tpu.core_type<tc>, window_params = [{transform_indices = @transform_0, window_bounds = array<i64: 1, 64, 128>}, {pipeline_mode = #tpu.pipeline_mode<synchronous>, transform_indices = @transform_1, window_bounds = array<i64: 2, 1, 128>}, {pipeline_mode = #tpu.pipeline_mode<synchronous>, transform_indices = @transform_2, window_bounds = array<i64: 2, 1, 128>}, {pipeline_mode = #tpu.pipeline_mode<synchronous>, transform_indices = @transform_3, window_bounds = array<i64: 1, 128>}, {pipeline_mode = #tpu.pipeline_mode<synchronous>, transform_indices = @transform_4, window_bounds = array<i64: 1, 128>}, {transform_indices = @transform_5, window_bounds = array<i64: 1, 64, 128>}]} {
    %c0 = arith.constant 0 : index
    %c0_0 = arith.constant 0 : index
    %c0_1 = arith.constant 0 : index
    %0 = vector.load %arg2[%c0, %c0_0, %c0_1] : memref<2x1x128xf32, #tpu.memory_space<vmem>>, vector<2x1x128xf32>
    %c0_2 = arith.constant 0 : index
    %c0_3 = arith.constant 0 : index
    %c0_4 = arith.constant 0 : index
    %1 = vector.load %arg3[%c0_2, %c0_3, %c0_4] : memref<2x1x128xf32, #tpu.memory_space<vmem>>, vector<2x1x128xf32>
    %c0_5 = arith.constant 0 : index
    %c0_6 = arith.constant 0 : index
    %2 = vector.load %arg4[%c0_5, %c0_6] : memref<1x128xf32, #tpu.memory_space<vmem>>, vector<1x128xf32>
    %c0_7 = arith.constant 0 : index
    %c0_8 = arith.constant 0 : index
    %3 = vector.load %arg5[%c0_7, %c0_8] : memref<1x128xf32, #tpu.memory_space<vmem>>, vector<1x128xf32>
    %cst = arith.constant dense<0.000000e+00> : vector<1x128xf32>
    %4 = vector.multi_reduction <add>, %0, %cst [0] : vector<2x1x128xf32> to vector<1x128xf32>
    %cst_9 = arith.constant 1.280000e+02 : f32
    %5 = vector.broadcast %cst_9 : f32 to vector<1x128xf32>
    %6 = arith.divf %4, %5 : vector<1x128xf32>
    %cst_10 = arith.constant dense<0.000000e+00> : vector<1x128xf32>
    %7 = vector.multi_reduction <add>, %1, %cst_10 [0] : vector<2x1x128xf32> to vector<1x128xf32>
    %cst_11 = arith.constant 1.280000e+02 : f32
    %8 = vector.broadcast %cst_11 : f32 to vector<1x128xf32>
    %9 = arith.divf %7, %8 : vector<1x128xf32>
    %10 = arith.mulf %6, %6 : vector<1x128xf32>
    %11 = arith.subf %9, %10 : vector<1x128xf32>
    %cst_12 = arith.constant 0.000000e+00 : f32
    %12 = vector.broadcast %cst_12 : f32 to vector<1x128xf32>
    %13 = arith.maximumf %11, %12 : vector<1x128xf32>
    %cst_13 = arith.constant 9.99999974E-6 : f32
    %14 = vector.broadcast %cst_13 : f32 to vector<1x128xf32>
    %15 = arith.addf %13, %14 : vector<1x128xf32>
    %16 = math.rsqrt %15 : vector<1x128xf32>
    %17 = arith.mulf %2, %16 : vector<1x128xf32>
    %18 = arith.mulf %6, %17 : vector<1x128xf32>
    %19 = arith.subf %3, %18 : vector<1x128xf32>
    %c0_14 = arith.constant 0 : index
    %c0_15 = arith.constant 0 : index
    %c0_16 = arith.constant 0 : index
    %20 = vector.load %arg1[%c0_14, %c0_15, %c0_16] : memref<1x64x128xbf16, #tpu.memory_space<vmem>>, vector<1x64x128xbf16>
    %21 = vector.shape_cast %20 : vector<1x64x128xbf16> to vector<64x128xbf16>
    %22 = arith.extf %21 : vector<64x128xbf16> to vector<64x128xf32>
    %23 = vector.broadcast %17 : vector<1x128xf32> to vector<64x128xf32>
    %24 = arith.mulf %22, %23 : vector<64x128xf32>
    %25 = vector.broadcast %19 : vector<1x128xf32> to vector<64x128xf32>
    %26 = arith.addf %24, %25 : vector<64x128xf32>
    %27 = arith.truncf %26 : vector<64x128xf32> to vector<64x128xbf16>
    %c0_17 = arith.constant 0 : index
    %c0_18 = arith.constant 0 : index
    %c0_19 = arith.constant 0 : index
    %28 = vector.load %arg6[%c0_17, %c0_18, %c0_19] : memref<1x64x128xbf16, #tpu.memory_space<vmem>>, vector<1x64x128xbf16>
    %29 = vector.shape_cast %28 : vector<1x64x128xbf16> to vector<64x128xbf16>
    %30 = vector.shape_cast %27 : vector<64x128xbf16> to vector<1x64x128xbf16>
    tpu.vector_store %arg6[%c0_17, %c0_18, %c0_19], %30 {strides = array<i32>} : memref<1x64x128xbf16, #tpu.memory_space<vmem>>, vector<1x64x128xbf16>,
    return
  }
  func.func @transform_0(%arg0: i32) -> (i32, i32, i32) {
    %c0_i32 = arith.constant 0 : i32
    %c0_i32_0 = arith.constant 0 : i32
    %c0_i32_1 = arith.constant 0 : i32
    return %arg0, %c0_i32, %c0_i32_0 : i32, i32, i32
  }
  func.func @transform_1(%arg0: i32) -> (i32, i32, i32) {
    %c0_i32 = arith.constant 0 : i32
    %c0_i32_0 = arith.constant 0 : i32
    %c0_i32_1 = arith.constant 0 : i32
    %c0_i32_2 = arith.constant 0 : i32
    return %c0_i32, %c0_i32_0, %c0_i32_1 : i32, i32, i32
  }
  func.func @transform_2(%arg0: i32) -> (i32, i32, i32) {
    %c0_i32 = arith.constant 0 : i32
    %c0_i32_0 = arith.constant 0 : i32
    %c0_i32_1 = arith.constant 0 : i32
    %c0_i32_2 = arith.constant 0 : i32
    return %c0_i32, %c0_i32_0, %c0_i32_1 : i32, i32, i32
  }
  func.func @transform_3(%arg0: i32) -> (i32, i32) {
    %c0_i32 = arith.constant 0 : i32
    %c0_i32_0 = arith.constant 0 : i32
    %c0_i32_1 = arith.constant 0 : i32
    return %c0_i32, %c0_i32_0 : i32, i32
  }
  func.func @transform_4(%arg0: i32) -> (i32, i32) {
    %c0_i32 = arith.constant 0 : i32
    %c0_i32_0 = arith.constant 0 : i32
    %c0_i32_1 = arith.constant 0 : i32
    return %c0_i32, %c0_i32_0 : i32, i32
  }
  func.func @transform_5(%arg0: i32) -> (i32, i32, i32) {
    %c0_i32 = arith.constant 0 : i32
    %c0_i32_0 = arith.constant 0 : i32
    %c0_i32_1 = arith.constant 0 : i32
    return %arg0, %c0_i32, %c0_i32_0 : i32, i32, i32
  }
}

module attributes {stable_mosaic.version = 11 : i64} {
  func.func @_conv_bn_stats_kernel(%arg0: i32, %arg1: memref<1x9x2x9x8xbf16, #tpu.memory_space<vmem>>, %arg2: memref<9x4x128xbf16, #tpu.memory_space<vmem>>, %arg3: memref<1x64x128xbf16, #tpu.memory_space<vmem>>, %arg4: memref<1x1x128xf32, #tpu.memory_space<vmem>>, %arg5: memref<1x1x128xf32, #tpu.memory_space<vmem>>) attributes {dimension_semantics = [#tpu.dimension_semantics<parallel>], iteration_bounds = array<i64: 2>, scalar_prefetch = 0 : i64, scratch_operands = 0 : i64, tpu.core_type = #tpu.core_type<tc>, window_params = [{transform_indices = @transform_0, window_bounds = array<i64: 1, 9, 2, 9, 8>}, {pipeline_mode = #tpu.pipeline_mode<synchronous>, transform_indices = @transform_1, window_bounds = array<i64: 9, 4, 128>}, {transform_indices = @transform_2, window_bounds = array<i64: 1, 64, 128>}, {transform_indices = @transform_3, window_bounds = array<i64: 1, 1, 128>}, {transform_indices = @transform_4, window_bounds = array<i64: 1, 1, 128>}]} {
    %cst = arith.constant 0.000000e+00 : f32
    %0 = vector.broadcast %cst : f32 to vector<64x128xf32>
    %c0 = arith.constant 0 : index
    %c0_0 = arith.constant 0 : index
    %c0_1 = arith.constant 0 : index
    %c0_2 = arith.constant 0 : index
    %c0_3 = arith.constant 0 : index
    %1 = vector.load %arg1[%c0, %c0_0, %c0_1, %c0_2, %c0_3] : memref<1x9x2x9x8xbf16, #tpu.memory_space<vmem>>, vector<1x8x1x8x4xbf16>
    %2 = vector.shape_cast %1 : vector<1x8x1x8x4xbf16> to vector<8x8x4xbf16>
    %3 = vector.shape_cast %2 : vector<8x8x4xbf16> to vector<64x4xbf16>
    %c0_4 = arith.constant 0 : index
    %c0_5 = arith.constant 0 : index
    %c0_6 = arith.constant 0 : index
    %4 = vector.load %arg2[%c0_4, %c0_5, %c0_6] : memref<9x4x128xbf16, #tpu.memory_space<vmem>>, vector<1x4x128xbf16>
    %5 = vector.shape_cast %4 : vector<1x4x128xbf16> to vector<4x128xbf16>
    %cst_7 = arith.constant dense<0.000000e+00> : vector<64x128xf32>
    %6 = tpu.matmul %3, %5, %cst_7 {dimension_numbers = #tpu.dot_dimension_numbers<[1], [0], [0], [1], [0, 0, 1, 1], [], []>} : vector<64x4xbf16>, vector<4x128xbf16>, vector<64x128xf32> -> vector<64x128xf32>
    %7 = arith.addf %0, %6 : vector<64x128xf32>
    %c0_8 = arith.constant 0 : index
    %c0_9 = arith.constant 0 : index
    %c0_10 = arith.constant 0 : index
    %c0_11 = arith.constant 0 : index
    %c4 = arith.constant 4 : index
    %8 = vector.load %arg1[%c0_8, %c0_9, %c0_10, %c0_11, %c4] : memref<1x9x2x9x8xbf16, #tpu.memory_space<vmem>>, vector<1x8x1x8x4xbf16>
    %9 = vector.shape_cast %8 : vector<1x8x1x8x4xbf16> to vector<8x8x4xbf16>
    %10 = vector.shape_cast %9 : vector<8x8x4xbf16> to vector<64x4xbf16>
    %c1 = arith.constant 1 : index
    %c0_12 = arith.constant 0 : index
    %c0_13 = arith.constant 0 : index
    %11 = vector.load %arg2[%c1, %c0_12, %c0_13] : memref<9x4x128xbf16, #tpu.memory_space<vmem>>, vector<1x4x128xbf16>
    %12 = vector.shape_cast %11 : vector<1x4x128xbf16> to vector<4x128xbf16>
    %cst_14 = arith.constant dense<0.000000e+00> : vector<64x128xf32>
    %13 = tpu.matmul %10, %12, %cst_14 {dimension_numbers = #tpu.dot_dimension_numbers<[1], [0], [0], [1], [0, 0, 1, 1], [], []>} : vector<64x4xbf16>, vector<4x128xbf16>, vector<64x128xf32> -> vector<64x128xf32>
    %14 = arith.addf %7, %13 : vector<64x128xf32>
    %c0_15 = arith.constant 0 : index
    %c0_16 = arith.constant 0 : index
    %c0_17 = arith.constant 0 : index
    %c1_18 = arith.constant 1 : index
    %c0_19 = arith.constant 0 : index
    %15 = vector.load %arg1[%c0_15, %c0_16, %c0_17, %c1_18, %c0_19] : memref<1x9x2x9x8xbf16, #tpu.memory_space<vmem>>, vector<1x8x1x8x4xbf16>
    %16 = vector.shape_cast %15 : vector<1x8x1x8x4xbf16> to vector<8x8x4xbf16>
    %17 = vector.shape_cast %16 : vector<8x8x4xbf16> to vector<64x4xbf16>
    %c2 = arith.constant 2 : index
    %c0_20 = arith.constant 0 : index
    %c0_21 = arith.constant 0 : index
    %18 = vector.load %arg2[%c2, %c0_20, %c0_21] : memref<9x4x128xbf16, #tpu.memory_space<vmem>>, vector<1x4x128xbf16>
    %19 = vector.shape_cast %18 : vector<1x4x128xbf16> to vector<4x128xbf16>
    %cst_22 = arith.constant dense<0.000000e+00> : vector<64x128xf32>
    %20 = tpu.matmul %17, %19, %cst_22 {dimension_numbers = #tpu.dot_dimension_numbers<[1], [0], [0], [1], [0, 0, 1, 1], [], []>} : vector<64x4xbf16>, vector<4x128xbf16>, vector<64x128xf32> -> vector<64x128xf32>
    %21 = arith.addf %14, %20 : vector<64x128xf32>
    %c0_23 = arith.constant 0 : index
    %c0_24 = arith.constant 0 : index
    %c1_25 = arith.constant 1 : index
    %c0_26 = arith.constant 0 : index
    %c0_27 = arith.constant 0 : index
    %22 = vector.load %arg1[%c0_23, %c0_24, %c1_25, %c0_26, %c0_27] : memref<1x9x2x9x8xbf16, #tpu.memory_space<vmem>>, vector<1x8x1x8x4xbf16>
    %23 = vector.shape_cast %22 : vector<1x8x1x8x4xbf16> to vector<8x8x4xbf16>
    %24 = vector.shape_cast %23 : vector<8x8x4xbf16> to vector<64x4xbf16>
    %c3 = arith.constant 3 : index
    %c0_28 = arith.constant 0 : index
    %c0_29 = arith.constant 0 : index
    %25 = vector.load %arg2[%c3, %c0_28, %c0_29] : memref<9x4x128xbf16, #tpu.memory_space<vmem>>, vector<1x4x128xbf16>
    %26 = vector.shape_cast %25 : vector<1x4x128xbf16> to vector<4x128xbf16>
    %cst_30 = arith.constant dense<0.000000e+00> : vector<64x128xf32>
    %27 = tpu.matmul %24, %26, %cst_30 {dimension_numbers = #tpu.dot_dimension_numbers<[1], [0], [0], [1], [0, 0, 1, 1], [], []>} : vector<64x4xbf16>, vector<4x128xbf16>, vector<64x128xf32> -> vector<64x128xf32>
    %28 = arith.addf %21, %27 : vector<64x128xf32>
    %c0_31 = arith.constant 0 : index
    %c0_32 = arith.constant 0 : index
    %c1_33 = arith.constant 1 : index
    %c0_34 = arith.constant 0 : index
    %c4_35 = arith.constant 4 : index
    %29 = vector.load %arg1[%c0_31, %c0_32, %c1_33, %c0_34, %c4_35] : memref<1x9x2x9x8xbf16, #tpu.memory_space<vmem>>, vector<1x8x1x8x4xbf16>
    %30 = vector.shape_cast %29 : vector<1x8x1x8x4xbf16> to vector<8x8x4xbf16>
    %31 = vector.shape_cast %30 : vector<8x8x4xbf16> to vector<64x4xbf16>
    %c4_36 = arith.constant 4 : index
    %c0_37 = arith.constant 0 : index
    %c0_38 = arith.constant 0 : index
    %32 = vector.load %arg2[%c4_36, %c0_37, %c0_38] : memref<9x4x128xbf16, #tpu.memory_space<vmem>>, vector<1x4x128xbf16>
    %33 = vector.shape_cast %32 : vector<1x4x128xbf16> to vector<4x128xbf16>
    %cst_39 = arith.constant dense<0.000000e+00> : vector<64x128xf32>
    %34 = tpu.matmul %31, %33, %cst_39 {dimension_numbers = #tpu.dot_dimension_numbers<[1], [0], [0], [1], [0, 0, 1, 1], [], []>} : vector<64x4xbf16>, vector<4x128xbf16>, vector<64x128xf32> -> vector<64x128xf32>
    %35 = arith.addf %28, %34 : vector<64x128xf32>
    %c0_40 = arith.constant 0 : index
    %c0_41 = arith.constant 0 : index
    %c1_42 = arith.constant 1 : index
    %c1_43 = arith.constant 1 : index
    %c0_44 = arith.constant 0 : index
    %36 = vector.load %arg1[%c0_40, %c0_41, %c1_42, %c1_43, %c0_44] : memref<1x9x2x9x8xbf16, #tpu.memory_space<vmem>>, vector<1x8x1x8x4xbf16>
    %37 = vector.shape_cast %36 : vector<1x8x1x8x4xbf16> to vector<8x8x4xbf16>
    %38 = vector.shape_cast %37 : vector<8x8x4xbf16> to vector<64x4xbf16>
    %c5 = arith.constant 5 : index
    %c0_45 = arith.constant 0 : index
    %c0_46 = arith.constant 0 : index
    %39 = vector.load %arg2[%c5, %c0_45, %c0_46] : memref<9x4x128xbf16, #tpu.memory_space<vmem>>, vector<1x4x128xbf16>
    %40 = vector.shape_cast %39 : vector<1x4x128xbf16> to vector<4x128xbf16>
    %cst_47 = arith.constant dense<0.000000e+00> : vector<64x128xf32>
    %41 = tpu.matmul %38, %40, %cst_47 {dimension_numbers = #tpu.dot_dimension_numbers<[1], [0], [0], [1], [0, 0, 1, 1], [], []>} : vector<64x4xbf16>, vector<4x128xbf16>, vector<64x128xf32> -> vector<64x128xf32>
    %42 = arith.addf %35, %41 : vector<64x128xf32>
    %c0_48 = arith.constant 0 : index
    %c1_49 = arith.constant 1 : index
    %c0_50 = arith.constant 0 : index
    %c0_51 = arith.constant 0 : index
    %c0_52 = arith.constant 0 : index
    %43 = vector.load %arg1[%c0_48, %c1_49, %c0_50, %c0_51, %c0_52] : memref<1x9x2x9x8xbf16, #tpu.memory_space<vmem>>, vector<1x8x1x8x4xbf16>
    %44 = vector.shape_cast %43 : vector<1x8x1x8x4xbf16> to vector<8x8x4xbf16>
    %45 = vector.shape_cast %44 : vector<8x8x4xbf16> to vector<64x4xbf16>
    %c6 = arith.constant 6 : index
    %c0_53 = arith.constant 0 : index
    %c0_54 = arith.constant 0 : index
    %46 = vector.load %arg2[%c6, %c0_53, %c0_54] : memref<9x4x128xbf16, #tpu.memory_space<vmem>>, vector<1x4x128xbf16>
    %47 = vector.shape_cast %46 : vector<1x4x128xbf16> to vector<4x128xbf16>
    %cst_55 = arith.constant dense<0.000000e+00> : vector<64x128xf32>
    %48 = tpu.matmul %45, %47, %cst_55 {dimension_numbers = #tpu.dot_dimension_numbers<[1], [0], [0], [1], [0, 0, 1, 1], [], []>} : vector<64x4xbf16>, vector<4x128xbf16>, vector<64x128xf32> -> vector<64x128xf32>
    %49 = arith.addf %42, %48 : vector<64x128xf32>
    %c0_56 = arith.constant 0 : index
    %c1_57 = arith.constant 1 : index
    %c0_58 = arith.constant 0 : index
    %c0_59 = arith.constant 0 : index
    %c4_60 = arith.constant 4 : index
    %50 = vector.load %arg1[%c0_56, %c1_57, %c0_58, %c0_59, %c4_60] : memref<1x9x2x9x8xbf16, #tpu.memory_space<vmem>>, vector<1x8x1x8x4xbf16>
    %51 = vector.shape_cast %50 : vector<1x8x1x8x4xbf16> to vector<8x8x4xbf16>
    %52 = vector.shape_cast %51 : vector<8x8x4xbf16> to vector<64x4xbf16>
    %c7 = arith.constant 7 : index
    %c0_61 = arith.constant 0 : index
    %c0_62 = arith.constant 0 : index
    %53 = vector.load %arg2[%c7, %c0_61, %c0_62] : memref<9x4x128xbf16, #tpu.memory_space<vmem>>, vector<1x4x128xbf16>
    %54 = vector.shape_cast %53 : vector<1x4x128xbf16> to vector<4x128xbf16>
    %cst_63 = arith.constant dense<0.000000e+00> : vector<64x128xf32>
    %55 = tpu.matmul %52, %54, %cst_63 {dimension_numbers = #tpu.dot_dimension_numbers<[1], [0], [0], [1], [0, 0, 1, 1], [], []>} : vector<64x4xbf16>, vector<4x128xbf16>, vector<64x128xf32> -> vector<64x128xf32>
    %56 = arith.addf %49, %55 : vector<64x128xf32>
    %c0_64 = arith.constant 0 : index
    %c1_65 = arith.constant 1 : index
    %c0_66 = arith.constant 0 : index
    %c1_67 = arith.constant 1 : index
    %c0_68 = arith.constant 0 : index
    %57 = vector.load %arg1[%c0_64, %c1_65, %c0_66, %c1_67, %c0_68] : memref<1x9x2x9x8xbf16, #tpu.memory_space<vmem>>, vector<1x8x1x8x4xbf16>
    %58 = vector.shape_cast %57 : vector<1x8x1x8x4xbf16> to vector<8x8x4xbf16>
    %59 = vector.shape_cast %58 : vector<8x8x4xbf16> to vector<64x4xbf16>
    %c8 = arith.constant 8 : index
    %c0_69 = arith.constant 0 : index
    %c0_70 = arith.constant 0 : index
    %60 = vector.load %arg2[%c8, %c0_69, %c0_70] : memref<9x4x128xbf16, #tpu.memory_space<vmem>>, vector<1x4x128xbf16>
    %61 = vector.shape_cast %60 : vector<1x4x128xbf16> to vector<4x128xbf16>
    %cst_71 = arith.constant dense<0.000000e+00> : vector<64x128xf32>
    %62 = tpu.matmul %59, %61, %cst_71 {dimension_numbers = #tpu.dot_dimension_numbers<[1], [0], [0], [1], [0, 0, 1, 1], [], []>} : vector<64x4xbf16>, vector<4x128xbf16>, vector<64x128xf32> -> vector<64x128xf32>
    %63 = arith.addf %56, %62 : vector<64x128xf32>
    %64 = arith.truncf %63 : vector<64x128xf32> to vector<64x128xbf16>
    %c0_72 = arith.constant 0 : index
    %c0_73 = arith.constant 0 : index
    %c0_74 = arith.constant 0 : index
    %65 = vector.load %arg3[%c0_72, %c0_73, %c0_74] : memref<1x64x128xbf16, #tpu.memory_space<vmem>>, vector<1x64x128xbf16>
    %66 = vector.shape_cast %65 : vector<1x64x128xbf16> to vector<64x128xbf16>
    %67 = vector.shape_cast %64 : vector<64x128xbf16> to vector<1x64x128xbf16>
    tpu.vector_store %arg3[%c0_72, %c0_73, %c0_74], %67 {strides = array<i32>} : memref<1x64x128xbf16, #tpu.memory_space<vmem>>, vector<1x64x128xbf16>,
    %cst_75 = arith.constant dense<0.000000e+00> : vector<128xf32>
    %68 = vector.multi_reduction <add>, %63, %cst_75 [0] : vector<64x128xf32> to vector<128xf32>
    %69 = vector.shape_cast %68 : vector<128xf32> to vector<1x128xf32>
    %c0_76 = arith.constant 0 : index
    %c0_77 = arith.constant 0 : index
    %c0_78 = arith.constant 0 : index
    %70 = vector.load %arg4[%c0_76, %c0_77, %c0_78] : memref<1x1x128xf32, #tpu.memory_space<vmem>>, vector<1x1x128xf32>
    %71 = vector.shape_cast %70 : vector<1x1x128xf32> to vector<1x128xf32>
    %72 = vector.shape_cast %69 : vector<1x128xf32> to vector<1x1x128xf32>
    tpu.vector_store %arg4[%c0_76, %c0_77, %c0_78], %72 {strides = array<i32>} : memref<1x1x128xf32, #tpu.memory_space<vmem>>, vector<1x1x128xf32>,
    %73 = arith.mulf %63, %63 : vector<64x128xf32>
    %cst_79 = arith.constant dense<0.000000e+00> : vector<128xf32>
    %74 = vector.multi_reduction <add>, %73, %cst_79 [0] : vector<64x128xf32> to vector<128xf32>
    %75 = vector.shape_cast %74 : vector<128xf32> to vector<1x128xf32>
    %c0_80 = arith.constant 0 : index
    %c0_81 = arith.constant 0 : index
    %c0_82 = arith.constant 0 : index
    %76 = vector.load %arg5[%c0_80, %c0_81, %c0_82] : memref<1x1x128xf32, #tpu.memory_space<vmem>>, vector<1x1x128xf32>
    %77 = vector.shape_cast %76 : vector<1x1x128xf32> to vector<1x128xf32>
    %78 = vector.shape_cast %75 : vector<1x128xf32> to vector<1x1x128xf32>
    tpu.vector_store %arg5[%c0_80, %c0_81, %c0_82], %78 {strides = array<i32>} : memref<1x1x128xf32, #tpu.memory_space<vmem>>, vector<1x1x128xf32>,
    return
  }
  func.func @transform_0(%arg0: i32) -> (i32, i32, i32, i32, i32) {
    %c0_i32 = arith.constant 0 : i32
    %c0_i32_0 = arith.constant 0 : i32
    %c0_i32_1 = arith.constant 0 : i32
    %c0_i32_2 = arith.constant 0 : i32
    %c0_i32_3 = arith.constant 0 : i32
    return %arg0, %c0_i32, %c0_i32_0, %c0_i32_1, %c0_i32_2 : i32, i32, i32, i32, i32
  }
  func.func @transform_1(%arg0: i32) -> (i32, i32, i32) {
    %c0_i32 = arith.constant 0 : i32
    %c0_i32_0 = arith.constant 0 : i32
    %c0_i32_1 = arith.constant 0 : i32
    %c0_i32_2 = arith.constant 0 : i32
    return %c0_i32, %c0_i32_0, %c0_i32_1 : i32, i32, i32
  }
  func.func @transform_2(%arg0: i32) -> (i32, i32, i32) {
    %c0_i32 = arith.constant 0 : i32
    %c0_i32_0 = arith.constant 0 : i32
    %c0_i32_1 = arith.constant 0 : i32
    return %arg0, %c0_i32, %c0_i32_0 : i32, i32, i32
  }
  func.func @transform_3(%arg0: i32) -> (i32, i32, i32) {
    %c0_i32 = arith.constant 0 : i32
    %c0_i32_0 = arith.constant 0 : i32
    %c0_i32_1 = arith.constant 0 : i32
    return %arg0, %c0_i32, %c0_i32_0 : i32, i32, i32
  }
  func.func @transform_4(%arg0: i32) -> (i32, i32, i32) {
    %c0_i32 = arith.constant 0 : i32
    %c0_i32_0 = arith.constant 0 : i32
    %c0_i32_1 = arith.constant 0 : i32
    return %arg0, %c0_i32, %c0_i32_0 : i32, i32, i32
  }
}

module attributes {stable_mosaic.version = 11 : i64} {
  func.func @_bn_apply_kernel(%arg0: i32, %arg1: memref<1x64x128xbf16, #tpu.memory_space<vmem>>, %arg2: memref<2x1x128xf32, #tpu.memory_space<vmem>>, %arg3: memref<2x1x128xf32, #tpu.memory_space<vmem>>, %arg4: memref<1x128xf32, #tpu.memory_space<vmem>>, %arg5: memref<1x128xf32, #tpu.memory_space<vmem>>, %arg6: memref<1x64x128xbf16, #tpu.memory_space<vmem>>) attributes {dimension_semantics = [#tpu.dimension_semantics<parallel>], iteration_bounds = array<i64: 2>, scalar_prefetch = 0 : i64, scratch_operands = 0 : i64, tpu.core_type = #tpu.core_type<tc>, window_params = [{transform_indices = @transform_0, window_bounds = array<i64: 1, 64, 128>}, {pipeline_mode = #tpu.pipeline_mode<synchronous>, transform_indices = @transform_1, window_bounds = array<i64: 2, 1, 128>}, {pipeline_mode = #tpu.pipeline_mode<synchronous>, transform_indices = @transform_2, window_bounds = array<i64: 2, 1, 128>}, {pipeline_mode = #tpu.pipeline_mode<synchronous>, transform_indices = @transform_3, window_bounds = array<i64: 1, 128>}, {pipeline_mode = #tpu.pipeline_mode<synchronous>, transform_indices = @transform_4, window_bounds = array<i64: 1, 128>}, {transform_indices = @transform_5, window_bounds = array<i64: 1, 64, 128>}]} {
    %c0 = arith.constant 0 : index
    %c0_0 = arith.constant 0 : index
    %c0_1 = arith.constant 0 : index
    %0 = vector.load %arg2[%c0, %c0_0, %c0_1] : memref<2x1x128xf32, #tpu.memory_space<vmem>>, vector<2x1x128xf32>
    %c0_2 = arith.constant 0 : index
    %c0_3 = arith.constant 0 : index
    %c0_4 = arith.constant 0 : index
    %1 = vector.load %arg3[%c0_2, %c0_3, %c0_4] : memref<2x1x128xf32, #tpu.memory_space<vmem>>, vector<2x1x128xf32>
    %c0_5 = arith.constant 0 : index
    %c0_6 = arith.constant 0 : index
    %2 = vector.load %arg4[%c0_5, %c0_6] : memref<1x128xf32, #tpu.memory_space<vmem>>, vector<1x128xf32>
    %c0_7 = arith.constant 0 : index
    %c0_8 = arith.constant 0 : index
    %3 = vector.load %arg5[%c0_7, %c0_8] : memref<1x128xf32, #tpu.memory_space<vmem>>, vector<1x128xf32>
    %cst = arith.constant dense<0.000000e+00> : vector<1x128xf32>
    %4 = vector.multi_reduction <add>, %0, %cst [0] : vector<2x1x128xf32> to vector<1x128xf32>
    %cst_9 = arith.constant 1.280000e+02 : f32
    %5 = vector.broadcast %cst_9 : f32 to vector<1x128xf32>
    %6 = arith.divf %4, %5 : vector<1x128xf32>
    %cst_10 = arith.constant dense<0.000000e+00> : vector<1x128xf32>
    %7 = vector.multi_reduction <add>, %1, %cst_10 [0] : vector<2x1x128xf32> to vector<1x128xf32>
    %cst_11 = arith.constant 1.280000e+02 : f32
    %8 = vector.broadcast %cst_11 : f32 to vector<1x128xf32>
    %9 = arith.divf %7, %8 : vector<1x128xf32>
    %10 = arith.mulf %6, %6 : vector<1x128xf32>
    %11 = arith.subf %9, %10 : vector<1x128xf32>
    %cst_12 = arith.constant 0.000000e+00 : f32
    %12 = vector.broadcast %cst_12 : f32 to vector<1x128xf32>
    %13 = arith.maximumf %11, %12 : vector<1x128xf32>
    %cst_13 = arith.constant 9.99999974E-6 : f32
    %14 = vector.broadcast %cst_13 : f32 to vector<1x128xf32>
    %15 = arith.addf %13, %14 : vector<1x128xf32>
    %16 = math.rsqrt %15 : vector<1x128xf32>
    %17 = arith.mulf %2, %16 : vector<1x128xf32>
    %18 = arith.mulf %6, %17 : vector<1x128xf32>
    %19 = arith.subf %3, %18 : vector<1x128xf32>
    %c0_14 = arith.constant 0 : index
    %c0_15 = arith.constant 0 : index
    %c0_16 = arith.constant 0 : index
    %20 = vector.load %arg1[%c0_14, %c0_15, %c0_16] : memref<1x64x128xbf16, #tpu.memory_space<vmem>>, vector<1x64x128xbf16>
    %21 = vector.shape_cast %20 : vector<1x64x128xbf16> to vector<64x128xbf16>
    %22 = arith.extf %21 : vector<64x128xbf16> to vector<64x128xf32>
    %23 = vector.broadcast %17 : vector<1x128xf32> to vector<64x128xf32>
    %24 = arith.mulf %22, %23 : vector<64x128xf32>
    %25 = vector.broadcast %19 : vector<1x128xf32> to vector<64x128xf32>
    %26 = arith.addf %24, %25 : vector<64x128xf32>
    %cst_17 = arith.constant 0.000000e+00 : f32
    %27 = vector.broadcast %cst_17 : f32 to vector<64x128xf32>
    %28 = arith.maximumf %26, %27 : vector<64x128xf32>
    %29 = arith.truncf %28 : vector<64x128xf32> to vector<64x128xbf16>
    %c0_18 = arith.constant 0 : index
    %c0_19 = arith.constant 0 : index
    %c0_20 = arith.constant 0 : index
    %30 = vector.load %arg6[%c0_18, %c0_19, %c0_20] : memref<1x64x128xbf16, #tpu.memory_space<vmem>>, vector<1x64x128xbf16>
    %31 = vector.shape_cast %30 : vector<1x64x128xbf16> to vector<64x128xbf16>
    %32 = vector.shape_cast %29 : vector<64x128xbf16> to vector<1x64x128xbf16>
    tpu.vector_store %arg6[%c0_18, %c0_19, %c0_20], %32 {strides = array<i32>} : memref<1x64x128xbf16, #tpu.memory_space<vmem>>, vector<1x64x128xbf16>,
    return
  }
  func.func @transform_0(%arg0: i32) -> (i32, i32, i32) {
    %c0_i32 = arith.constant 0 : i32
    %c0_i32_0 = arith.constant 0 : i32
    %c0_i32_1 = arith.constant 0 : i32
    return %arg0, %c0_i32, %c0_i32_0 : i32, i32, i32
  }
  func.func @transform_1(%arg0: i32) -> (i32, i32, i32) {
    %c0_i32 = arith.constant 0 : i32
    %c0_i32_0 = arith.constant 0 : i32
    %c0_i32_1 = arith.constant 0 : i32
    %c0_i32_2 = arith.constant 0 : i32
    return %c0_i32, %c0_i32_0, %c0_i32_1 : i32, i32, i32
  }
  func.func @transform_2(%arg0: i32) -> (i32, i32, i32) {
    %c0_i32 = arith.constant 0 : i32
    %c0_i32_0 = arith.constant 0 : i32
    %c0_i32_1 = arith.constant 0 : i32
    %c0_i32_2 = arith.constant 0 : i32
    return %c0_i32, %c0_i32_0, %c0_i32_1 : i32, i32, i32
  }
  func.func @transform_3(%arg0: i32) -> (i32, i32) {
    %c0_i32 = arith.constant 0 : i32
    %c0_i32_0 = arith.constant 0 : i32
    %c0_i32_1 = arith.constant 0 : i32
    return %c0_i32, %c0_i32_0 : i32, i32
  }
  func.func @transform_4(%arg0: i32) -> (i32, i32) {
    %c0_i32 = arith.constant 0 : i32
    %c0_i32_0 = arith.constant 0 : i32
    %c0_i32_1 = arith.constant 0 : i32
    return %c0_i32, %c0_i32_0 : i32, i32
  }
  func.func @transform_5(%arg0: i32) -> (i32, i32, i32) {
    %c0_i32 = arith.constant 0 : i32
    %c0_i32_0 = arith.constant 0 : i32
    %c0_i32_1 = arith.constant 0 : i32
    return %arg0, %c0_i32, %c0_i32_0 : i32, i32, i32
  }
}

module attributes {stable_mosaic.version = 11 : i64} {
  func.func @_conv_bn_stats_kernel(%arg0: i32, %arg1: memref<1x10x1x10x128xbf16, #tpu.memory_space<vmem>>, %arg2: memref<9x128x128xbf16, #tpu.memory_space<vmem>>, %arg3: memref<1x64x128xbf16, #tpu.memory_space<vmem>>, %arg4: memref<1x1x128xf32, #tpu.memory_space<vmem>>, %arg5: memref<1x1x128xf32, #tpu.memory_space<vmem>>) attributes {dimension_semantics = [#tpu.dimension_semantics<parallel>], iteration_bounds = array<i64: 2>, scalar_prefetch = 0 : i64, scratch_operands = 0 : i64, tpu.core_type = #tpu.core_type<tc>, window_params = [{transform_indices = @transform_0, window_bounds = array<i64: 1, 10, 1, 10, 128>}, {pipeline_mode = #tpu.pipeline_mode<synchronous>, transform_indices = @transform_1, window_bounds = array<i64: 9, 128, 128>}, {transform_indices = @transform_2, window_bounds = array<i64: 1, 64, 128>}, {transform_indices = @transform_3, window_bounds = array<i64: 1, 1, 128>}, {transform_indices = @transform_4, window_bounds = array<i64: 1, 1, 128>}]} {
    %cst = arith.constant 0.000000e+00 : f32
    %0 = vector.broadcast %cst : f32 to vector<64x128xf32>
    %c0 = arith.constant 0 : index
    %c0_0 = arith.constant 0 : index
    %c0_1 = arith.constant 0 : index
    %c0_2 = arith.constant 0 : index
    %c0_3 = arith.constant 0 : index
    %1 = vector.load %arg1[%c0, %c0_0, %c0_1, %c0_2, %c0_3] : memref<1x10x1x10x128xbf16, #tpu.memory_space<vmem>>, vector<1x8x1x8x128xbf16>
    %2 = vector.shape_cast %1 : vector<1x8x1x8x128xbf16> to vector<8x8x128xbf16>
    %3 = vector.shape_cast %2 : vector<8x8x128xbf16> to vector<64x128xbf16>
    %c0_4 = arith.constant 0 : index
    %c0_5 = arith.constant 0 : index
    %c0_6 = arith.constant 0 : index
    %4 = vector.load %arg2[%c0_4, %c0_5, %c0_6] : memref<9x128x128xbf16, #tpu.memory_space<vmem>>, vector<1x128x128xbf16>
    %5 = vector.shape_cast %4 : vector<1x128x128xbf16> to vector<128x128xbf16>
    %cst_7 = arith.constant dense<0.000000e+00> : vector<64x128xf32>
    %6 = tpu.matmul %3, %5, %cst_7 {dimension_numbers = #tpu.dot_dimension_numbers<[1], [0], [0], [1], [0, 0, 1, 1], [], []>} : vector<64x128xbf16>, vector<128x128xbf16>, vector<64x128xf32> -> vector<64x128xf32>
    %7 = arith.addf %0, %6 : vector<64x128xf32>
    %c0_8 = arith.constant 0 : index
    %c0_9 = arith.constant 0 : index
    %c0_10 = arith.constant 0 : index
    %c1 = arith.constant 1 : index
    %c0_11 = arith.constant 0 : index
    %8 = vector.load %arg1[%c0_8, %c0_9, %c0_10, %c1, %c0_11] : memref<1x10x1x10x128xbf16, #tpu.memory_space<vmem>>, vector<1x8x1x8x128xbf16>
    %9 = vector.shape_cast %8 : vector<1x8x1x8x128xbf16> to vector<8x8x128xbf16>
    %10 = vector.shape_cast %9 : vector<8x8x128xbf16> to vector<64x128xbf16>
    %c1_12 = arith.constant 1 : index
    %c0_13 = arith.constant 0 : index
    %c0_14 = arith.constant 0 : index
    %11 = vector.load %arg2[%c1_12, %c0_13, %c0_14] : memref<9x128x128xbf16, #tpu.memory_space<vmem>>, vector<1x128x128xbf16>
    %12 = vector.shape_cast %11 : vector<1x128x128xbf16> to vector<128x128xbf16>
    %cst_15 = arith.constant dense<0.000000e+00> : vector<64x128xf32>
    %13 = tpu.matmul %10, %12, %cst_15 {dimension_numbers = #tpu.dot_dimension_numbers<[1], [0], [0], [1], [0, 0, 1, 1], [], []>} : vector<64x128xbf16>, vector<128x128xbf16>, vector<64x128xf32> -> vector<64x128xf32>
    %14 = arith.addf %7, %13 : vector<64x128xf32>
    %c0_16 = arith.constant 0 : index
    %c0_17 = arith.constant 0 : index
    %c0_18 = arith.constant 0 : index
    %c2 = arith.constant 2 : index
    %c0_19 = arith.constant 0 : index
    %15 = vector.load %arg1[%c0_16, %c0_17, %c0_18, %c2, %c0_19] : memref<1x10x1x10x128xbf16, #tpu.memory_space<vmem>>, vector<1x8x1x8x128xbf16>
    %16 = vector.shape_cast %15 : vector<1x8x1x8x128xbf16> to vector<8x8x128xbf16>
    %17 = vector.shape_cast %16 : vector<8x8x128xbf16> to vector<64x128xbf16>
    %c2_20 = arith.constant 2 : index
    %c0_21 = arith.constant 0 : index
    %c0_22 = arith.constant 0 : index
    %18 = vector.load %arg2[%c2_20, %c0_21, %c0_22] : memref<9x128x128xbf16, #tpu.memory_space<vmem>>, vector<1x128x128xbf16>
    %19 = vector.shape_cast %18 : vector<1x128x128xbf16> to vector<128x128xbf16>
    %cst_23 = arith.constant dense<0.000000e+00> : vector<64x128xf32>
    %20 = tpu.matmul %17, %19, %cst_23 {dimension_numbers = #tpu.dot_dimension_numbers<[1], [0], [0], [1], [0, 0, 1, 1], [], []>} : vector<64x128xbf16>, vector<128x128xbf16>, vector<64x128xf32> -> vector<64x128xf32>
    %21 = arith.addf %14, %20 : vector<64x128xf32>
    %c0_24 = arith.constant 0 : index
    %c1_25 = arith.constant 1 : index
    %c0_26 = arith.constant 0 : index
    %c0_27 = arith.constant 0 : index
    %c0_28 = arith.constant 0 : index
    %22 = vector.load %arg1[%c0_24, %c1_25, %c0_26, %c0_27, %c0_28] : memref<1x10x1x10x128xbf16, #tpu.memory_space<vmem>>, vector<1x8x1x8x128xbf16>
    %23 = vector.shape_cast %22 : vector<1x8x1x8x128xbf16> to vector<8x8x128xbf16>
    %24 = vector.shape_cast %23 : vector<8x8x128xbf16> to vector<64x128xbf16>
    %c3 = arith.constant 3 : index
    %c0_29 = arith.constant 0 : index
    %c0_30 = arith.constant 0 : index
    %25 = vector.load %arg2[%c3, %c0_29, %c0_30] : memref<9x128x128xbf16, #tpu.memory_space<vmem>>, vector<1x128x128xbf16>
    %26 = vector.shape_cast %25 : vector<1x128x128xbf16> to vector<128x128xbf16>
    %cst_31 = arith.constant dense<0.000000e+00> : vector<64x128xf32>
    %27 = tpu.matmul %24, %26, %cst_31 {dimension_numbers = #tpu.dot_dimension_numbers<[1], [0], [0], [1], [0, 0, 1, 1], [], []>} : vector<64x128xbf16>, vector<128x128xbf16>, vector<64x128xf32> -> vector<64x128xf32>
    %28 = arith.addf %21, %27 : vector<64x128xf32>
    %c0_32 = arith.constant 0 : index
    %c1_33 = arith.constant 1 : index
    %c0_34 = arith.constant 0 : index
    %c1_35 = arith.constant 1 : index
    %c0_36 = arith.constant 0 : index
    %29 = vector.load %arg1[%c0_32, %c1_33, %c0_34, %c1_35, %c0_36] : memref<1x10x1x10x128xbf16, #tpu.memory_space<vmem>>, vector<1x8x1x8x128xbf16>
    %30 = vector.shape_cast %29 : vector<1x8x1x8x128xbf16> to vector<8x8x128xbf16>
    %31 = vector.shape_cast %30 : vector<8x8x128xbf16> to vector<64x128xbf16>
    %c4 = arith.constant 4 : index
    %c0_37 = arith.constant 0 : index
    %c0_38 = arith.constant 0 : index
    %32 = vector.load %arg2[%c4, %c0_37, %c0_38] : memref<9x128x128xbf16, #tpu.memory_space<vmem>>, vector<1x128x128xbf16>
    %33 = vector.shape_cast %32 : vector<1x128x128xbf16> to vector<128x128xbf16>
    %cst_39 = arith.constant dense<0.000000e+00> : vector<64x128xf32>
    %34 = tpu.matmul %31, %33, %cst_39 {dimension_numbers = #tpu.dot_dimension_numbers<[1], [0], [0], [1], [0, 0, 1, 1], [], []>} : vector<64x128xbf16>, vector<128x128xbf16>, vector<64x128xf32> -> vector<64x128xf32>
    %35 = arith.addf %28, %34 : vector<64x128xf32>
    %c0_40 = arith.constant 0 : index
    %c1_41 = arith.constant 1 : index
    %c0_42 = arith.constant 0 : index
    %c2_43 = arith.constant 2 : index
    %c0_44 = arith.constant 0 : index
    %36 = vector.load %arg1[%c0_40, %c1_41, %c0_42, %c2_43, %c0_44] : memref<1x10x1x10x128xbf16, #tpu.memory_space<vmem>>, vector<1x8x1x8x128xbf16>
    %37 = vector.shape_cast %36 : vector<1x8x1x8x128xbf16> to vector<8x8x128xbf16>
    %38 = vector.shape_cast %37 : vector<8x8x128xbf16> to vector<64x128xbf16>
    %c5 = arith.constant 5 : index
    %c0_45 = arith.constant 0 : index
    %c0_46 = arith.constant 0 : index
    %39 = vector.load %arg2[%c5, %c0_45, %c0_46] : memref<9x128x128xbf16, #tpu.memory_space<vmem>>, vector<1x128x128xbf16>
    %40 = vector.shape_cast %39 : vector<1x128x128xbf16> to vector<128x128xbf16>
    %cst_47 = arith.constant dense<0.000000e+00> : vector<64x128xf32>
    %41 = tpu.matmul %38, %40, %cst_47 {dimension_numbers = #tpu.dot_dimension_numbers<[1], [0], [0], [1], [0, 0, 1, 1], [], []>} : vector<64x128xbf16>, vector<128x128xbf16>, vector<64x128xf32> -> vector<64x128xf32>
    %42 = arith.addf %35, %41 : vector<64x128xf32>
    %c0_48 = arith.constant 0 : index
    %c2_49 = arith.constant 2 : index
    %c0_50 = arith.constant 0 : index
    %c0_51 = arith.constant 0 : index
    %c0_52 = arith.constant 0 : index
    %43 = vector.load %arg1[%c0_48, %c2_49, %c0_50, %c0_51, %c0_52] : memref<1x10x1x10x128xbf16, #tpu.memory_space<vmem>>, vector<1x8x1x8x128xbf16>
    %44 = vector.shape_cast %43 : vector<1x8x1x8x128xbf16> to vector<8x8x128xbf16>
    %45 = vector.shape_cast %44 : vector<8x8x128xbf16> to vector<64x128xbf16>
    %c6 = arith.constant 6 : index
    %c0_53 = arith.constant 0 : index
    %c0_54 = arith.constant 0 : index
    %46 = vector.load %arg2[%c6, %c0_53, %c0_54] : memref<9x128x128xbf16, #tpu.memory_space<vmem>>, vector<1x128x128xbf16>
    %47 = vector.shape_cast %46 : vector<1x128x128xbf16> to vector<128x128xbf16>
    %cst_55 = arith.constant dense<0.000000e+00> : vector<64x128xf32>
    %48 = tpu.matmul %45, %47, %cst_55 {dimension_numbers = #tpu.dot_dimension_numbers<[1], [0], [0], [1], [0, 0, 1, 1], [], []>} : vector<64x128xbf16>, vector<128x128xbf16>, vector<64x128xf32> -> vector<64x128xf32>
    %49 = arith.addf %42, %48 : vector<64x128xf32>
    %c0_56 = arith.constant 0 : index
    %c2_57 = arith.constant 2 : index
    %c0_58 = arith.constant 0 : index
    %c1_59 = arith.constant 1 : index
    %c0_60 = arith.constant 0 : index
    %50 = vector.load %arg1[%c0_56, %c2_57, %c0_58, %c1_59, %c0_60] : memref<1x10x1x10x128xbf16, #tpu.memory_space<vmem>>, vector<1x8x1x8x128xbf16>
    %51 = vector.shape_cast %50 : vector<1x8x1x8x128xbf16> to vector<8x8x128xbf16>
    %52 = vector.shape_cast %51 : vector<8x8x128xbf16> to vector<64x128xbf16>
    %c7 = arith.constant 7 : index
    %c0_61 = arith.constant 0 : index
    %c0_62 = arith.constant 0 : index
    %53 = vector.load %arg2[%c7, %c0_61, %c0_62] : memref<9x128x128xbf16, #tpu.memory_space<vmem>>, vector<1x128x128xbf16>
    %54 = vector.shape_cast %53 : vector<1x128x128xbf16> to vector<128x128xbf16>
    %cst_63 = arith.constant dense<0.000000e+00> : vector<64x128xf32>
    %55 = tpu.matmul %52, %54, %cst_63 {dimension_numbers = #tpu.dot_dimension_numbers<[1], [0], [0], [1], [0, 0, 1, 1], [], []>} : vector<64x128xbf16>, vector<128x128xbf16>, vector<64x128xf32> -> vector<64x128xf32>
    %56 = arith.addf %49, %55 : vector<64x128xf32>
    %c0_64 = arith.constant 0 : index
    %c2_65 = arith.constant 2 : index
    %c0_66 = arith.constant 0 : index
    %c2_67 = arith.constant 2 : index
    %c0_68 = arith.constant 0 : index
    %57 = vector.load %arg1[%c0_64, %c2_65, %c0_66, %c2_67, %c0_68] : memref<1x10x1x10x128xbf16, #tpu.memory_space<vmem>>, vector<1x8x1x8x128xbf16>
    %58 = vector.shape_cast %57 : vector<1x8x1x8x128xbf16> to vector<8x8x128xbf16>
    %59 = vector.shape_cast %58 : vector<8x8x128xbf16> to vector<64x128xbf16>
    %c8 = arith.constant 8 : index
    %c0_69 = arith.constant 0 : index
    %c0_70 = arith.constant 0 : index
    %60 = vector.load %arg2[%c8, %c0_69, %c0_70] : memref<9x128x128xbf16, #tpu.memory_space<vmem>>, vector<1x128x128xbf16>
    %61 = vector.shape_cast %60 : vector<1x128x128xbf16> to vector<128x128xbf16>
    %cst_71 = arith.constant dense<0.000000e+00> : vector<64x128xf32>
    %62 = tpu.matmul %59, %61, %cst_71 {dimension_numbers = #tpu.dot_dimension_numbers<[1], [0], [0], [1], [0, 0, 1, 1], [], []>} : vector<64x128xbf16>, vector<128x128xbf16>, vector<64x128xf32> -> vector<64x128xf32>
    %63 = arith.addf %56, %62 : vector<64x128xf32>
    %64 = arith.truncf %63 : vector<64x128xf32> to vector<64x128xbf16>
    %c0_72 = arith.constant 0 : index
    %c0_73 = arith.constant 0 : index
    %c0_74 = arith.constant 0 : index
    %65 = vector.load %arg3[%c0_72, %c0_73, %c0_74] : memref<1x64x128xbf16, #tpu.memory_space<vmem>>, vector<1x64x128xbf16>
    %66 = vector.shape_cast %65 : vector<1x64x128xbf16> to vector<64x128xbf16>
    %67 = vector.shape_cast %64 : vector<64x128xbf16> to vector<1x64x128xbf16>
    tpu.vector_store %arg3[%c0_72, %c0_73, %c0_74], %67 {strides = array<i32>} : memref<1x64x128xbf16, #tpu.memory_space<vmem>>, vector<1x64x128xbf16>,
    %cst_75 = arith.constant dense<0.000000e+00> : vector<128xf32>
    %68 = vector.multi_reduction <add>, %63, %cst_75 [0] : vector<64x128xf32> to vector<128xf32>
    %69 = vector.shape_cast %68 : vector<128xf32> to vector<1x128xf32>
    %c0_76 = arith.constant 0 : index
    %c0_77 = arith.constant 0 : index
    %c0_78 = arith.constant 0 : index
    %70 = vector.load %arg4[%c0_76, %c0_77, %c0_78] : memref<1x1x128xf32, #tpu.memory_space<vmem>>, vector<1x1x128xf32>
    %71 = vector.shape_cast %70 : vector<1x1x128xf32> to vector<1x128xf32>
    %72 = vector.shape_cast %69 : vector<1x128xf32> to vector<1x1x128xf32>
    tpu.vector_store %arg4[%c0_76, %c0_77, %c0_78], %72 {strides = array<i32>} : memref<1x1x128xf32, #tpu.memory_space<vmem>>, vector<1x1x128xf32>,
    %73 = arith.mulf %63, %63 : vector<64x128xf32>
    %cst_79 = arith.constant dense<0.000000e+00> : vector<128xf32>
    %74 = vector.multi_reduction <add>, %73, %cst_79 [0] : vector<64x128xf32> to vector<128xf32>
    %75 = vector.shape_cast %74 : vector<128xf32> to vector<1x128xf32>
    %c0_80 = arith.constant 0 : index
    %c0_81 = arith.constant 0 : index
    %c0_82 = arith.constant 0 : index
    %76 = vector.load %arg5[%c0_80, %c0_81, %c0_82] : memref<1x1x128xf32, #tpu.memory_space<vmem>>, vector<1x1x128xf32>
    %77 = vector.shape_cast %76 : vector<1x1x128xf32> to vector<1x128xf32>
    %78 = vector.shape_cast %75 : vector<1x128xf32> to vector<1x1x128xf32>
    tpu.vector_store %arg5[%c0_80, %c0_81, %c0_82], %78 {strides = array<i32>} : memref<1x1x128xf32, #tpu.memory_space<vmem>>, vector<1x1x128xf32>,
    return
  }
  func.func @transform_0(%arg0: i32) -> (i32, i32, i32, i32, i32) {
    %c0_i32 = arith.constant 0 : i32
    %c0_i32_0 = arith.constant 0 : i32
    %c0_i32_1 = arith.constant 0 : i32
    %c0_i32_2 = arith.constant 0 : i32
    %c0_i32_3 = arith.constant 0 : i32
    return %arg0, %c0_i32, %c0_i32_0, %c0_i32_1, %c0_i32_2 : i32, i32, i32, i32, i32
  }
  func.func @transform_1(%arg0: i32) -> (i32, i32, i32) {
    %c0_i32 = arith.constant 0 : i32
    %c0_i32_0 = arith.constant 0 : i32
    %c0_i32_1 = arith.constant 0 : i32
    %c0_i32_2 = arith.constant 0 : i32
    return %c0_i32, %c0_i32_0, %c0_i32_1 : i32, i32, i32
  }
  func.func @transform_2(%arg0: i32) -> (i32, i32, i32) {
    %c0_i32 = arith.constant 0 : i32
    %c0_i32_0 = arith.constant 0 : i32
    %c0_i32_1 = arith.constant 0 : i32
    return %arg0, %c0_i32, %c0_i32_0 : i32, i32, i32
  }
  func.func @transform_3(%arg0: i32) -> (i32, i32, i32) {
    %c0_i32 = arith.constant 0 : i32
    %c0_i32_0 = arith.constant 0 : i32
    %c0_i32_1 = arith.constant 0 : i32
    return %arg0, %c0_i32, %c0_i32_0 : i32, i32, i32
  }
  func.func @transform_4(%arg0: i32) -> (i32, i32, i32) {
    %c0_i32 = arith.constant 0 : i32
    %c0_i32_0 = arith.constant 0 : i32
    %c0_i32_1 = arith.constant 0 : i32
    return %arg0, %c0_i32, %c0_i32_0 : i32, i32, i32
  }
}

module attributes {stable_mosaic.version = 11 : i64} {
  func.func @_bn_apply_res_kernel(%arg0: i32, %arg1: memref<1x64x128xbf16, #tpu.memory_space<vmem>>, %arg2: memref<2x1x128xf32, #tpu.memory_space<vmem>>, %arg3: memref<2x1x128xf32, #tpu.memory_space<vmem>>, %arg4: memref<1x128xf32, #tpu.memory_space<vmem>>, %arg5: memref<1x128xf32, #tpu.memory_space<vmem>>, %arg6: memref<1x64x128xbf16, #tpu.memory_space<vmem>>, %arg7: memref<1x64x128xf32, #tpu.memory_space<vmem>>) attributes {dimension_semantics = [#tpu.dimension_semantics<parallel>], iteration_bounds = array<i64: 2>, scalar_prefetch = 0 : i64, scratch_operands = 0 : i64, tpu.core_type = #tpu.core_type<tc>, window_params = [{transform_indices = @transform_0, window_bounds = array<i64: 1, 64, 128>}, {pipeline_mode = #tpu.pipeline_mode<synchronous>, transform_indices = @transform_1, window_bounds = array<i64: 2, 1, 128>}, {pipeline_mode = #tpu.pipeline_mode<synchronous>, transform_indices = @transform_2, window_bounds = array<i64: 2, 1, 128>}, {pipeline_mode = #tpu.pipeline_mode<synchronous>, transform_indices = @transform_3, window_bounds = array<i64: 1, 128>}, {pipeline_mode = #tpu.pipeline_mode<synchronous>, transform_indices = @transform_4, window_bounds = array<i64: 1, 128>}, {transform_indices = @transform_5, window_bounds = array<i64: 1, 64, 128>}, {transform_indices = @transform_6, window_bounds = array<i64: 1, 64, 128>}]} {
    %c0 = arith.constant 0 : index
    %c0_0 = arith.constant 0 : index
    %c0_1 = arith.constant 0 : index
    %0 = vector.load %arg2[%c0, %c0_0, %c0_1] : memref<2x1x128xf32, #tpu.memory_space<vmem>>, vector<2x1x128xf32>
    %c0_2 = arith.constant 0 : index
    %c0_3 = arith.constant 0 : index
    %c0_4 = arith.constant 0 : index
    %1 = vector.load %arg3[%c0_2, %c0_3, %c0_4] : memref<2x1x128xf32, #tpu.memory_space<vmem>>, vector<2x1x128xf32>
    %c0_5 = arith.constant 0 : index
    %c0_6 = arith.constant 0 : index
    %2 = vector.load %arg4[%c0_5, %c0_6] : memref<1x128xf32, #tpu.memory_space<vmem>>, vector<1x128xf32>
    %c0_7 = arith.constant 0 : index
    %c0_8 = arith.constant 0 : index
    %3 = vector.load %arg5[%c0_7, %c0_8] : memref<1x128xf32, #tpu.memory_space<vmem>>, vector<1x128xf32>
    %cst = arith.constant dense<0.000000e+00> : vector<1x128xf32>
    %4 = vector.multi_reduction <add>, %0, %cst [0] : vector<2x1x128xf32> to vector<1x128xf32>
    %cst_9 = arith.constant 1.280000e+02 : f32
    %5 = vector.broadcast %cst_9 : f32 to vector<1x128xf32>
    %6 = arith.divf %4, %5 : vector<1x128xf32>
    %cst_10 = arith.constant dense<0.000000e+00> : vector<1x128xf32>
    %7 = vector.multi_reduction <add>, %1, %cst_10 [0] : vector<2x1x128xf32> to vector<1x128xf32>
    %cst_11 = arith.constant 1.280000e+02 : f32
    %8 = vector.broadcast %cst_11 : f32 to vector<1x128xf32>
    %9 = arith.divf %7, %8 : vector<1x128xf32>
    %10 = arith.mulf %6, %6 : vector<1x128xf32>
    %11 = arith.subf %9, %10 : vector<1x128xf32>
    %cst_12 = arith.constant 0.000000e+00 : f32
    %12 = vector.broadcast %cst_12 : f32 to vector<1x128xf32>
    %13 = arith.maximumf %11, %12 : vector<1x128xf32>
    %cst_13 = arith.constant 9.99999974E-6 : f32
    %14 = vector.broadcast %cst_13 : f32 to vector<1x128xf32>
    %15 = arith.addf %13, %14 : vector<1x128xf32>
    %16 = math.rsqrt %15 : vector<1x128xf32>
    %17 = arith.mulf %2, %16 : vector<1x128xf32>
    %18 = arith.mulf %6, %17 : vector<1x128xf32>
    %19 = arith.subf %3, %18 : vector<1x128xf32>
    %c0_14 = arith.constant 0 : index
    %c0_15 = arith.constant 0 : index
    %c0_16 = arith.constant 0 : index
    %20 = vector.load %arg1[%c0_14, %c0_15, %c0_16] : memref<1x64x128xbf16, #tpu.memory_space<vmem>>, vector<1x64x128xbf16>
    %21 = vector.shape_cast %20 : vector<1x64x128xbf16> to vector<64x128xbf16>
    %22 = arith.extf %21 : vector<64x128xbf16> to vector<64x128xf32>
    %23 = vector.broadcast %17 : vector<1x128xf32> to vector<64x128xf32>
    %24 = arith.mulf %22, %23 : vector<64x128xf32>
    %25 = vector.broadcast %19 : vector<1x128xf32> to vector<64x128xf32>
    %26 = arith.addf %24, %25 : vector<64x128xf32>
    %c0_17 = arith.constant 0 : index
    %c0_18 = arith.constant 0 : index
    %c0_19 = arith.constant 0 : index
    %27 = vector.load %arg6[%c0_17, %c0_18, %c0_19] : memref<1x64x128xbf16, #tpu.memory_space<vmem>>, vector<1x64x128xbf16>
    %28 = vector.shape_cast %27 : vector<1x64x128xbf16> to vector<64x128xbf16>
    %29 = arith.extf %28 : vector<64x128xbf16> to vector<64x128xf32>
    %30 = arith.addf %26, %29 : vector<64x128xf32>
    %cst_20 = arith.constant 0.000000e+00 : f32
    %31 = vector.broadcast %cst_20 : f32 to vector<64x128xf32>
    %32 = arith.maximumf %30, %31 : vector<64x128xf32>
    %c0_21 = arith.constant 0 : index
    %c0_22 = arith.constant 0 : index
    %c0_23 = arith.constant 0 : index
    %33 = vector.load %arg7[%c0_21, %c0_22, %c0_23] : memref<1x64x128xf32, #tpu.memory_space<vmem>>, vector<1x64x128xf32>
    %34 = vector.shape_cast %33 : vector<1x64x128xf32> to vector<64x128xf32>
    %35 = vector.shape_cast %32 : vector<64x128xf32> to vector<1x64x128xf32>
    tpu.vector_store %arg7[%c0_21, %c0_22, %c0_23], %35 {strides = array<i32>} : memref<1x64x128xf32, #tpu.memory_space<vmem>>, vector<1x64x128xf32>,
    return
  }
  func.func @transform_0(%arg0: i32) -> (i32, i32, i32) {
    %c0_i32 = arith.constant 0 : i32
    %c0_i32_0 = arith.constant 0 : i32
    %c0_i32_1 = arith.constant 0 : i32
    return %arg0, %c0_i32, %c0_i32_0 : i32, i32, i32
  }
  func.func @transform_1(%arg0: i32) -> (i32, i32, i32) {
    %c0_i32 = arith.constant 0 : i32
    %c0_i32_0 = arith.constant 0 : i32
    %c0_i32_1 = arith.constant 0 : i32
    %c0_i32_2 = arith.constant 0 : i32
    return %c0_i32, %c0_i32_0, %c0_i32_1 : i32, i32, i32
  }
  func.func @transform_2(%arg0: i32) -> (i32, i32, i32) {
    %c0_i32 = arith.constant 0 : i32
    %c0_i32_0 = arith.constant 0 : i32
    %c0_i32_1 = arith.constant 0 : i32
    %c0_i32_2 = arith.constant 0 : i32
    return %c0_i32, %c0_i32_0, %c0_i32_1 : i32, i32, i32
  }
  func.func @transform_3(%arg0: i32) -> (i32, i32) {
    %c0_i32 = arith.constant 0 : i32
    %c0_i32_0 = arith.constant 0 : i32
    %c0_i32_1 = arith.constant 0 : i32
    return %c0_i32, %c0_i32_0 : i32, i32
  }
  func.func @transform_4(%arg0: i32) -> (i32, i32) {
    %c0_i32 = arith.constant 0 : i32
    %c0_i32_0 = arith.constant 0 : i32
    %c0_i32_1 = arith.constant 0 : i32
    return %c0_i32, %c0_i32_0 : i32, i32
  }
  func.func @transform_5(%arg0: i32) -> (i32, i32, i32) {
    %c0_i32 = arith.constant 0 : i32
    %c0_i32_0 = arith.constant 0 : i32
    %c0_i32_1 = arith.constant 0 : i32
    return %arg0, %c0_i32, %c0_i32_0 : i32, i32, i32
  }
  func.func @transform_6(%arg0: i32) -> (i32, i32, i32) {
    %c0_i32 = arith.constant 0 : i32
    %c0_i32_0 = arith.constant 0 : i32
    %c0_i32_1 = arith.constant 0 : i32
    return %arg0, %c0_i32, %c0_i32_0 : i32, i32, i32
  }
}

</mosaic_0001>

<llo_original>
// kernel: basic_block_forward.8
$region0: #{basic_block_forward.8}
  #allocation0 [shape = 'u32[]', space=smem, size = 0x4, offset = 0x4, fixed_abs, tag = 'smem constant byte address 0x4 - core index']
  #allocation1 [shape = 'u32[144,128]{1,0:T(1,128)}', space=vmem, size = 0x12000, scoped, tag = 'internal scratch']
  %s0 = inlined_call_operand.vmem [shape: bf16[2,8,2,8,8], index: 0, kind: input, shape index: {}]
  %s1 = inlined_call_operand.vmem [shape: bf16[1,4,128], index: 1, kind: input, shape index: {}]
  %s2 = inlined_call_operand.vmem [shape: bf16[2,64,128], index: 2, kind: output, shape index: {0}]
  %s3 = inlined_call_operand.vmem [shape: f32[2,1,128], index: 3, kind: output, shape index: {1}]
  %s4 = inlined_call_operand.vmem [shape: f32[2,1,128], index: 4, kind: output, shape index: {2}]
  %5 = xla_tuple %s2, %s3, %s4
  %s6 = sld [smem:[#allocation0]]
  $region57: #{basic_block_forward.8} parent=0
    _
  %s8 = ssub.s32 1, %s6
  %s9 = scalar_select 0, %s8, %s6
  loop: start=0, step=1, limit=4
  $region2: #{basic_block_forward.8} parent=0 // loop_pre_header
    _
  $region3: #{basic_block_forward.8} parent=0 // loop_header
    %s11 = sphi 0, %s15
    %p12 = scmp.ge.s32.totalorder %s11, 4
    %s21 = sphi 0, %s23
    %s24 = sphi 0, %s21
    %s25 = sphi 0, %s24
    %s41 = sphi 0, %s25
    %s45 = sphi 0, %s45
    %s47 = sphi 0, %s45
    %s48 = sphi 0, %s47
    %s62 = sphi 0, %s48
    %s68 = sphi 0, %s70
    %s71 = sphi 0, %s68
    %s72 = sphi 0, %s71
    %s88 = sphi 0, %s72
    %s94 = sphi 0, %s96
    %s97 = sphi 0, %s94
    %s98 = sphi 0, %s97
    %s114 = sphi 0, %s98
    %s120 = sphi 0, %s122
    %s123 = sphi 0, %s120
    %s124 = sphi 0, %s123
    %s140 = sphi 0, %s124
  $region4: #{basic_block_forward.8} parent=0 // loop_header_branch
    %14 = sbr.rel (%p12) target = $region8
  $region5: #{basic_block_forward.8} parent=0 // loop_body
    %s16 = ssub.s32 %s11, 1
    %s17 = ssub.s32 %s11, 2
    %s18 = sadd.s32 %s11, 1
    %s19 = ssub.s32 %s11, %s18
    %p20 = scmp.eq.s32.totalorder %s19, 0
    %s22 = sadd.s32 %s21, 1
    %s23 = scalar_select %p20, %s21, %s22
    %p26 = pneg %p20
    %p27 = scmp.eq.s32.totalorder %s11, 1
    %p28 = por %p26, %p27
    %p29 = scmp.ne.s32.totalorder %s21, %s24
    %p30 = scmp.eq.s32.totalorder %s11, 0
    %p31 = por %p29, %p30
    %p32 = scmp.ne.s32.totalorder %s21, %s24
    %p33 = scmp.eq.s32.totalorder %s16, 1
    %p34 = por %p32, %p33
    %p35 = scmp.ne.s32.totalorder %s24, %s25
    %p36 = scmp.eq.s32.totalorder %s16, 0
    %p37 = por %p35, %p36
    %p38 = scmp.ne.s32.totalorder %s24, %s25
    %p39 = scmp.eq.s32.totalorder %s17, 1
    %p40 = por %p38, %p39
    %p42 = scmp.ne.s32.totalorder %s25, %s41
    %p43 = scmp.eq.s32.totalorder %s17, 0
    %p44 = por %p42, %p43
    %s46 = sadd.s32 %s45, 1
    %p49 = scmp.eq.s32.totalorder %s11, 1
    %p50 = scmp.ne.s32.totalorder %s45, %s47
    %p51 = scmp.eq.s32.totalorder %s11, 0
    %p52 = por %p50, %p51
    %p53 = scmp.ne.s32.totalorder %s45, %s47
    %p54 = scmp.eq.s32.totalorder %s16, 1
    %p55 = por %p53, %p54
    %p56 = scmp.ne.s32.totalorder %s47, %s48
    %p57 = scmp.eq.s32.totalorder %s16, 0
    %p58 = por %p56, %p57
    %p59 = scmp.ne.s32.totalorder %s47, %s48
    %p60 = scmp.eq.s32.totalorder %s17, 1
    %p61 = por %p59, %p60
    %p63 = scmp.ne.s32.totalorder %s48, %s62
    %p64 = scmp.eq.s32.totalorder %s17, 0
    %p65 = por %p63, %p64
    %s66 = ssub.s32 %s11, %s18
    %p67 = scmp.eq.s32.totalorder %s66, 0
    %s69 = sadd.s32 %s68, 1
    %s70 = scalar_select %p67, %s68, %s69
    %p73 = pneg %p67
    %p74 = scmp.eq.s32.totalorder %s11, 1
    %p75 = por %p73, %p74
    %p76 = scmp.ne.s32.totalorder %s68, %s71
    %p77 = scmp.eq.s32.totalorder %s11, 0
    %p78 = por %p76, %p77
    %p79 = scmp.ne.s32.totalorder %s68, %s71
    %p80 = scmp.eq.s32.totalorder %s16, 1
    %p81 = por %p79, %p80
    %p82 = scmp.ne.s32.totalorder %s71, %s72
    %p83 = scmp.eq.s32.totalorder %s16, 0
    %p84 = por %p82, %p83
    %p85 = scmp.ne.s32.totalorder %s71, %s72
    %p86 = scmp.eq.s32.totalorder %s17, 1
    %p87 = por %p85, %p86
    %p89 = scmp.ne.s32.totalorder %s72, %s88
    %p90 = scmp.eq.s32.totalorder %s17, 0
    %p91 = por %p89, %p90
    %s92 = ssub.s32 %s11, %s18
    %p93 = scmp.eq.s32.totalorder %s92, 0
    %s95 = sadd.s32 %s94, 1
    %s96 = scalar_select %p93, %s94, %s95
    %p99 = pneg %p93
    %p100 = scmp.eq.s32.totalorder %s11, 1
    %p101 = por %p99, %p100
    %p102 = scmp.ne.s32.totalorder %s94, %s97
    %p103 = scmp.eq.s32.totalorder %s11, 0
    %p104 = por %p102, %p103
    %p105 = scmp.ne.s32.totalorder %s94, %s97
    %p106 = scmp.eq.s32.totalorder %s16, 1
    %p107 = por %p105, %p106
    %p108 = scmp.ne.s32.totalorder %s97, %s98
    %p109 = scmp.eq.s32.totalorder %s16, 0
    %p110 = por %p108, %p109
    %p111 = scmp.ne.s32.totalorder %s97, %s98
    %p112 = scmp.eq.s32.totalorder %s17, 1
    %p113 = por %p111, %p112
    %p115 = scmp.ne.s32.totalorder %s98, %s114
    %p116 = scmp.eq.s32.totalorder %s17, 0
    %p117 = por %p115, %p116
    %s118 = ssub.s32 %s11, %s18
    %p119 = scmp.eq.s32.totalorder %s118, 0
    %s121 = sadd.s32 %s120, 1
    %s122 = scalar_select %p119, %s120, %s121
    %p125 = pneg %p119
    %p126 = scmp.eq.s32.totalorder %s11, 1
    %p127 = por %p125, %p126
    %p128 = scmp.ne.s32.totalorder %s120, %s123
    %p129 = scmp.eq.s32.totalorder %s11, 0
    %p130 = por %p128, %p129
    %p131 = scmp.ne.s32.totalorder %s120, %s123
    %p132 = scmp.eq.s32.totalorder %s16, 1
    %p133 = por %p131, %p132
    %p134 = scmp.ne.s32.totalorder %s123, %s124
    %p135 = scmp.eq.s32.totalorder %s16, 0
    %p136 = por %p134, %p135
    %p137 = scmp.ne.s32.totalorder %s123, %s124
    %p138 = scmp.eq.s32.totalorder %s17, 1
    %p139 = por %p137, %p138
    %p141 = scmp.ne.s32.totalorder %s124, %s140
    %p142 = scmp.eq.s32.totalorder %s17, 0
    %p143 = por %p141, %p142
    %p144 = scmp.le.s32.totalorder 1, %s11
    %p145 = scmp.lt.s32.totalorder %s11, 3
    %p146 = pnand %p144, %p145
    %p147 = pneg %p146
    // Predicated region
    $region9: #{basic_block_forward.8} parent=5 // pred_check
      _
    $region10: #{basic_block_forward.8} parent=5 // pred_check_branch
      %149 = sbr.rel (%p146) target = $region12
    $region11: #{basic_block_forward.8} parent=5 // pred_region
      %s150 = ssub.s32 %s11, 1
      // Predicated region
      $region13: #{basic_block_forward.8} parent=11 // pred_check
        %p151 = pneg %p58
      $region14: #{basic_block_forward.8} parent=11 // pred_check_branch
        %153 = sbr.rel (%p151) target = $region16
      $region15: #{basic_block_forward.8} parent=11 // pred_region
        _
      $region16: #{basic_block_forward.8} parent=11 // pred_fallthru
        _
    $region12: #{basic_block_forward.8} parent=5 // pred_fallthru
      _
    %p154 = scmp.lt.s32.totalorder %s11, 2
    // Predicated region
    $region17: #{basic_block_forward.8} parent=5 // pred_check
      %p155 = pneg %p154
    $region18: #{basic_block_forward.8} parent=5 // pred_check_branch
      %157 = sbr.rel (%p155) target = $region20
    $region19: #{basic_block_forward.8} parent=5 // pred_region
      // Predicated region
      $region21: #{basic_block_forward.8} parent=19 // pred_check
        %p158 = pneg %p31
      $region22: #{basic_block_forward.8} parent=19 // pred_check_branch
        %160 = sbr.rel (%p158) target = $region24
      $region23: #{basic_block_forward.8} parent=19 // pred_region
        %p161 = scmp.lt.s32.totalorder %s11, 1
        %s162 = scalar_select %p161, %s11, 1
        %s163 = smul.addr %s162, 16
        %s164 = smul.addr %s163, 4
        %s165 = scalar_lea.vmem %s0, %s164
      $region24: #{basic_block_forward.8} parent=19 // pred_fallthru
        _
    $region20: #{basic_block_forward.8} parent=5 // pred_fallthru
      _
    %p166 = scmp.le.s32.totalorder 1, %s11
    %p167 = scmp.lt.s32.totalorder %s11, 3
    %p168 = pnand %p166, %p167
    %p169 = pneg %p168
    // Predicated region
    $region25: #{basic_block_forward.8} parent=5 // pred_check
      _
    $region26: #{basic_block_forward.8} parent=5 // pred_check_branch
      %171 = sbr.rel (%p168) target = $region28
    $region27: #{basic_block_forward.8} parent=5 // pred_region
      %s172 = ssub.s32 %s11, 1
      %p173 = scmp.lt.s32.totalorder %s16, 1
      %s174 = scalar_select %p173, %s16, 1
      %s175 = smul.addr %s174, 16
      %s176 = smul.addr %s175, 4
      %s177 = scalar_lea.vmem %s0, %s176
      %p178 = pneg %p37
      %p179 = pneg %p34
      %p180 = pneg %p58
      %p181 = pneg %p55
      %p182 = pneg %p84
      %p183 = pneg %p81
      %p184 = scmp.lt.s32.totalorder %s16, 1
      %s185 = scalar_select %p184, %s16, 1
      %s186 = smul.addr %s185, 8
      %s187 = smul.addr %s186, 4
      %s188 = scalar_lea.vmem %s2, %s187
      %p189 = pneg %p110
      %p190 = pneg %p107
      %p191 = scmp.lt.s32.totalorder %s16, 1
      %s192 = scalar_select %p191, %s16, 1
      %s193 = scalar_lea.vmem %s3, %s192
      %p194 = pneg %p136
      %p195 = pneg %p133
      %p196 = scmp.lt.s32.totalorder %s16, 1
      %s197 = scalar_select %p196, %s16, 1
      %s198 = scalar_lea.vmem %s4, %s197
      %p199 = scmp.lt.s32.totalorder %s16, 1
      %s200 = scalar_select %p199, %s16, 1
      %s201 = smul.addr %s200, 16
      %s202 = smul.addr %s201, 4
      %s203 = scalar_lea.vmem %s0, %s202
      %p204 = scmp.lt.s32.totalorder %s16, 1
      %s205 = scalar_select %p204, %s16, 1
      %s206 = smul.addr %s205, 8
      %s207 = smul.addr %s206, 4
      %s208 = scalar_lea.vmem %s2, %s207
      %p209 = scmp.lt.s32.totalorder %s16, 1
      %s210 = scalar_select %p209, %s16, 1
      %s211 = scalar_lea.vmem %s3, %s210
      %p212 = scmp.lt.s32.totalorder %s16, 1
      %s213 = scalar_select %p212, %s16, 1
      %s214 = scalar_lea.vmem %s4, %s213
      %v216 = vld [vmem:[%s203] sm:$0xf]
      %v217 = vld [vmem:[%s203 + $0x8] sm:$0xf]
      %v218 = vld [vmem:[%s203 + $0x10] sm:$0xf]
      %v219 = vld [vmem:[%s203 + $0x18] sm:$0xf]
      %v220 = vld [vmem:[%s203 + $0x20] sm:$0xf]
      %v221 = vld [vmem:[%s203 + $0x28] sm:$0xf]
      %v222 = vld [vmem:[%s203 + $0x30] sm:$0xf]
      %v223 = vld [vmem:[%s203 + $0x38] sm:$0xf]
      %v224 = vld [vmem:[%s1] sm:$0x3]
      %v233 = vunpack.c.l.b16 %v216
      %v234 = vunpack.c.l.b16 %v217
      %v235 = vunpack.c.l.b16 %v218
      %v236 = vunpack.c.l.b16 %v219
      %v237 = vunpack.c.l.b16 %v220
      %v238 = vunpack.c.l.b16 %v221
      %v239 = vunpack.c.l.b16 %v222
      %v240 = vunpack.c.l.b16 %v223
      %v241 = vpack.c.b16 %v234, %v233
      %v242 = vpack.c.b16 %v236, %v235
      %v243 = vpack.c.b16 %v238, %v237
      %v244 = vpack.c.b16 %v240, %v239
      %vm245 = vcmask 31744
      %v247 = vsel %vm245, %v241, 0
      %v250 = vsel %vm245, %v242, 0
      %v253 = vsel %vm245, %v243, 0
      %v256 = vsel %vm245, %v244, 0
      %vm258 = vcmask 1041408
      %v260 = vsel %vm258, %v224, 0
      %262 = vmatprep.subr.bf16.mxu0 0
      %263 = vmatpush1.bf16.msra.mxu0 0
      %264 = vmatprep.subr.bf16.mxu0 0
      %265 = vmatpush1.bf16.msra.mxu0 0
      %266 = vmatprep.subr.bf16.mxu0 0
      %267 = vmatpush1.bf16.msra.mxu0 0
      %268 = vmatprep.subr.bf16.mxu0 0
      %269 = vmatpush1.bf16.msra.mxu0 0
      %270 = vmatprep.subr.bf16.mxu0 0
      %271 = vmatpush1.bf16.msra.mxu0 0
      %272 = vmatprep.subr.bf16.mxu0 0
      %273 = vmatpush1.bf16.msra.mxu0 0
      %274 = vmatprep.subr.bf16.mxu0 0
      %275 = vmatpush1.bf16.msra.mxu0 0
      %276 = vmatprep.subr.bf16.mxu0 0
      %277 = vmatpush1.bf16.msra.mxu0 %v260
      %278 = vmatprep.subr.bf16.mxu0 0
      %279 = vmatpush2.bf16.msra.mxu0 0
      %280 = vmatprep.subr.bf16.mxu0 0
      %281 = vmatpush2.bf16.msra.mxu0 0
      %282 = vmatprep.subr.bf16.mxu0 0
      %283 = vmatpush2.bf16.msra.mxu0 0
      %284 = vmatprep.subr.bf16.mxu0 0
      %285 = vmatpush2.bf16.msra.mxu0 0
      %286 = vmatprep.subr.bf16.mxu0 0
      %287 = vmatpush2.bf16.msra.mxu0 0
      %288 = vmatprep.subr.bf16.mxu0 0
      %289 = vmatpush2.bf16.msra.mxu0 0
      %290 = vmatprep.subr.bf16.mxu0 0
      %291 = vmatpush2.bf16.msra.mxu0 0
      %292 = vmatprep.subr.bf16.mxu0 0
      %293 = vmatpush2.bf16.msra.mxu0 0
      %294 = vmatprep.mubr.bf16.mxu0 0
      %295 = vmatmul.mubr.bf16.gmra.mxu0 %v247
      %v296 = vpop.f32.mrf.mxu0
      %v297 = vadd.f32 0.0, %v296
      %v298 = vpop.f32.mrf.mxu0
      %v299 = vpop.f32.mrf.mxu0
      %v300 = vadd.f32 0.0, %v299
      %v301 = vpop.f32.mrf.mxu0
      %302 = vmatprep.mubr.bf16.mxu0 0
      %303 = vmatmul.mubr.bf16.gmra.mxu0 %v250
      %v304 = vpop.f32.mrf.mxu0
      %v305 = vadd.f32 0.0, %v304
      %v306 = vpop.f32.mrf.mxu0
      %v307 = vpop.f32.mrf.mxu0
      %v308 = vadd.f32 0.0, %v307
      %v309 = vpop.f32.mrf.mxu0
      %310 = vmatprep.mubr.bf16.mxu0 0
      %311 = vmatmul.mubr.bf16.gmra.mxu0 %v253
      %v312 = vpop.f32.mrf.mxu0
      %v313 = vadd.f32 0.0, %v312
      %v314 = vpop.f32.mrf.mxu0
      %v315 = vpop.f32.mrf.mxu0
      %v316 = vadd.f32 0.0, %v315
      %v317 = vpop.f32.mrf.mxu0
      %318 = vmatprep.mubr.bf16.mxu0 0
      %319 = vmatmul.mubr.bf16.gmra.mxu0 %v256
      %v320 = vpop.f32.mrf.mxu0
      %v321 = vadd.f32 0.0, %v320
      %v322 = vpop.f32.mrf.mxu0
      %v323 = vpop.f32.mrf.mxu0
      %v324 = vadd.f32 0.0, %v323
      %v325 = vpop.f32.mrf.mxu0
      %326 = vdwg.mxu0
      %v327 = vpack.c.bf16 %v300, %v297
      %v328 = vpack.c.bf16 %v308, %v305
      %v329 = vpack.c.bf16 %v316, %v313
      %v330 = vpack.c.bf16 %v324, %v321
      %v335 = vunpack.c.l.b16 %v327
      %v336 = vunpack.c.h.b16 %v327
      %v337 = vunpack.c.l.b16 %v328
      %v338 = vunpack.c.h.b16 %v328
      %v339 = vunpack.c.l.b16 %v329
      %v340 = vunpack.c.h.b16 %v329
      %v341 = vunpack.c.l.b16 %v330
      %v342 = vunpack.c.h.b16 %v330
      %v343 = vpack.c.b16 %v335, %v335
      %v344 = vpack.c.b16 %v336, %v336
      %v345 = vpack.c.b16 %v337, %v337
      %v346 = vpack.c.b16 %v338, %v338
      %v347 = vpack.c.b16 %v339, %v339
      %v348 = vpack.c.b16 %v340, %v340
      %v349 = vpack.c.b16 %v341, %v341
      %v350 = vpack.c.b16 %v342, %v342
      %359 = vst [vmem:[%s208] sm:$0xf] %v343
      %360 = vst [vmem:[%s208 + $0x4] sm:$0xf] %v344
      %361 = vst [vmem:[%s208 + $0x8] sm:$0xf] %v345
      %362 = vst [vmem:[%s208 + $0xc] sm:$0xf] %v346
      %363 = vst [vmem:[%s208 + $0x10] sm:$0xf] %v347
      %364 = vst [vmem:[%s208 + $0x14] sm:$0xf] %v348
      %365 = vst [vmem:[%s208 + $0x18] sm:$0xf] %v349
      %366 = vst [vmem:[%s208 + $0x1c] sm:$0xf] %v350
      %v367 = vadd.f32 %v297, %v300
      %v368 = vadd.f32 %v367, %v305
      %v369 = vadd.f32 %v368, %v308
      %v370 = vadd.f32 %v369, %v313
      %v371 = vadd.f32 %v370, %v316
      %v372 = vadd.f32 %v371, %v321
      %v373 = vadd.f32 %v372, %v324
      %v374 = vrot.slane %v373, 4
      %v375 = vadd.f32 %v373, %v374
      %v376 = vrot.slane %v375, 2
      %v377 = vadd.f32 %v375, %v376
      %v378 = vrot.slane %v377, 1
      %v379 = vadd.f32 %v377, %v378
      %380 = vst [vmem:[%s211] sm:$0x1] %v379
      %v381 = vmul.f32 %v297, %v297
      %v382 = vmul.f32 %v300, %v300
      %v383 = vmul.f32 %v305, %v305
      %v384 = vmul.f32 %v308, %v308
      %v385 = vmul.f32 %v313, %v313
      %v386 = vmul.f32 %v316, %v316
      %v387 = vmul.f32 %v321, %v321
      %v388 = vmul.f32 %v324, %v324
      %v389 = vadd.f32 %v381, %v382
      %v390 = vadd.f32 %v389, %v383
      %v391 = vadd.f32 %v390, %v384
      %v392 = vadd.f32 %v391, %v385
      %v393 = vadd.f32 %v392, %v386
      %v394 = vadd.f32 %v393, %v387
      %v395 = vadd.f32 %v394, %v388
      %v396 = vrot.slane %v395, 4
      %v397 = vadd.f32 %v395, %v396
      %v398 = vrot.slane %v397, 2
      %v399 = vadd.f32 %v397, %v398
      %v400 = vrot.slane %v399, 1
      %v401 = vadd.f32 %v399, %v400
      %402 = vst [vmem:[%s214] sm:$0x1] %v401
      %p403 = scmp.lt.s32.totalorder %s16, 1
      %s404 = scalar_select %p403, %s16, 1
      %s405 = smul.addr %s404, 8
      %s406 = smul.addr %s405, 4
      %s407 = scalar_lea.vmem %s2, %s406
      %p408 = scmp.lt.s32.totalorder %s16, 1
      %s409 = scalar_select %p408, %s16, 1
      %s410 = scalar_lea.vmem %s3, %s409
      %p411 = scmp.lt.s32.totalorder %s16, 1
      %s412 = scalar_select %p411, %s16, 1
      %s413 = scalar_lea.vmem %s4, %s412
      // Predicated region
      $region29: #{basic_block_forward.8} parent=27 // pred_check
        %p414 = pneg %p81
      $region30: #{basic_block_forward.8} parent=27 // pred_check_branch
        %416 = sbr.rel (%p414) target = $region32
      $region31: #{basic_block_forward.8} parent=27 // pred_region
        _
      $region32: #{basic_block_forward.8} parent=27 // pred_fallthru
        _
      // Predicated region
      $region33: #{basic_block_forward.8} parent=27 // pred_check
        %p417 = pneg %p107
      $region34: #{basic_block_forward.8} parent=27 // pred_check_branch
        %419 = sbr.rel (%p417) target = $region36
      $region35: #{basic_block_forward.8} parent=27 // pred_region
        _
      $region36: #{basic_block_forward.8} parent=27 // pred_fallthru
        _
      // Predicated region
      $region37: #{basic_block_forward.8} parent=27 // pred_check
        %p420 = pneg %p133
      $region38: #{basic_block_forward.8} parent=27 // pred_check_branch
        %422 = sbr.rel (%p420) target = $region40
      $region39: #{basic_block_forward.8} parent=27 // pred_region
        _
      $region40: #{basic_block_forward.8} parent=27 // pred_fallthru
        _
    $region28: #{basic_block_forward.8} parent=5 // pred_fallthru
      _
    %p423 = scmp.le.s32.totalorder 2, %s11
    // Predicated region
    $region41: #{basic_block_forward.8} parent=5 // pred_check
      %p424 = pneg %p423
    $region42: #{basic_block_forward.8} parent=5 // pred_check_branch
      %426 = sbr.rel (%p424) target = $region44
    $region43: #{basic_block_forward.8} parent=5 // pred_region
      %s427 = ssub.s32 %s11, 2
      // Predicated region
      $region45: #{basic_block_forward.8} parent=43 // pred_check
        %p428 = pneg %p87
      $region46: #{basic_block_forward.8} parent=43 // pred_check_branch
        %430 = sbr.rel (%p428) target = $region48
      $region47: #{basic_block_forward.8} parent=43 // pred_region
        %p431 = scmp.lt.s32.totalorder %s17, 1
        %s432 = scalar_select %p431, %s17, 1
        %s433 = smul.addr %s432, 8
        %s434 = smul.addr %s433, 4
        %s435 = scalar_lea.vmem %s2, %s434
      $region48: #{basic_block_forward.8} parent=43 // pred_fallthru
        _
      // Predicated region
      $region49: #{basic_block_forward.8} parent=43 // pred_check
        %p436 = pneg %p113
      $region50: #{basic_block_forward.8} parent=43 // pred_check_branch
        %438 = sbr.rel (%p436) target = $region52
      $region51: #{basic_block_forward.8} parent=43 // pred_region
        %p439 = scmp.lt.s32.totalorder %s17, 1
        %s440 = scalar_select %p439, %s17, 1
        %s441 = scalar_lea.vmem %s3, %s440
      $region52: #{basic_block_forward.8} parent=43 // pred_fallthru
        _
      // Predicated region
      $region53: #{basic_block_forward.8} parent=43 // pred_check
        %p442 = pneg %p139
      $region54: #{basic_block_forward.8} parent=43 // pred_check_branch
        %444 = sbr.rel (%p442) target = $region56
      $region55: #{basic_block_forward.8} parent=43 // pred_region
        %p445 = scmp.lt.s32.totalorder %s17, 1
        %s446 = scalar_select %p445, %s17, 1
        %s447 = scalar_lea.vmem %s4, %s446
      $region56: #{basic_block_forward.8} parent=43 // pred_fallthru
        _
    $region44: #{basic_block_forward.8} parent=5 // pred_fallthru
      _
  $region6: #{basic_block_forward.8} parent=0 // loop_footer
    %s15 = sadd.s32 1, %s11
  $region7: #{basic_block_forward.8} parent=0 // loop_footer_branch
    %10 = sbr.rel target = $region3
  $region8: #{basic_block_forward.8} parent=0 // loop_exit
    _

// kernel: basic_block_forward.9
$region0: #{basic_block_forward.9}
  #allocation0 [shape = 'u32[]', space=smem, size = 0x4, offset = 0x4, fixed_abs, tag = 'smem constant byte address 0x4 - core index']
  #allocation1 [shape = 'u32[144,128]{1,0:T(1,128)}', space=vmem, size = 0x12000, scoped, tag = 'internal scratch']
  %s0 = inlined_call_operand.vmem [shape: bf16[2,64,128], index: 0, kind: input, shape index: {}]
  %s1 = inlined_call_operand.vmem [shape: f32[2,1,128], index: 1, kind: input, shape index: {}]
  %s2 = inlined_call_operand.vmem [shape: f32[2,1,128], index: 2, kind: input, shape index: {}]
  %s3 = inlined_call_operand.vmem [shape: f32[1,128], index: 3, kind: input, shape index: {}]
  %s4 = inlined_call_operand.vmem [shape: f32[1,128], index: 4, kind: input, shape index: {}]
  %s5 = inlined_call_operand.vmem [shape: bf16[2,64,128], index: 5, kind: output, shape index: {}]
  %s6 = sld [smem:[#allocation0]]
  $region53: #{basic_block_forward.9} parent=0
    _
  %s8 = ssub.s32 1, %s6
  %s9 = scalar_select 0, %s8, %s6
  loop: start=0, step=1, limit=4
  $region2: #{basic_block_forward.9} parent=0 // loop_pre_header
    _
  $region3: #{basic_block_forward.9} parent=0 // loop_header
    %s11 = sphi 0, %s15
    %p12 = scmp.ge.s32.totalorder %s11, 4
    %s21 = sphi 0, %s23
    %s24 = sphi 0, %s21
    %s25 = sphi 0, %s24
    %s41 = sphi 0, %s25
    %s45 = sphi 0, %s45
    %s47 = sphi 0, %s45
    %s48 = sphi 0, %s47
    %s62 = sphi 0, %s48
    %s66 = sphi 0, %s66
    %s68 = sphi 0, %s66
    %s69 = sphi 0, %s68
    %s83 = sphi 0, %s69
    %s87 = sphi 0, %s87
    %s89 = sphi 0, %s87
    %s90 = sphi 0, %s89
    %s104 = sphi 0, %s90
    %s108 = sphi 0, %s108
    %s110 = sphi 0, %s108
    %s111 = sphi 0, %s110
    %s125 = sphi 0, %s111
    %s131 = sphi 0, %s133
    %s134 = sphi 0, %s131
    %s135 = sphi 0, %s134
    %s151 = sphi 0, %s135
  $region4: #{basic_block_forward.9} parent=0 // loop_header_branch
    %14 = sbr.rel (%p12) target = $region8
  $region5: #{basic_block_forward.9} parent=0 // loop_body
    %s16 = ssub.s32 %s11, 1
    %s17 = ssub.s32 %s11, 2
    %s18 = sadd.s32 %s11, 1
    %s19 = ssub.s32 %s11, %s18
    %p20 = scmp.eq.s32.totalorder %s19, 0
    %s22 = sadd.s32 %s21, 1
    %s23 = scalar_select %p20, %s21, %s22
    %p26 = pneg %p20
    %p27 = scmp.eq.s32.totalorder %s11, 1
    %p28 = por %p26, %p27
    %p29 = scmp.ne.s32.totalorder %s21, %s24
    %p30 = scmp.eq.s32.totalorder %s11, 0
    %p31 = por %p29, %p30
    %p32 = scmp.ne.s32.totalorder %s21, %s24
    %p33 = scmp.eq.s32.totalorder %s16, 1
    %p34 = por %p32, %p33
    %p35 = scmp.ne.s32.totalorder %s24, %s25
    %p36 = scmp.eq.s32.totalorder %s16, 0
    %p37 = por %p35, %p36
    %p38 = scmp.ne.s32.totalorder %s24, %s25
    %p39 = scmp.eq.s32.totalorder %s17, 1
    %p40 = por %p38, %p39
    %p42 = scmp.ne.s32.totalorder %s25, %s41
    %p43 = scmp.eq.s32.totalorder %s17, 0
    %p44 = por %p42, %p43
    %s46 = sadd.s32 %s45, 1
    %p49 = scmp.eq.s32.totalorder %s11, 1
    %p50 = scmp.ne.s32.totalorder %s45, %s47
    %p51 = scmp.eq.s32.totalorder %s11, 0
    %p52 = por %p50, %p51
    %p53 = scmp.ne.s32.totalorder %s45, %s47
    %p54 = scmp.eq.s32.totalorder %s16, 1
    %p55 = por %p53, %p54
    %p56 = scmp.ne.s32.totalorder %s47, %s48
    %p57 = scmp.eq.s32.totalorder %s16, 0
    %p58 = por %p56, %p57
    %p59 = scmp.ne.s32.totalorder %s47, %s48
    %p60 = scmp.eq.s32.totalorder %s17, 1
    %p61 = por %p59, %p60
    %p63 = scmp.ne.s32.totalorder %s48, %s62
    %p64 = scmp.eq.s32.totalorder %s17, 0
    %p65 = por %p63, %p64
    %s67 = sadd.s32 %s66, 1
    %p70 = scmp.eq.s32.totalorder %s11, 1
    %p71 = scmp.ne.s32.totalorder %s66, %s68
    %p72 = scmp.eq.s32.totalorder %s11, 0
    %p73 = por %p71, %p72
    %p74 = scmp.ne.s32.totalorder %s66, %s68
    %p75 = scmp.eq.s32.totalorder %s16, 1
    %p76 = por %p74, %p75
    %p77 = scmp.ne.s32.totalorder %s68, %s69
    %p78 = scmp.eq.s32.totalorder %s16, 0
    %p79 = por %p77, %p78
    %p80 = scmp.ne.s32.totalorder %s68, %s69
    %p81 = scmp.eq.s32.totalorder %s17, 1
    %p82 = por %p80, %p81
    %p84 = scmp.ne.s32.totalorder %s69, %s83
    %p85 = scmp.eq.s32.totalorder %s17, 0
    %p86 = por %p84, %p85
    %s88 = sadd.s32 %s87, 1
    %p91 = scmp.eq.s32.totalorder %s11, 1
    %p92 = scmp.ne.s32.totalorder %s87, %s89
    %p93 = scmp.eq.s32.totalorder %s11, 0
    %p94 = por %p92, %p93
    %p95 = scmp.ne.s32.totalorder %s87, %s89
    %p96 = scmp.eq.s32.totalorder %s16, 1
    %p97 = por %p95, %p96
    %p98 = scmp.ne.s32.totalorder %s89, %s90
    %p99 = scmp.eq.s32.totalorder %s16, 0
    %p100 = por %p98, %p99
    %p101 = scmp.ne.s32.totalorder %s89, %s90
    %p102 = scmp.eq.s32.totalorder %s17, 1
    %p103 = por %p101, %p102
    %p105 = scmp.ne.s32.totalorder %s90, %s104
    %p106 = scmp.eq.s32.totalorder %s17, 0
    %p107 = por %p105, %p106
    %s109 = sadd.s32 %s108, 1
    %p112 = scmp.eq.s32.totalorder %s11, 1
    %p113 = scmp.ne.s32.totalorder %s108, %s110
    %p114 = scmp.eq.s32.totalorder %s11, 0
    %p115 = por %p113, %p114
    %p116 = scmp.ne.s32.totalorder %s108, %s110
    %p117 = scmp.eq.s32.totalorder %s16, 1
    %p118 = por %p116, %p117
    %p119 = scmp.ne.s32.totalorder %s110, %s111
    %p120 = scmp.eq.s32.totalorder %s16, 0
    %p121 = por %p119, %p120
    %p122 = scmp.ne.s32.totalorder %s110, %s111
    %p123 = scmp.eq.s32.totalorder %s17, 1
    %p124 = por %p122, %p123
    %p126 = scmp.ne.s32.totalorder %s111, %s125
    %p127 = scmp.eq.s32.totalorder %s17, 0
    %p128 = por %p126, %p127
    %s129 = ssub.s32 %s11, %s18
    %p130 = scmp.eq.s32.totalorder %s129, 0
    %s132 = sadd.s32 %s131, 1
    %s133 = scalar_select %p130, %s131, %s132
    %p136 = pneg %p130
    %p137 = scmp.eq.s32.totalorder %s11, 1
    %p138 = por %p136, %p137
    %p139 = scmp.ne.s32.totalorder %s131, %s134
    %p140 = scmp.eq.s32.totalorder %s11, 0
    %p141 = por %p139, %p140
    %p142 = scmp.ne.s32.totalorder %s131, %s134
    %p143 = scmp.eq.s32.totalorder %s16, 1
    %p144 = por %p142, %p143
    %p145 = scmp.ne.s32.totalorder %s134, %s135
    %p146 = scmp.eq.s32.totalorder %s16, 0
    %p147 = por %p145, %p146
    %p148 = scmp.ne.s32.totalorder %s134, %s135
    %p149 = scmp.eq.s32.totalorder %s17, 1
    %p150 = por %p148, %p149
    %p152 = scmp.ne.s32.totalorder %s135, %s151
    %p153 = scmp.eq.s32.totalorder %s17, 0
    %p154 = por %p152, %p153
    %p155 = scmp.le.s32.totalorder 1, %s11
    %p156 = scmp.lt.s32.totalorder %s11, 3
    %p157 = pnand %p155, %p156
    %p158 = pneg %p157
    // Predicated region
    $region9: #{basic_block_forward.9} parent=5 // pred_check
      _
    $region10: #{basic_block_forward.9} parent=5 // pred_check_branch
      %160 = sbr.rel (%p157) target = $region12
    $region11: #{basic_block_forward.9} parent=5 // pred_region
      %s161 = ssub.s32 %s11, 1
      // Predicated region
      $region13: #{basic_block_forward.9} parent=11 // pred_check
        %p162 = pneg %p58
      $region14: #{basic_block_forward.9} parent=11 // pred_check_branch
        %164 = sbr.rel (%p162) target = $region16
      $region15: #{basic_block_forward.9} parent=11 // pred_region
        _
      $region16: #{basic_block_forward.9} parent=11 // pred_fallthru
        _
      // Predicated region
      $region17: #{basic_block_forward.9} parent=11 // pred_check
        %p165 = pneg %p79
      $region18: #{basic_block_forward.9} parent=11 // pred_check_branch
        %167 = sbr.rel (%p165) target = $region20
      $region19: #{basic_block_forward.9} parent=11 // pred_region
        _
      $region20: #{basic_block_forward.9} parent=11 // pred_fallthru
        _
      // Predicated region
      $region21: #{basic_block_forward.9} parent=11 // pred_check
        %p168 = pneg %p100
      $region22: #{basic_block_forward.9} parent=11 // pred_check_branch
        %170 = sbr.rel (%p168) target = $region24
      $region23: #{basic_block_forward.9} parent=11 // pred_region
        _
      $region24: #{basic_block_forward.9} parent=11 // pred_fallthru
        _
      // Predicated region
      $region25: #{basic_block_forward.9} parent=11 // pred_check
        %p171 = pneg %p121
      $region26: #{basic_block_forward.9} parent=11 // pred_check_branch
        %173 = sbr.rel (%p171) target = $region28
      $region27: #{basic_block_forward.9} parent=11 // pred_region
        _
      $region28: #{basic_block_forward.9} parent=11 // pred_fallthru
        _
    $region12: #{basic_block_forward.9} parent=5 // pred_fallthru
      _
    %p174 = scmp.lt.s32.totalorder %s11, 2
    // Predicated region
    $region29: #{basic_block_forward.9} parent=5 // pred_check
      %p175 = pneg %p174
    $region30: #{basic_block_forward.9} parent=5 // pred_check_branch
      %177 = sbr.rel (%p175) target = $region32
    $region31: #{basic_block_forward.9} parent=5 // pred_region
      // Predicated region
      $region33: #{basic_block_forward.9} parent=31 // pred_check
        %p178 = pneg %p31
      $region34: #{basic_block_forward.9} parent=31 // pred_check_branch
        %180 = sbr.rel (%p178) target = $region36
      $region35: #{basic_block_forward.9} parent=31 // pred_region
        %p181 = scmp.lt.s32.totalorder %s11, 1
        %s182 = scalar_select %p181, %s11, 1
        %s183 = smul.addr %s182, 8
        %s184 = smul.addr %s183, 4
        %s185 = scalar_lea.vmem %s0, %s184
      $region36: #{basic_block_forward.9} parent=31 // pred_fallthru
        _
    $region32: #{basic_block_forward.9} parent=5 // pred_fallthru
      _
    %p186 = scmp.le.s32.totalorder 1, %s11
    %p187 = scmp.lt.s32.totalorder %s11, 3
    %p188 = pnand %p186, %p187
    %p189 = pneg %p188
    // Predicated region
    $region37: #{basic_block_forward.9} parent=5 // pred_check
      _
    $region38: #{basic_block_forward.9} parent=5 // pred_check_branch
      %191 = sbr.rel (%p188) target = $region40
    $region39: #{basic_block_forward.9} parent=5 // pred_region
      %s192 = ssub.s32 %s11, 1
      %p193 = scmp.lt.s32.totalorder %s16, 1
      %s194 = scalar_select %p193, %s16, 1
      %s195 = smul.addr %s194, 8
      %s196 = smul.addr %s195, 4
      %s197 = scalar_lea.vmem %s0, %s196
      %p198 = pneg %p37
      %p199 = pneg %p34
      %p200 = pneg %p58
      %p201 = pneg %p55
      %p202 = pneg %p79
      %p203 = pneg %p76
      %p204 = pneg %p100
      %p205 = pneg %p97
      %p206 = pneg %p121
      %p207 = pneg %p118
      %p208 = pneg %p147
      %p209 = pneg %p144
      %p210 = scmp.lt.s32.totalorder %s16, 1
      %s211 = scalar_select %p210, %s16, 1
      %s212 = smul.addr %s211, 8
      %s213 = smul.addr %s212, 4
      %s214 = scalar_lea.vmem %s5, %s213
      %p215 = scmp.lt.s32.totalorder %s16, 1
      %s216 = scalar_select %p215, %s16, 1
      %s217 = smul.addr %s216, 8
      %s218 = smul.addr %s217, 4
      %s219 = scalar_lea.vmem %s0, %s218
      %p220 = scmp.lt.s32.totalorder %s16, 1
      %s221 = scalar_select %p220, %s16, 1
      %s222 = smul.addr %s221, 8
      %s223 = smul.addr %s222, 4
      %s224 = scalar_lea.vmem %s5, %s223
      %v225 = vld [vmem:[%s1] sm:$0x1]
      %v226 = vld [vmem:[%s1 + $0x1] sm:$0x1]
      %v227 = vld [vmem:[%s2] sm:$0x1]
      %v228 = vld [vmem:[%s2 + $0x1] sm:$0x1]
      %v229 = vld [vmem:[%s3] sm:$0x1]
      %v230 = vld [vmem:[%s4] sm:$0x1]
      %vm231 = vcmask 1040384
      %v232 = vsel %vm231, %v225, 0.0
      %v233 = vsel %vm231, %v226, 0.0
      %v234 = vadd.f32 %v232, %v233
      %v235 = vrcp.pop 128.0
      %v236 = vmul.f32 %v234, %v235
      %v237 = vsel %vm231, %v227, 0.0
      %v238 = vsel %vm231, %v228, 0.0
      %v239 = vadd.f32 %v237, %v238
      %v240 = vmul.f32 %v239, %v235
      %v241 = vmul.f32 %v236, %v236
      %v242 = vsub.f32 %v240, %v241
      %v243 = vmax.f32 %v242, 0.0
      %v244 = vadd.f32 %v243, 1e-05
      %v245 = vrsqrt.pop %v244
      %v246 = vmul.f32 %v229, %v245
      %v247 = vmul.f32 %v236, %v246
      %v248 = vsub.f32 %v230, %v247
      %v249 = vld [vmem:[%s219] sm:$0xf]
      %v250 = vld [vmem:[%s219 + $0x4] sm:$0xf]
      %v251 = vld [vmem:[%s219 + $0x8] sm:$0xf]
      %v252 = vld [vmem:[%s219 + $0xc] sm:$0xf]
      %v253 = vld [vmem:[%s219 + $0x10] sm:$0xf]
      %v254 = vld [vmem:[%s219 + $0x14] sm:$0xf]
      %v255 = vld [vmem:[%s219 + $0x18] sm:$0xf]
      %v256 = vld [vmem:[%s219 + $0x1c] sm:$0xf]
      %v257 = vunpack.c.l.bf16 %v249
      %v258 = vunpack.c.l.bf16 %v250
      %v259 = vunpack.c.l.bf16 %v251
      %v260 = vunpack.c.l.bf16 %v252
      %v261 = vunpack.c.l.bf16 %v253
      %v262 = vunpack.c.l.bf16 %v254
      %v263 = vunpack.c.l.bf16 %v255
      %v264 = vunpack.c.l.bf16 %v256
      %v266 = vlaneseq
      %v267 = vshrl.u32 %v266, 7
      %v268 = vsub.s32 0, %v267
      %v269 = vrot.slane %v246, %v268
      %v271 = vmul.f32 %v257, %v269
      %v272 = vmul.f32 %v258, %v269
      %v273 = vmul.f32 %v259, %v269
      %v274 = vmul.f32 %v260, %v269
      %v275 = vmul.f32 %v261, %v269
      %v276 = vmul.f32 %v262, %v269
      %v277 = vmul.f32 %v263, %v269
      %v278 = vmul.f32 %v264, %v269
      %v280 = vlaneseq
      %v281 = vshrl.u32 %v280, 7
      %v282 = vsub.s32 0, %v281
      %v283 = vrot.slane %v248, %v282
      %v285 = vadd.f32 %v271, %v283
      %v286 = vadd.f32 %v272, %v283
      %v287 = vadd.f32 %v273, %v283
      %v288 = vadd.f32 %v274, %v283
      %v289 = vadd.f32 %v275, %v283
      %v290 = vadd.f32 %v276, %v283
      %v291 = vadd.f32 %v277, %v283
      %v292 = vadd.f32 %v278, %v283
      %v293 = vpack.c.bf16 %v286, %v285
      %v294 = vpack.c.bf16 %v288, %v287
      %v295 = vpack.c.bf16 %v290, %v289
      %v296 = vpack.c.bf16 %v292, %v291
      %v301 = vunpack.c.l.b16 %v293
      %v302 = vunpack.c.h.b16 %v293
      %v303 = vunpack.c.l.b16 %v294
      %v304 = vunpack.c.h.b16 %v294
      %v305 = vunpack.c.l.b16 %v295
      %v306 = vunpack.c.h.b16 %v295
      %v307 = vunpack.c.l.b16 %v296
      %v308 = vunpack.c.h.b16 %v296
      %v309 = vpack.c.b16 %v301, %v301
      %v310 = vpack.c.b16 %v302, %v302
      %v311 = vpack.c.b16 %v303, %v303
      %v312 = vpack.c.b16 %v304, %v304
      %v313 = vpack.c.b16 %v305, %v305
      %v314 = vpack.c.b16 %v306, %v306
      %v315 = vpack.c.b16 %v307, %v307
      %v316 = vpack.c.b16 %v308, %v308
      %325 = vst [vmem:[%s224] sm:$0xf] %v309
      %326 = vst [vmem:[%s224 + $0x4] sm:$0xf] %v310
      %327 = vst [vmem:[%s224 + $0x8] sm:$0xf] %v311
      %328 = vst [vmem:[%s224 + $0xc] sm:$0xf] %v312
      %329 = vst [vmem:[%s224 + $0x10] sm:$0xf] %v313
      %330 = vst [vmem:[%s224 + $0x14] sm:$0xf] %v314
      %331 = vst [vmem:[%s224 + $0x18] sm:$0xf] %v315
      %332 = vst [vmem:[%s224 + $0x1c] sm:$0xf] %v316
      %p333 = scmp.lt.s32.totalorder %s16, 1
      %s334 = scalar_select %p333, %s16, 1
      %s335 = smul.addr %s334, 8
      %s336 = smul.addr %s335, 4
      %s337 = scalar_lea.vmem %s5, %s336
      // Predicated region
      $region41: #{basic_block_forward.9} parent=39 // pred_check
        %p338 = pneg %p144
      $region42: #{basic_block_forward.9} parent=39 // pred_check_branch
        %340 = sbr.rel (%p338) target = $region44
      $region43: #{basic_block_forward.9} parent=39 // pred_region
        _
      $region44: #{basic_block_forward.9} parent=39 // pred_fallthru
        _
    $region40: #{basic_block_forward.9} parent=5 // pred_fallthru
      _
    %p341 = scmp.le.s32.totalorder 2, %s11
    // Predicated region
    $region45: #{basic_block_forward.9} parent=5 // pred_check
      %p342 = pneg %p341
    $region46: #{basic_block_forward.9} parent=5 // pred_check_branch
      %344 = sbr.rel (%p342) target = $region48
    $region47: #{basic_block_forward.9} parent=5 // pred_region
      %s345 = ssub.s32 %s11, 2
      // Predicated region
      $region49: #{basic_block_forward.9} parent=47 // pred_check
        %p346 = pneg %p150
      $region50: #{basic_block_forward.9} parent=47 // pred_check_branch
        %348 = sbr.rel (%p346) target = $region52
      $region51: #{basic_block_forward.9} parent=47 // pred_region
        %p349 = scmp.lt.s32.totalorder %s17, 1
        %s350 = scalar_select %p349, %s17, 1
        %s351 = smul.addr %s350, 8
        %s352 = smul.addr %s351, 4
        %s353 = scalar_lea.vmem %s5, %s352
      $region52: #{basic_block_forward.9} parent=47 // pred_fallthru
        _
    $region48: #{basic_block_forward.9} parent=5 // pred_fallthru
      _
  $region6: #{basic_block_forward.9} parent=0 // loop_footer
    %s15 = sadd.s32 1, %s11
  $region7: #{basic_block_forward.9} parent=0 // loop_footer_branch
    %10 = sbr.rel target = $region3
  $region8: #{basic_block_forward.9} parent=0 // loop_exit
    _

// kernel: basic_block_forward.7
$region0: #{basic_block_forward.7}
  #allocation0 [shape = 'u32[]', space=smem, size = 0x4, offset = 0x4, fixed_abs, tag = 'smem constant byte address 0x4 - core index']
  #allocation1 [shape = 'u32[144,128]{1,0:T(1,128)}', space=vmem, size = 0x12000, scoped, tag = 'internal scratch']
  %s0 = inlined_call_operand.vmem [shape: bf16[2,64,128], index: 0, kind: input, shape index: {}]
  %s1 = inlined_call_operand.vmem [shape: f32[2,1,128], index: 1, kind: input, shape index: {}]
  %s2 = inlined_call_operand.vmem [shape: f32[2,1,128], index: 2, kind: input, shape index: {}]
  %s3 = inlined_call_operand.vmem [shape: f32[1,128], index: 3, kind: input, shape index: {}]
  %s4 = inlined_call_operand.vmem [shape: f32[1,128], index: 4, kind: input, shape index: {}]
  %s5 = inlined_call_operand.vmem [shape: bf16[2,64,128], index: 5, kind: output, shape index: {}]
  %s6 = sld [smem:[#allocation0]]
  $region53: #{basic_block_forward.7} parent=0
    _
  %s8 = ssub.s32 1, %s6
  %s9 = scalar_select 0, %s8, %s6
  loop: start=0, step=1, limit=4
  $region2: #{basic_block_forward.7} parent=0 // loop_pre_header
    _
  $region3: #{basic_block_forward.7} parent=0 // loop_header
    %s11 = sphi 0, %s15
    %p12 = scmp.ge.s32.totalorder %s11, 4
    %s21 = sphi 0, %s23
    %s24 = sphi 0, %s21
    %s25 = sphi 0, %s24
    %s41 = sphi 0, %s25
    %s45 = sphi 0, %s45
    %s47 = sphi 0, %s45
    %s48 = sphi 0, %s47
    %s62 = sphi 0, %s48
    %s66 = sphi 0, %s66
    %s68 = sphi 0, %s66
    %s69 = sphi 0, %s68
    %s83 = sphi 0, %s69
    %s87 = sphi 0, %s87
    %s89 = sphi 0, %s87
    %s90 = sphi 0, %s89
    %s104 = sphi 0, %s90
    %s108 = sphi 0, %s108
    %s110 = sphi 0, %s108
    %s111 = sphi 0, %s110
    %s125 = sphi 0, %s111
    %s131 = sphi 0, %s133
    %s134 = sphi 0, %s131
    %s135 = sphi 0, %s134
    %s151 = sphi 0, %s135
  $region4: #{basic_block_forward.7} parent=0 // loop_header_branch
    %14 = sbr.rel (%p12) target = $region8
  $region5: #{basic_block_forward.7} parent=0 // loop_body
    %s16 = ssub.s32 %s11, 1
    %s17 = ssub.s32 %s11, 2
    %s18 = sadd.s32 %s11, 1
    %s19 = ssub.s32 %s11, %s18
    %p20 = scmp.eq.s32.totalorder %s19, 0
    %s22 = sadd.s32 %s21, 1
    %s23 = scalar_select %p20, %s21, %s22
    %p26 = pneg %p20
    %p27 = scmp.eq.s32.totalorder %s11, 1
    %p28 = por %p26, %p27
    %p29 = scmp.ne.s32.totalorder %s21, %s24
    %p30 = scmp.eq.s32.totalorder %s11, 0
    %p31 = por %p29, %p30
    %p32 = scmp.ne.s32.totalorder %s21, %s24
    %p33 = scmp.eq.s32.totalorder %s16, 1
    %p34 = por %p32, %p33
    %p35 = scmp.ne.s32.totalorder %s24, %s25
    %p36 = scmp.eq.s32.totalorder %s16, 0
    %p37 = por %p35, %p36
    %p38 = scmp.ne.s32.totalorder %s24, %s25
    %p39 = scmp.eq.s32.totalorder %s17, 1
    %p40 = por %p38, %p39
    %p42 = scmp.ne.s32.totalorder %s25, %s41
    %p43 = scmp.eq.s32.totalorder %s17, 0
    %p44 = por %p42, %p43
    %s46 = sadd.s32 %s45, 1
    %p49 = scmp.eq.s32.totalorder %s11, 1
    %p50 = scmp.ne.s32.totalorder %s45, %s47
    %p51 = scmp.eq.s32.totalorder %s11, 0
    %p52 = por %p50, %p51
    %p53 = scmp.ne.s32.totalorder %s45, %s47
    %p54 = scmp.eq.s32.totalorder %s16, 1
    %p55 = por %p53, %p54
    %p56 = scmp.ne.s32.totalorder %s47, %s48
    %p57 = scmp.eq.s32.totalorder %s16, 0
    %p58 = por %p56, %p57
    %p59 = scmp.ne.s32.totalorder %s47, %s48
    %p60 = scmp.eq.s32.totalorder %s17, 1
    %p61 = por %p59, %p60
    %p63 = scmp.ne.s32.totalorder %s48, %s62
    %p64 = scmp.eq.s32.totalorder %s17, 0
    %p65 = por %p63, %p64
    %s67 = sadd.s32 %s66, 1
    %p70 = scmp.eq.s32.totalorder %s11, 1
    %p71 = scmp.ne.s32.totalorder %s66, %s68
    %p72 = scmp.eq.s32.totalorder %s11, 0
    %p73 = por %p71, %p72
    %p74 = scmp.ne.s32.totalorder %s66, %s68
    %p75 = scmp.eq.s32.totalorder %s16, 1
    %p76 = por %p74, %p75
    %p77 = scmp.ne.s32.totalorder %s68, %s69
    %p78 = scmp.eq.s32.totalorder %s16, 0
    %p79 = por %p77, %p78
    %p80 = scmp.ne.s32.totalorder %s68, %s69
    %p81 = scmp.eq.s32.totalorder %s17, 1
    %p82 = por %p80, %p81
    %p84 = scmp.ne.s32.totalorder %s69, %s83
    %p85 = scmp.eq.s32.totalorder %s17, 0
    %p86 = por %p84, %p85
    %s88 = sadd.s32 %s87, 1
    %p91 = scmp.eq.s32.totalorder %s11, 1
    %p92 = scmp.ne.s32.totalorder %s87, %s89
    %p93 = scmp.eq.s32.totalorder %s11, 0
    %p94 = por %p92, %p93
    %p95 = scmp.ne.s32.totalorder %s87, %s89
    %p96 = scmp.eq.s32.totalorder %s16, 1
    %p97 = por %p95, %p96
    %p98 = scmp.ne.s32.totalorder %s89, %s90
    %p99 = scmp.eq.s32.totalorder %s16, 0
    %p100 = por %p98, %p99
    %p101 = scmp.ne.s32.totalorder %s89, %s90
    %p102 = scmp.eq.s32.totalorder %s17, 1
    %p103 = por %p101, %p102
    %p105 = scmp.ne.s32.totalorder %s90, %s104
    %p106 = scmp.eq.s32.totalorder %s17, 0
    %p107 = por %p105, %p106
    %s109 = sadd.s32 %s108, 1
    %p112 = scmp.eq.s32.totalorder %s11, 1
    %p113 = scmp.ne.s32.totalorder %s108, %s110
    %p114 = scmp.eq.s32.totalorder %s11, 0
    %p115 = por %p113, %p114
    %p116 = scmp.ne.s32.totalorder %s108, %s110
    %p117 = scmp.eq.s32.totalorder %s16, 1
    %p118 = por %p116, %p117
    %p119 = scmp.ne.s32.totalorder %s110, %s111
    %p120 = scmp.eq.s32.totalorder %s16, 0
    %p121 = por %p119, %p120
    %p122 = scmp.ne.s32.totalorder %s110, %s111
    %p123 = scmp.eq.s32.totalorder %s17, 1
    %p124 = por %p122, %p123
    %p126 = scmp.ne.s32.totalorder %s111, %s125
    %p127 = scmp.eq.s32.totalorder %s17, 0
    %p128 = por %p126, %p127
    %s129 = ssub.s32 %s11, %s18
    %p130 = scmp.eq.s32.totalorder %s129, 0
    %s132 = sadd.s32 %s131, 1
    %s133 = scalar_select %p130, %s131, %s132
    %p136 = pneg %p130
    %p137 = scmp.eq.s32.totalorder %s11, 1
    %p138 = por %p136, %p137
    %p139 = scmp.ne.s32.totalorder %s131, %s134
    %p140 = scmp.eq.s32.totalorder %s11, 0
    %p141 = por %p139, %p140
    %p142 = scmp.ne.s32.totalorder %s131, %s134
    %p143 = scmp.eq.s32.totalorder %s16, 1
    %p144 = por %p142, %p143
    %p145 = scmp.ne.s32.totalorder %s134, %s135
    %p146 = scmp.eq.s32.totalorder %s16, 0
    %p147 = por %p145, %p146
    %p148 = scmp.ne.s32.totalorder %s134, %s135
    %p149 = scmp.eq.s32.totalorder %s17, 1
    %p150 = por %p148, %p149
    %p152 = scmp.ne.s32.totalorder %s135, %s151
    %p153 = scmp.eq.s32.totalorder %s17, 0
    %p154 = por %p152, %p153
    %p155 = scmp.le.s32.totalorder 1, %s11
    %p156 = scmp.lt.s32.totalorder %s11, 3
    %p157 = pnand %p155, %p156
    %p158 = pneg %p157
    // Predicated region
    $region9: #{basic_block_forward.7} parent=5 // pred_check
      _
    $region10: #{basic_block_forward.7} parent=5 // pred_check_branch
      %160 = sbr.rel (%p157) target = $region12
    $region11: #{basic_block_forward.7} parent=5 // pred_region
      %s161 = ssub.s32 %s11, 1
      // Predicated region
      $region13: #{basic_block_forward.7} parent=11 // pred_check
        %p162 = pneg %p58
      $region14: #{basic_block_forward.7} parent=11 // pred_check_branch
        %164 = sbr.rel (%p162) target = $region16
      $region15: #{basic_block_forward.7} parent=11 // pred_region
        _
      $region16: #{basic_block_forward.7} parent=11 // pred_fallthru
        _
      // Predicated region
      $region17: #{basic_block_forward.7} parent=11 // pred_check
        %p165 = pneg %p79
      $region18: #{basic_block_forward.7} parent=11 // pred_check_branch
        %167 = sbr.rel (%p165) target = $region20
      $region19: #{basic_block_forward.7} parent=11 // pred_region
        _
      $region20: #{basic_block_forward.7} parent=11 // pred_fallthru
        _
      // Predicated region
      $region21: #{basic_block_forward.7} parent=11 // pred_check
        %p168 = pneg %p100
      $region22: #{basic_block_forward.7} parent=11 // pred_check_branch
        %170 = sbr.rel (%p168) target = $region24
      $region23: #{basic_block_forward.7} parent=11 // pred_region
        _
      $region24: #{basic_block_forward.7} parent=11 // pred_fallthru
        _
      // Predicated region
      $region25: #{basic_block_forward.7} parent=11 // pred_check
        %p171 = pneg %p121
      $region26: #{basic_block_forward.7} parent=11 // pred_check_branch
        %173 = sbr.rel (%p171) target = $region28
      $region27: #{basic_block_forward.7} parent=11 // pred_region
        _
      $region28: #{basic_block_forward.7} parent=11 // pred_fallthru
        _
    $region12: #{basic_block_forward.7} parent=5 // pred_fallthru
      _
    %p174 = scmp.lt.s32.totalorder %s11, 2
    // Predicated region
    $region29: #{basic_block_forward.7} parent=5 // pred_check
      %p175 = pneg %p174
    $region30: #{basic_block_forward.7} parent=5 // pred_check_branch
      %177 = sbr.rel (%p175) target = $region32
    $region31: #{basic_block_forward.7} parent=5 // pred_region
      // Predicated region
      $region33: #{basic_block_forward.7} parent=31 // pred_check
        %p178 = pneg %p31
      $region34: #{basic_block_forward.7} parent=31 // pred_check_branch
        %180 = sbr.rel (%p178) target = $region36
      $region35: #{basic_block_forward.7} parent=31 // pred_region
        %p181 = scmp.lt.s32.totalorder %s11, 1
        %s182 = scalar_select %p181, %s11, 1
        %s183 = smul.addr %s182, 8
        %s184 = smul.addr %s183, 4
        %s185 = scalar_lea.vmem %s0, %s184
      $region36: #{basic_block_forward.7} parent=31 // pred_fallthru
        _
    $region32: #{basic_block_forward.7} parent=5 // pred_fallthru
      _
    %p186 = scmp.le.s32.totalorder 1, %s11
    %p187 = scmp.lt.s32.totalorder %s11, 3
    %p188 = pnand %p186, %p187
    %p189 = pneg %p188
    // Predicated region
    $region37: #{basic_block_forward.7} parent=5 // pred_check
      _
    $region38: #{basic_block_forward.7} parent=5 // pred_check_branch
      %191 = sbr.rel (%p188) target = $region40
    $region39: #{basic_block_forward.7} parent=5 // pred_region
      %s192 = ssub.s32 %s11, 1
      %p193 = scmp.lt.s32.totalorder %s16, 1
      %s194 = scalar_select %p193, %s16, 1
      %s195 = smul.addr %s194, 8
      %s196 = smul.addr %s195, 4
      %s197 = scalar_lea.vmem %s0, %s196
      %p198 = pneg %p37
      %p199 = pneg %p34
      %p200 = pneg %p58
      %p201 = pneg %p55
      %p202 = pneg %p79
      %p203 = pneg %p76
      %p204 = pneg %p100
      %p205 = pneg %p97
      %p206 = pneg %p121
      %p207 = pneg %p118
      %p208 = pneg %p147
      %p209 = pneg %p144
      %p210 = scmp.lt.s32.totalorder %s16, 1
      %s211 = scalar_select %p210, %s16, 1
      %s212 = smul.addr %s211, 8
      %s213 = smul.addr %s212, 4
      %s214 = scalar_lea.vmem %s5, %s213
      %p215 = scmp.lt.s32.totalorder %s16, 1
      %s216 = scalar_select %p215, %s16, 1
      %s217 = smul.addr %s216, 8
      %s218 = smul.addr %s217, 4
      %s219 = scalar_lea.vmem %s0, %s218
      %p220 = scmp.lt.s32.totalorder %s16, 1
      %s221 = scalar_select %p220, %s16, 1
      %s222 = smul.addr %s221, 8
      %s223 = smul.addr %s222, 4
      %s224 = scalar_lea.vmem %s5, %s223
      %v225 = vld [vmem:[%s1] sm:$0x1]
      %v226 = vld [vmem:[%s1 + $0x1] sm:$0x1]
      %v227 = vld [vmem:[%s2] sm:$0x1]
      %v228 = vld [vmem:[%s2 + $0x1] sm:$0x1]
      %v229 = vld [vmem:[%s3] sm:$0x1]
      %v230 = vld [vmem:[%s4] sm:$0x1]
      %vm231 = vcmask 1040384
      %v232 = vsel %vm231, %v225, 0.0
      %v233 = vsel %vm231, %v226, 0.0
      %v234 = vadd.f32 %v232, %v233
      %v235 = vrcp.pop 128.0
      %v236 = vmul.f32 %v234, %v235
      %v237 = vsel %vm231, %v227, 0.0
      %v238 = vsel %vm231, %v228, 0.0
      %v239 = vadd.f32 %v237, %v238
      %v240 = vmul.f32 %v239, %v235
      %v241 = vmul.f32 %v236, %v236
      %v242 = vsub.f32 %v240, %v241
      %v243 = vmax.f32 %v242, 0.0
      %v244 = vadd.f32 %v243, 1e-05
      %v245 = vrsqrt.pop %v244
      %v246 = vmul.f32 %v229, %v245
      %v247 = vmul.f32 %v236, %v246
      %v248 = vsub.f32 %v230, %v247
      %v249 = vld [vmem:[%s219] sm:$0xf]
      %v250 = vld [vmem:[%s219 + $0x4] sm:$0xf]
      %v251 = vld [vmem:[%s219 + $0x8] sm:$0xf]
      %v252 = vld [vmem:[%s219 + $0xc] sm:$0xf]
      %v253 = vld [vmem:[%s219 + $0x10] sm:$0xf]
      %v254 = vld [vmem:[%s219 + $0x14] sm:$0xf]
      %v255 = vld [vmem:[%s219 + $0x18] sm:$0xf]
      %v256 = vld [vmem:[%s219 + $0x1c] sm:$0xf]
      %v257 = vunpack.c.l.bf16 %v249
      %v258 = vunpack.c.l.bf16 %v250
      %v259 = vunpack.c.l.bf16 %v251
      %v260 = vunpack.c.l.bf16 %v252
      %v261 = vunpack.c.l.bf16 %v253
      %v262 = vunpack.c.l.bf16 %v254
      %v263 = vunpack.c.l.bf16 %v255
      %v264 = vunpack.c.l.bf16 %v256
      %v266 = vlaneseq
      %v267 = vshrl.u32 %v266, 7
      %v268 = vsub.s32 0, %v267
      %v269 = vrot.slane %v246, %v268
      %v271 = vmul.f32 %v257, %v269
      %v272 = vmul.f32 %v258, %v269
      %v273 = vmul.f32 %v259, %v269
      %v274 = vmul.f32 %v260, %v269
      %v275 = vmul.f32 %v261, %v269
      %v276 = vmul.f32 %v262, %v269
      %v277 = vmul.f32 %v263, %v269
      %v278 = vmul.f32 %v264, %v269
      %v280 = vlaneseq
      %v281 = vshrl.u32 %v280, 7
      %v282 = vsub.s32 0, %v281
      %v283 = vrot.slane %v248, %v282
      %v285 = vadd.f32 %v271, %v283
      %v286 = vadd.f32 %v272, %v283
      %v287 = vadd.f32 %v273, %v283
      %v288 = vadd.f32 %v274, %v283
      %v289 = vadd.f32 %v275, %v283
      %v290 = vadd.f32 %v276, %v283
      %v291 = vadd.f32 %v277, %v283
      %v292 = vadd.f32 %v278, %v283
      %v293 = vmax.f32 %v285, 0.0
      %v294 = vmax.f32 %v286, 0.0
      %v295 = vmax.f32 %v287, 0.0
      %v296 = vmax.f32 %v288, 0.0
      %v297 = vmax.f32 %v289, 0.0
      %v298 = vmax.f32 %v290, 0.0
      %v299 = vmax.f32 %v291, 0.0
      %v300 = vmax.f32 %v292, 0.0
      %v301 = vpack.c.bf16 %v294, %v293
      %v302 = vpack.c.bf16 %v296, %v295
      %v303 = vpack.c.bf16 %v298, %v297
      %v304 = vpack.c.bf16 %v300, %v299
      %v309 = vunpack.c.l.b16 %v301
      %v310 = vunpack.c.h.b16 %v301
      %v311 = vunpack.c.l.b16 %v302
      %v312 = vunpack.c.h.b16 %v302
      %v313 = vunpack.c.l.b16 %v303
      %v314 = vunpack.c.h.b16 %v303
      %v315 = vunpack.c.l.b16 %v304
      %v316 = vunpack.c.h.b16 %v304
      %v317 = vpack.c.b16 %v309, %v309
      %v318 = vpack.c.b16 %v310, %v310
      %v319 = vpack.c.b16 %v311, %v311
      %v320 = vpack.c.b16 %v312, %v312
      %v321 = vpack.c.b16 %v313, %v313
      %v322 = vpack.c.b16 %v314, %v314
      %v323 = vpack.c.b16 %v315, %v315
      %v324 = vpack.c.b16 %v316, %v316
      %333 = vst [vmem:[%s224] sm:$0xf] %v317
      %334 = vst [vmem:[%s224 + $0x4] sm:$0xf] %v318
      %335 = vst [vmem:[%s224 + $0x8] sm:$0xf] %v319
      %336 = vst [vmem:[%s224 + $0xc] sm:$0xf] %v320
      %337 = vst [vmem:[%s224 + $0x10] sm:$0xf] %v321
      %338 = vst [vmem:[%s224 + $0x14] sm:$0xf] %v322
      %339 = vst [vmem:[%s224 + $0x18] sm:$0xf] %v323
      %340 = vst [vmem:[%s224 + $0x1c] sm:$0xf] %v324
      %p341 = scmp.lt.s32.totalorder %s16, 1
      %s342 = scalar_select %p341, %s16, 1
      %s343 = smul.addr %s342, 8
      %s344 = smul.addr %s343, 4
      %s345 = scalar_lea.vmem %s5, %s344
      // Predicated region
      $region41: #{basic_block_forward.7} parent=39 // pred_check
        %p346 = pneg %p144
      $region42: #{basic_block_forward.7} parent=39 // pred_check_branch
        %348 = sbr.rel (%p346) target = $region44
      $region43: #{basic_block_forward.7} parent=39 // pred_region
        _
      $region44: #{basic_block_forward.7} parent=39 // pred_fallthru
        _
    $region40: #{basic_block_forward.7} parent=5 // pred_fallthru
      _
    %p349 = scmp.le.s32.totalorder 2, %s11
    // Predicated region
    $region45: #{basic_block_forward.7} parent=5 // pred_check
      %p350 = pneg %p349
    $region46: #{basic_block_forward.7} parent=5 // pred_check_branch
      %352 = sbr.rel (%p350) target = $region48
    $region47: #{basic_block_forward.7} parent=5 // pred_region
      %s353 = ssub.s32 %s11, 2
      // Predicated region
      $region49: #{basic_block_forward.7} parent=47 // pred_check
        %p354 = pneg %p150
      $region50: #{basic_block_forward.7} parent=47 // pred_check_branch
        %356 = sbr.rel (%p354) target = $region52
      $region51: #{basic_block_forward.7} parent=47 // pred_region
        %p357 = scmp.lt.s32.totalorder %s17, 1
        %s358 = scalar_select %p357, %s17, 1
        %s359 = smul.addr %s358, 8
        %s360 = smul.addr %s359, 4
        %s361 = scalar_lea.vmem %s5, %s360
      $region52: #{basic_block_forward.7} parent=47 // pred_fallthru
        _
    $region48: #{basic_block_forward.7} parent=5 // pred_fallthru
      _
  $region6: #{basic_block_forward.7} parent=0 // loop_footer
    %s15 = sadd.s32 1, %s11
  $region7: #{basic_block_forward.7} parent=0 // loop_footer_branch
    %10 = sbr.rel target = $region3
  $region8: #{basic_block_forward.7} parent=0 // loop_exit
    _

// kernel: basic_block_forward.6
$region0: #{basic_block_forward.6}
  #allocation0 [shape = 'u32[]', space=smem, size = 0x4, offset = 0x4, fixed_abs, tag = 'smem constant byte address 0x4 - core index']
  #allocation1 [shape = 'u32[144,128]{1,0:T(1,128)}', space=vmem, size = 0x12000, scoped, tag = 'internal scratch']
  %s0 = inlined_call_operand.vmem [shape: bf16[2,9,2,9,8], index: 0, kind: input, shape index: {}]
  %s1 = inlined_call_operand.vmem [shape: bf16[9,4,128], index: 1, kind: input, shape index: {}]
  %s2 = inlined_call_operand.vmem [shape: bf16[2,64,128], index: 2, kind: output, shape index: {0}]
  %s3 = inlined_call_operand.vmem [shape: f32[2,1,128], index: 3, kind: output, shape index: {1}]
  %s4 = inlined_call_operand.vmem [shape: f32[2,1,128], index: 4, kind: output, shape index: {2}]
  %5 = xla_tuple %s2, %s3, %s4
  %s6 = sld [smem:[#allocation0]]
  $region57: #{basic_block_forward.6} parent=0
    _
  %s8 = ssub.s32 1, %s6
  %s9 = scalar_select 0, %s8, %s6
  loop: start=0, step=1, limit=4
  $region2: #{basic_block_forward.6} parent=0 // loop_pre_header
    _
  $region3: #{basic_block_forward.6} parent=0 // loop_header
    %s11 = sphi 0, %s15
    %p12 = scmp.ge.s32.totalorder %s11, 4
    %s21 = sphi 0, %s23
    %s24 = sphi 0, %s21
    %s25 = sphi 0, %s24
    %s41 = sphi 0, %s25
    %s45 = sphi 0, %s45
    %s47 = sphi 0, %s45
    %s48 = sphi 0, %s47
    %s62 = sphi 0, %s48
    %s68 = sphi 0, %s70
    %s71 = sphi 0, %s68
    %s72 = sphi 0, %s71
    %s88 = sphi 0, %s72
    %s94 = sphi 0, %s96
    %s97 = sphi 0, %s94
    %s98 = sphi 0, %s97
    %s114 = sphi 0, %s98
    %s120 = sphi 0, %s122
    %s123 = sphi 0, %s120
    %s124 = sphi 0, %s123
    %s140 = sphi 0, %s124
  $region4: #{basic_block_forward.6} parent=0 // loop_header_branch
    %14 = sbr.rel (%p12) target = $region8
  $region5: #{basic_block_forward.6} parent=0 // loop_body
    %s16 = ssub.s32 %s11, 1
    %s17 = ssub.s32 %s11, 2
    %s18 = sadd.s32 %s11, 1
    %s19 = ssub.s32 %s11, %s18
    %p20 = scmp.eq.s32.totalorder %s19, 0
    %s22 = sadd.s32 %s21, 1
    %s23 = scalar_select %p20, %s21, %s22
    %p26 = pneg %p20
    %p27 = scmp.eq.s32.totalorder %s11, 1
    %p28 = por %p26, %p27
    %p29 = scmp.ne.s32.totalorder %s21, %s24
    %p30 = scmp.eq.s32.totalorder %s11, 0
    %p31 = por %p29, %p30
    %p32 = scmp.ne.s32.totalorder %s21, %s24
    %p33 = scmp.eq.s32.totalorder %s16, 1
    %p34 = por %p32, %p33
    %p35 = scmp.ne.s32.totalorder %s24, %s25
    %p36 = scmp.eq.s32.totalorder %s16, 0
    %p37 = por %p35, %p36
    %p38 = scmp.ne.s32.totalorder %s24, %s25
    %p39 = scmp.eq.s32.totalorder %s17, 1
    %p40 = por %p38, %p39
    %p42 = scmp.ne.s32.totalorder %s25, %s41
    %p43 = scmp.eq.s32.totalorder %s17, 0
    %p44 = por %p42, %p43
    %s46 = sadd.s32 %s45, 1
    %p49 = scmp.eq.s32.totalorder %s11, 1
    %p50 = scmp.ne.s32.totalorder %s45, %s47
    %p51 = scmp.eq.s32.totalorder %s11, 0
    %p52 = por %p50, %p51
    %p53 = scmp.ne.s32.totalorder %s45, %s47
    %p54 = scmp.eq.s32.totalorder %s16, 1
    %p55 = por %p53, %p54
    %p56 = scmp.ne.s32.totalorder %s47, %s48
    %p57 = scmp.eq.s32.totalorder %s16, 0
    %p58 = por %p56, %p57
    %p59 = scmp.ne.s32.totalorder %s47, %s48
    %p60 = scmp.eq.s32.totalorder %s17, 1
    %p61 = por %p59, %p60
    %p63 = scmp.ne.s32.totalorder %s48, %s62
    %p64 = scmp.eq.s32.totalorder %s17, 0
    %p65 = por %p63, %p64
    %s66 = ssub.s32 %s11, %s18
    %p67 = scmp.eq.s32.totalorder %s66, 0
    %s69 = sadd.s32 %s68, 1
    %s70 = scalar_select %p67, %s68, %s69
    %p73 = pneg %p67
    %p74 = scmp.eq.s32.totalorder %s11, 1
    %p75 = por %p73, %p74
    %p76 = scmp.ne.s32.totalorder %s68, %s71
    %p77 = scmp.eq.s32.totalorder %s11, 0
    %p78 = por %p76, %p77
    %p79 = scmp.ne.s32.totalorder %s68, %s71
    %p80 = scmp.eq.s32.totalorder %s16, 1
    %p81 = por %p79, %p80
    %p82 = scmp.ne.s32.totalorder %s71, %s72
    %p83 = scmp.eq.s32.totalorder %s16, 0
    %p84 = por %p82, %p83
    %p85 = scmp.ne.s32.totalorder %s71, %s72
    %p86 = scmp.eq.s32.totalorder %s17, 1
    %p87 = por %p85, %p86
    %p89 = scmp.ne.s32.totalorder %s72, %s88
    %p90 = scmp.eq.s32.totalorder %s17, 0
    %p91 = por %p89, %p90
    %s92 = ssub.s32 %s11, %s18
    %p93 = scmp.eq.s32.totalorder %s92, 0
    %s95 = sadd.s32 %s94, 1
    %s96 = scalar_select %p93, %s94, %s95
    %p99 = pneg %p93
    %p100 = scmp.eq.s32.totalorder %s11, 1
    %p101 = por %p99, %p100
    %p102 = scmp.ne.s32.totalorder %s94, %s97
    %p103 = scmp.eq.s32.totalorder %s11, 0
    %p104 = por %p102, %p103
    %p105 = scmp.ne.s32.totalorder %s94, %s97
    %p106 = scmp.eq.s32.totalorder %s16, 1
    %p107 = por %p105, %p106
    %p108 = scmp.ne.s32.totalorder %s97, %s98
    %p109 = scmp.eq.s32.totalorder %s16, 0
    %p110 = por %p108, %p109
    %p111 = scmp.ne.s32.totalorder %s97, %s98
    %p112 = scmp.eq.s32.totalorder %s17, 1
    %p113 = por %p111, %p112
    %p115 = scmp.ne.s32.totalorder %s98, %s114
    %p116 = scmp.eq.s32.totalorder %s17, 0
    %p117 = por %p115, %p116
    %s118 = ssub.s32 %s11, %s18
    %p119 = scmp.eq.s32.totalorder %s118, 0
    %s121 = sadd.s32 %s120, 1
    %s122 = scalar_select %p119, %s120, %s121
    %p125 = pneg %p119
    %p126 = scmp.eq.s32.totalorder %s11, 1
    %p127 = por %p125, %p126
    %p128 = scmp.ne.s32.totalorder %s120, %s123
    %p129 = scmp.eq.s32.totalorder %s11, 0
    %p130 = por %p128, %p129
    %p131 = scmp.ne.s32.totalorder %s120, %s123
    %p132 = scmp.eq.s32.totalorder %s16, 1
    %p133 = por %p131, %p132
    %p134 = scmp.ne.s32.totalorder %s123, %s124
    %p135 = scmp.eq.s32.totalorder %s16, 0
    %p136 = por %p134, %p135
    %p137 = scmp.ne.s32.totalorder %s123, %s124
    %p138 = scmp.eq.s32.totalorder %s17, 1
    %p139 = por %p137, %p138
    %p141 = scmp.ne.s32.totalorder %s124, %s140
    %p142 = scmp.eq.s32.totalorder %s17, 0
    %p143 = por %p141, %p142
    %p144 = scmp.le.s32.totalorder 1, %s11
    %p145 = scmp.lt.s32.totalorder %s11, 3
    %p146 = pnand %p144, %p145
    %p147 = pneg %p146
    // Predicated region
    $region9: #{basic_block_forward.6} parent=5 // pred_check
      _
    $region10: #{basic_block_forward.6} parent=5 // pred_check_branch
      %149 = sbr.rel (%p146) target = $region12
    $region11: #{basic_block_forward.6} parent=5 // pred_region
      %s150 = ssub.s32 %s11, 1
      // Predicated region
      $region13: #{basic_block_forward.6} parent=11 // pred_check
        %p151 = pneg %p58
      $region14: #{basic_block_forward.6} parent=11 // pred_check_branch
        %153 = sbr.rel (%p151) target = $region16
      $region15: #{basic_block_forward.6} parent=11 // pred_region
        _
      $region16: #{basic_block_forward.6} parent=11 // pred_fallthru
        _
    $region12: #{basic_block_forward.6} parent=5 // pred_fallthru
      _
    %p154 = scmp.lt.s32.totalorder %s11, 2
    // Predicated region
    $region17: #{basic_block_forward.6} parent=5 // pred_check
      %p155 = pneg %p154
    $region18: #{basic_block_forward.6} parent=5 // pred_check_branch
      %157 = sbr.rel (%p155) target = $region20
    $region19: #{basic_block_forward.6} parent=5 // pred_region
      // Predicated region
      $region21: #{basic_block_forward.6} parent=19 // pred_check
        %p158 = pneg %p31
      $region22: #{basic_block_forward.6} parent=19 // pred_check_branch
        %160 = sbr.rel (%p158) target = $region24
      $region23: #{basic_block_forward.6} parent=19 // pred_region
        %p161 = scmp.lt.s32.totalorder %s11, 1
        %s162 = scalar_select %p161, %s11, 1
        %s163 = smul.addr %s162, 36
        %s164 = smul.addr %s163, 4
        %s165 = scalar_lea.vmem %s0, %s164
      $region24: #{basic_block_forward.6} parent=19 // pred_fallthru
        _
    $region20: #{basic_block_forward.6} parent=5 // pred_fallthru
      _
    %p166 = scmp.le.s32.totalorder 1, %s11
    %p167 = scmp.lt.s32.totalorder %s11, 3
    %p168 = pnand %p166, %p167
    %p169 = pneg %p168
    // Predicated region
    $region25: #{basic_block_forward.6} parent=5 // pred_check
      _
    $region26: #{basic_block_forward.6} parent=5 // pred_check_branch
      %171 = sbr.rel (%p168) target = $region28
    $region27: #{basic_block_forward.6} parent=5 // pred_region
      %s172 = ssub.s32 %s11, 1
      %p173 = scmp.lt.s32.totalorder %s16, 1
      %s174 = scalar_select %p173, %s16, 1
      %s175 = smul.addr %s174, 36
      %s176 = smul.addr %s175, 4
      %s177 = scalar_lea.vmem %s0, %s176
      %p178 = pneg %p37
      %p179 = pneg %p34
      %p180 = pneg %p58
      %p181 = pneg %p55
      %p182 = pneg %p84
      %p183 = pneg %p81
      %p184 = scmp.lt.s32.totalorder %s16, 1
      %s185 = scalar_select %p184, %s16, 1
      %s186 = smul.addr %s185, 8
      %s187 = smul.addr %s186, 4
      %s188 = scalar_lea.vmem %s2, %s187
      %p189 = pneg %p110
      %p190 = pneg %p107
      %p191 = scmp.lt.s32.totalorder %s16, 1
      %s192 = scalar_select %p191, %s16, 1
      %s193 = scalar_lea.vmem %s3, %s192
      %p194 = pneg %p136
      %p195 = pneg %p133
      %p196 = scmp.lt.s32.totalorder %s16, 1
      %s197 = scalar_select %p196, %s16, 1
      %s198 = scalar_lea.vmem %s4, %s197
      %p199 = scmp.lt.s32.totalorder %s16, 1
      %s200 = scalar_select %p199, %s16, 1
      %s201 = smul.addr %s200, 36
      %s202 = smul.addr %s201, 4
      %s203 = scalar_lea.vmem %s0, %s202
      %p204 = scmp.lt.s32.totalorder %s16, 1
      %s205 = scalar_select %p204, %s16, 1
      %s206 = smul.addr %s205, 8
      %s207 = smul.addr %s206, 4
      %s208 = scalar_lea.vmem %s2, %s207
      %p209 = scmp.lt.s32.totalorder %s16, 1
      %s210 = scalar_select %p209, %s16, 1
      %s211 = scalar_lea.vmem %s3, %s210
      %p212 = scmp.lt.s32.totalorder %s16, 1
      %s213 = scalar_select %p212, %s16, 1
      %s214 = scalar_lea.vmem %s4, %s213
      %v216 = vld [vmem:[%s203] sm:$0xf]
      %v217 = vld [vmem:[%s203 + $0x10] sm:$0xf]
      %v218 = vld [vmem:[%s203 + $0x20] sm:$0xf]
      %v219 = vld [vmem:[%s203 + $0x30] sm:$0xf]
      %v220 = vld [vmem:[%s203 + $0x40] sm:$0xf]
      %v221 = vld [vmem:[%s203 + $0x50] sm:$0xf]
      %v222 = vld [vmem:[%s203 + $0x60] sm:$0xf]
      %v223 = vld [vmem:[%s203 + $0x70] sm:$0xf]
      %v224 = vld [vmem:[%s1] sm:$0x3]
      %s225 = scalar_lea.vmem %s1, 2
      %v226 = vld [vmem:[%s225] sm:$0x3]
      %v235 = vunpack.c.l.b16 %v216
      %v236 = vunpack.c.l.b16 %v217
      %v237 = vunpack.c.l.b16 %v218
      %v238 = vunpack.c.l.b16 %v219
      %v239 = vunpack.c.l.b16 %v220
      %v240 = vunpack.c.l.b16 %v221
      %v241 = vunpack.c.l.b16 %v222
      %v242 = vunpack.c.l.b16 %v223
      %v243 = vpack.c.b16 %v236, %v235
      %v244 = vpack.c.b16 %v238, %v237
      %v245 = vpack.c.b16 %v240, %v239
      %v246 = vpack.c.b16 %v242, %v241
      %247 = vrot.lane.b32.xlu0 %v243, 124
      %v248 = vpop.permute.xlu0 %247
      %249 = vrot.lane.b32.xlu0 %v244, 124
      %v250 = vpop.permute.xlu0 %249
      %251 = vrot.lane.b32.xlu0 %v245, 124
      %v252 = vpop.permute.xlu0 %251
      %253 = vrot.lane.b32.xlu0 %v246, 124
      %v254 = vpop.permute.xlu0 %253
      %vm255 = vcmask 31744
      %v257 = vsel %vm255, %v248, 0
      %v260 = vsel %vm255, %v250, 0
      %v263 = vsel %vm255, %v252, 0
      %v266 = vsel %vm255, %v254, 0
      %vm268 = vcmask 1041408
      %v270 = vsel %vm268, %v226, 0
      %272 = vmatprep.subr.bf16.mxu0 0
      %273 = vmatpush1.bf16.msra.mxu0 0
      %274 = vmatprep.subr.bf16.mxu0 0
      %275 = vmatpush1.bf16.msra.mxu0 0
      %276 = vmatprep.subr.bf16.mxu0 0
      %277 = vmatpush1.bf16.msra.mxu0 0
      %278 = vmatprep.subr.bf16.mxu0 0
      %279 = vmatpush1.bf16.msra.mxu0 0
      %280 = vmatprep.subr.bf16.mxu0 0
      %281 = vmatpush1.bf16.msra.mxu0 0
      %282 = vmatprep.subr.bf16.mxu0 0
      %283 = vmatpush1.bf16.msra.mxu0 0
      %284 = vmatprep.subr.bf16.mxu0 0
      %285 = vmatpush1.bf16.msra.mxu0 0
      %286 = vmatprep.subr.bf16.mxu0 0
      %287 = vmatpush1.bf16.msra.mxu0 %v270
      %288 = vmatprep.subr.bf16.mxu0 0
      %289 = vmatpush2.bf16.msra.mxu0 0
      %290 = vmatprep.subr.bf16.mxu0 0
      %291 = vmatpush2.bf16.msra.mxu0 0
      %292 = vmatprep.subr.bf16.mxu0 0
      %293 = vmatpush2.bf16.msra.mxu0 0
      %294 = vmatprep.subr.bf16.mxu0 0
      %295 = vmatpush2.bf16.msra.mxu0 0
      %296 = vmatprep.subr.bf16.mxu0 0
      %297 = vmatpush2.bf16.msra.mxu0 0
      %298 = vmatprep.subr.bf16.mxu0 0
      %299 = vmatpush2.bf16.msra.mxu0 0
      %300 = vmatprep.subr.bf16.mxu0 0
      %301 = vmatpush2.bf16.msra.mxu0 0
      %302 = vmatprep.subr.bf16.mxu0 0
      %303 = vmatpush2.bf16.msra.mxu0 0
      %304 = vmatprep.mubr.bf16.mxu0 0
      %305 = vmatmul.mubr.bf16.gmra.mxu0 %v257
      %v306 = vpop.f32.mrf.mxu0
      %v307 = vadd.f32 0.0, %v306
      %v308 = vpop.f32.mrf.mxu0
      %v309 = vpop.f32.mrf.mxu0
      %v310 = vadd.f32 0.0, %v309
      %v311 = vpop.f32.mrf.mxu0
      %312 = vmatprep.mubr.bf16.mxu0 0
      %313 = vmatmul.mubr.bf16.gmra.mxu0 %v260
      %v314 = vpop.f32.mrf.mxu0
      %v315 = vadd.f32 0.0, %v314
      %v316 = vpop.f32.mrf.mxu0
      %v317 = vpop.f32.mrf.mxu0
      %v318 = vadd.f32 0.0, %v317
      %v319 = vpop.f32.mrf.mxu0
      %320 = vmatprep.mubr.bf16.mxu0 0
      %321 = vmatmul.mubr.bf16.gmra.mxu0 %v263
      %v322 = vpop.f32.mrf.mxu0
      %v323 = vadd.f32 0.0, %v322
      %v324 = vpop.f32.mrf.mxu0
      %v325 = vpop.f32.mrf.mxu0
      %v326 = vadd.f32 0.0, %v325
      %v327 = vpop.f32.mrf.mxu0
      %328 = vmatprep.mubr.bf16.mxu0 0
      %329 = vmatmul.mubr.bf16.gmra.mxu0 %v266
      %v330 = vpop.f32.mrf.mxu0
      %v331 = vadd.f32 0.0, %v330
      %v332 = vpop.f32.mrf.mxu0
      %v333 = vpop.f32.mrf.mxu0
      %v334 = vadd.f32 0.0, %v333
      %v335 = vpop.f32.mrf.mxu0
      %336 = vdwg.mxu0
      %v338 = vsel %vm255, %v243, 0
      %v341 = vsel %vm255, %v244, 0
      %v344 = vsel %vm255, %v245, 0
      %v347 = vsel %vm255, %v246, 0
      %v350 = vsel %vm268, %v224, 0
      %352 = vmatprep.subr.bf16.mxu0 0
      %353 = vmatpush1.bf16.msra.mxu0 0
      %354 = vmatprep.subr.bf16.mxu0 0
      %355 = vmatpush1.bf16.msra.mxu0 0
      %356 = vmatprep.subr.bf16.mxu0 0
      %357 = vmatpush1.bf16.msra.mxu0 0
      %358 = vmatprep.subr.bf16.mxu0 0
      %359 = vmatpush1.bf16.msra.mxu0 0
      %360 = vmatprep.subr.bf16.mxu0 0
      %361 = vmatpush1.bf16.msra.mxu0 0
      %362 = vmatprep.subr.bf16.mxu0 0
      %363 = vmatpush1.bf16.msra.mxu0 0
      %364 = vmatprep.subr.bf16.mxu0 0
      %365 = vmatpush1.bf16.msra.mxu0 0
      %366 = vmatprep.subr.bf16.mxu0 0
      %367 = vmatpush1.bf16.msra.mxu0 %v350
      %368 = vmatprep.subr.bf16.mxu0 0
      %369 = vmatpush2.bf16.msra.mxu0 0
      %370 = vmatprep.subr.bf16.mxu0 0
      %371 = vmatpush2.bf16.msra.mxu0 0
      %372 = vmatprep.subr.bf16.mxu0 0
      %373 = vmatpush2.bf16.msra.mxu0 0
      %374 = vmatprep.subr.bf16.mxu0 0
      %375 = vmatpush2.bf16.msra.mxu0 0
      %376 = vmatprep.subr.bf16.mxu0 0
      %377 = vmatpush2.bf16.msra.mxu0 0
      %378 = vmatprep.subr.bf16.mxu0 0
      %379 = vmatpush2.bf16.msra.mxu0 0
      %380 = vmatprep.subr.bf16.mxu0 0
      %381 = vmatpush2.bf16.msra.mxu0 0
      %382 = vmatprep.subr.bf16.mxu0 0
      %383 = vmatpush2.bf16.msra.mxu0 0
      %384 = vmatprep.mubr.bf16.mxu0 0
      %385 = vmatmul.mubr.bf16.gmra.mxu0 %v338
      %v386 = vpop.f32.mrf.mxu0
      %v387 = vadd.f32 %v307, %v386
      %v388 = vpop.f32.mrf.mxu0
      %v389 = vpop.f32.mrf.mxu0
      %v390 = vadd.f32 %v310, %v389
      %v391 = vpop.f32.mrf.mxu0
      %392 = vmatprep.mubr.bf16.mxu0 0
      %393 = vmatmul.mubr.bf16.gmra.mxu0 %v341
      %v394 = vpop.f32.mrf.mxu0
      %v395 = vadd.f32 %v315, %v394
      %v396 = vpop.f32.mrf.mxu0
      %v397 = vpop.f32.mrf.mxu0
      %v398 = vadd.f32 %v318, %v397
      %v399 = vpop.f32.mrf.mxu0
      %400 = vmatprep.mubr.bf16.mxu0 0
      %401 = vmatmul.mubr.bf16.gmra.mxu0 %v344
      %v402 = vpop.f32.mrf.mxu0
      %v403 = vadd.f32 %v323, %v402
      %v404 = vpop.f32.mrf.mxu0
      %v405 = vpop.f32.mrf.mxu0
      %v406 = vadd.f32 %v326, %v405
      %v407 = vpop.f32.mrf.mxu0
      %408 = vmatprep.mubr.bf16.mxu0 0
      %409 = vmatmul.mubr.bf16.gmra.mxu0 %v347
      %v410 = vpop.f32.mrf.mxu0
      %v411 = vadd.f32 %v331, %v410
      %v412 = vpop.f32.mrf.mxu0
      %v413 = vpop.f32.mrf.mxu0
      %v414 = vadd.f32 %v334, %v413
      %v415 = vpop.f32.mrf.mxu0
      %416 = vdwg.mxu0
      %v417 = vld [vmem:[%s203] sm:$0xf]
      %v418 = vld [vmem:[%s203 + $0x4] sm:$0x1]
      %v419 = vld [vmem:[%s203 + $0x10] sm:$0xf]
      %v420 = vld [vmem:[%s203 + $0x14] sm:$0x1]
      %v421 = vld [vmem:[%s203 + $0x20] sm:$0xf]
      %v422 = vld [vmem:[%s203 + $0x24] sm:$0x1]
      %v423 = vld [vmem:[%s203 + $0x30] sm:$0xf]
      %v424 = vld [vmem:[%s203 + $0x34] sm:$0x1]
      %v425 = vld [vmem:[%s203 + $0x40] sm:$0xf]
      %v426 = vld [vmem:[%s203 + $0x44] sm:$0x1]
      %v427 = vld [vmem:[%s203 + $0x50] sm:$0xf]
      %v428 = vld [vmem:[%s203 + $0x54] sm:$0x1]
      %v429 = vld [vmem:[%s203 + $0x60] sm:$0xf]
      %v430 = vld [vmem:[%s203 + $0x64] sm:$0x1]
      %v431 = vld [vmem:[%s203 + $0x70] sm:$0xf]
      %v432 = vld [vmem:[%s203 + $0x74] sm:$0x1]
      %vm433 = vsmask.f32 3328
      %vm434 = vsmask.f32 7440
      %vm435 = vmor %vm433, %vm434
      %v437 = vshrl.u32 %v417, 16
      %v439 = vrot.slane %v437, 4
      %v440 = vshll.u32 %v417, 16
      %v442 = vrot.slane %v440, 5
      %v443 = vor.u32 %v439, %v442
      %v444 = vrot.slane %v443, 4
      %v446 = vshll.u32 %v418, 16
      %v448 = vrot.slane %v446, 5
      %v449 = vsel %vm435, %v444, %v448
      %v451 = vshrl.u32 %v419, 16
      %v453 = vrot.slane %v451, 4
      %v454 = vshll.u32 %v419, 16
      %v456 = vrot.slane %v454, 5
      %v457 = vor.u32 %v453, %v456
      %v458 = vrot.slane %v457, 4
      %v460 = vshll.u32 %v420, 16
      %v462 = vrot.slane %v460, 5
      %v463 = vsel %vm435, %v458, %v462
      %v465 = vshrl.u32 %v421, 16
      %v467 = vrot.slane %v465, 4
      %v468 = vshll.u32 %v421, 16
      %v470 = vrot.slane %v468, 5
      %v471 = vor.u32 %v467, %v470
      %v472 = vrot.slane %v471, 4
      %v474 = vshll.u32 %v422, 16
      %v476 = vrot.slane %v474, 5
      %v477 = vsel %vm435, %v472, %v476
      %v479 = vshrl.u32 %v423, 16
      %v481 = vrot.slane %v479, 4
      %v482 = vshll.u32 %v423, 16
      %v484 = vrot.slane %v482, 5
      %v485 = vor.u32 %v481, %v484
      %v486 = vrot.slane %v485, 4
      %v488 = vshll.u32 %v424, 16
      %v490 = vrot.slane %v488, 5
      %v491 = vsel %vm435, %v486, %v490
      %v493 = vshrl.u32 %v425, 16
      %v495 = vrot.slane %v493, 4
      %v496 = vshll.u32 %v425, 16
      %v498 = vrot.slane %v496, 5
      %v499 = vor.u32 %v495, %v498
      %v500 = vrot.slane %v499, 4
      %v502 = vshll.u32 %v426, 16
      %v504 = vrot.slane %v502, 5
      %v505 = vsel %vm435, %v500, %v504
      %v507 = vshrl.u32 %v427, 16
      %v509 = vrot.slane %v507, 4
      %v510 = vshll.u32 %v427, 16
      %v512 = vrot.slane %v510, 5
      %v513 = vor.u32 %v509, %v512
      %v514 = vrot.slane %v513, 4
      %v516 = vshll.u32 %v428, 16
      %v518 = vrot.slane %v516, 5
      %v519 = vsel %vm435, %v514, %v518
      %v521 = vshrl.u32 %v429, 16
      %v523 = vrot.slane %v521, 4
      %v524 = vshll.u32 %v429, 16
      %v526 = vrot.slane %v524, 5
      %v527 = vor.u32 %v523, %v526
      %v528 = vrot.slane %v527, 4
      %v530 = vshll.u32 %v430, 16
      %v532 = vrot.slane %v530, 5
      %v533 = vsel %vm435, %v528, %v532
      %v535 = vshrl.u32 %v431, 16
      %v537 = vrot.slane %v535, 4
      %v538 = vshll.u32 %v431, 16
      %v540 = vrot.slane %v538, 5
      %v541 = vor.u32 %v537, %v540
      %v542 = vrot.slane %v541, 4
      %v544 = vshll.u32 %v432, 16
      %v546 = vrot.slane %v544, 5
      %v547 = vsel %vm435, %v542, %v546
      %s548 = scalar_lea.vmem %s1, 4
      %v549 = vld [vmem:[%s548] sm:$0x3]
      %v550 = vunpack.c.l.b16 %v449
      %v551 = vunpack.c.l.b16 %v463
      %v552 = vunpack.c.l.b16 %v477
      %v553 = vunpack.c.l.b16 %v491
      %v554 = vunpack.c.l.b16 %v505
      %v555 = vunpack.c.l.b16 %v519
      %v556 = vunpack.c.l.b16 %v533
      %v557 = vunpack.c.l.b16 %v547
      %v558 = vpack.c.b16 %v551, %v550
      %v559 = vpack.c.b16 %v553, %v552
      %v560 = vpack.c.b16 %v555, %v554
      %v561 = vpack.c.b16 %v557, %v556
      %v563 = vsel %vm255, %v558, 0
      %v566 = vsel %vm255, %v559, 0
      %v569 = vsel %vm255, %v560, 0
      %v572 = vsel %vm255, %v561, 0
      %v575 = vsel %vm268, %v549, 0
      %577 = vmatprep.subr.bf16.mxu0 0
      %578 = vmatpush1.bf16.msra.mxu0 0
      %579 = vmatprep.subr.bf16.mxu0 0
      %580 = vmatpush1.bf16.msra.mxu0 0
      %581 = vmatprep.subr.bf16.mxu0 0
      %582 = vmatpush1.bf16.msra.mxu0 0
      %583 = vmatprep.subr.bf16.mxu0 0
      %584 = vmatpush1.bf16.msra.mxu0 0
      %585 = vmatprep.subr.bf16.mxu0 0
      %586 = vmatpush1.bf16.msra.mxu0 0
      %587 = vmatprep.subr.bf16.mxu0 0
      %588 = vmatpush1.bf16.msra.mxu0 0
      %589 = vmatprep.subr.bf16.mxu0 0
      %590 = vmatpush1.bf16.msra.mxu0 0
      %591 = vmatprep.subr.bf16.mxu0 0
      %592 = vmatpush1.bf16.msra.mxu0 %v575
      %593 = vmatprep.subr.bf16.mxu0 0
      %594 = vmatpush2.bf16.msra.mxu0 0
      %595 = vmatprep.subr.bf16.mxu0 0
      %596 = vmatpush2.bf16.msra.mxu0 0
      %597 = vmatprep.subr.bf16.mxu0 0
      %598 = vmatpush2.bf16.msra.mxu0 0
      %599 = vmatprep.subr.bf16.mxu0 0
      %600 = vmatpush2.bf16.msra.mxu0 0
      %601 = vmatprep.subr.bf16.mxu0 0
      %602 = vmatpush2.bf16.msra.mxu0 0
      %603 = vmatprep.subr.bf16.mxu0 0
      %604 = vmatpush2.bf16.msra.mxu0 0
      %605 = vmatprep.subr.bf16.mxu0 0
      %606 = vmatpush2.bf16.msra.mxu0 0
      %607 = vmatprep.subr.bf16.mxu0 0
      %608 = vmatpush2.bf16.msra.mxu0 0
      %609 = vmatprep.mubr.bf16.mxu0 0
      %610 = vmatmul.mubr.bf16.gmra.mxu0 %v563
      %v611 = vpop.f32.mrf.mxu0
      %v612 = vadd.f32 0.0, %v611
      %v613 = vpop.f32.mrf.mxu0
      %v614 = vpop.f32.mrf.mxu0
      %v615 = vadd.f32 0.0, %v614
      %v616 = vpop.f32.mrf.mxu0
      %617 = vmatprep.mubr.bf16.mxu0 0
      %618 = vmatmul.mubr.bf16.gmra.mxu0 %v566
      %v619 = vpop.f32.mrf.mxu0
      %v620 = vadd.f32 0.0, %v619
      %v621 = vpop.f32.mrf.mxu0
      %v622 = vpop.f32.mrf.mxu0
      %v623 = vadd.f32 0.0, %v622
      %v624 = vpop.f32.mrf.mxu0
      %625 = vmatprep.mubr.bf16.mxu0 0
      %626 = vmatmul.mubr.bf16.gmra.mxu0 %v569
      %v627 = vpop.f32.mrf.mxu0
      %v628 = vadd.f32 0.0, %v627
      %v629 = vpop.f32.mrf.mxu0
      %v630 = vpop.f32.mrf.mxu0
      %v631 = vadd.f32 0.0, %v630
      %v632 = vpop.f32.mrf.mxu0
      %633 = vmatprep.mubr.bf16.mxu0 0
      %634 = vmatmul.mubr.bf16.gmra.mxu0 %v572
      %v635 = vpop.f32.mrf.mxu0
      %v636 = vadd.f32 0.0, %v635
      %v637 = vpop.f32.mrf.mxu0
      %v638 = vpop.f32.mrf.mxu0
      %v639 = vadd.f32 0.0, %v638
      %v640 = vpop.f32.mrf.mxu0
      %641 = vdwg.mxu0
      %v642 = vadd.f32 %v387, %v612
      %v643 = vadd.f32 %v390, %v615
      %v644 = vadd.f32 %v395, %v620
      %v645 = vadd.f32 %v398, %v623
      %v646 = vadd.f32 %v403, %v628
      %v647 = vadd.f32 %v406, %v631
      %v648 = vadd.f32 %v411, %v636
      %v649 = vadd.f32 %v414, %v639
      %s650 = scalar_lea.vmem %s203, 8
      %v651 = vld [vmem:[%s650] sm:$0xf]
      %v652 = vld [vmem:[%s650 + $0x10] sm:$0xf]
      %v653 = vld [vmem:[%s650 + $0x20] sm:$0xf]
      %v654 = vld [vmem:[%s650 + $0x30] sm:$0xf]
      %v655 = vld [vmem:[%s650 + $0x40] sm:$0xf]
      %v656 = vld [vmem:[%s650 + $0x50] sm:$0xf]
      %v657 = vld [vmem:[%s650 + $0x60] sm:$0xf]
      %v658 = vld [vmem:[%s650 + $0x70] sm:$0xf]
      %s659 = scalar_lea.vmem %s1, 6
      %v660 = vld [vmem:[%s659] sm:$0x3]
      %v669 = vunpack.c.l.b16 %v651
      %v670 = vunpack.c.l.b16 %v652
      %v671 = vunpack.c.l.b16 %v653
      %v672 = vunpack.c.l.b16 %v654
      %v673 = vunpack.c.l.b16 %v655
      %v674 = vunpack.c.l.b16 %v656
      %v675 = vunpack.c.l.b16 %v657
      %v676 = vunpack.c.l.b16 %v658
      %v677 = vpack.c.b16 %v670, %v669
      %v678 = vpack.c.b16 %v672, %v671
      %v679 = vpack.c.b16 %v674, %v673
      %v680 = vpack.c.b16 %v676, %v675
      %v682 = vsel %vm255, %v677, 0
      %v685 = vsel %vm255, %v678, 0
      %v688 = vsel %vm255, %v679, 0
      %v691 = vsel %vm255, %v680, 0
      %v694 = vsel %vm268, %v660, 0
      %696 = vmatprep.subr.bf16.mxu0 0
      %697 = vmatpush1.bf16.msra.mxu0 0
      %698 = vmatprep.subr.bf16.mxu0 0
      %699 = vmatpush1.bf16.msra.mxu0 0
      %700 = vmatprep.subr.bf16.mxu0 0
      %701 = vmatpush1.bf16.msra.mxu0 0
      %702 = vmatprep.subr.bf16.mxu0 0
      %703 = vmatpush1.bf16.msra.mxu0 0
      %704 = vmatprep.subr.bf16.mxu0 0
      %705 = vmatpush1.bf16.msra.mxu0 0
      %706 = vmatprep.subr.bf16.mxu0 0
      %707 = vmatpush1.bf16.msra.mxu0 0
      %708 = vmatprep.subr.bf16.mxu0 0
      %709 = vmatpush1.bf16.msra.mxu0 0
      %710 = vmatprep.subr.bf16.mxu0 0
      %711 = vmatpush1.bf16.msra.mxu0 %v694
      %712 = vmatprep.subr.bf16.mxu0 0
      %713 = vmatpush2.bf16.msra.mxu0 0
      %714 = vmatprep.subr.bf16.mxu0 0
      %715 = vmatpush2.bf16.msra.mxu0 0
      %716 = vmatprep.subr.bf16.mxu0 0
      %717 = vmatpush2.bf16.msra.mxu0 0
      %718 = vmatprep.subr.bf16.mxu0 0
      %719 = vmatpush2.bf16.msra.mxu0 0
      %720 = vmatprep.subr.bf16.mxu0 0
      %721 = vmatpush2.bf16.msra.mxu0 0
      %722 = vmatprep.subr.bf16.mxu0 0
      %723 = vmatpush2.bf16.msra.mxu0 0
      %724 = vmatprep.subr.bf16.mxu0 0
      %725 = vmatpush2.bf16.msra.mxu0 0
      %726 = vmatprep.subr.bf16.mxu0 0
      %727 = vmatpush2.bf16.msra.mxu0 0
      %728 = vmatprep.mubr.bf16.mxu0 0
      %729 = vmatmul.mubr.bf16.gmra.mxu0 %v682
      %v730 = vpop.f32.mrf.mxu0
      %v731 = vadd.f32 0.0, %v730
      %v732 = vpop.f32.mrf.mxu0
      %v733 = vpop.f32.mrf.mxu0
      %v734 = vadd.f32 0.0, %v733
      %v735 = vpop.f32.mrf.mxu0
      %736 = vmatprep.mubr.bf16.mxu0 0
      %737 = vmatmul.mubr.bf16.gmra.mxu0 %v685
      %v738 = vpop.f32.mrf.mxu0
      %v739 = vadd.f32 0.0, %v738
      %v740 = vpop.f32.mrf.mxu0
      %v741 = vpop.f32.mrf.mxu0
      %v742 = vadd.f32 0.0, %v741
      %v743 = vpop.f32.mrf.mxu0
      %744 = vmatprep.mubr.bf16.mxu0 0
      %745 = vmatmul.mubr.bf16.gmra.mxu0 %v688
      %v746 = vpop.f32.mrf.mxu0
      %v747 = vadd.f32 0.0, %v746
      %v748 = vpop.f32.mrf.mxu0
      %v749 = vpop.f32.mrf.mxu0
      %v750 = vadd.f32 0.0, %v749
      %v751 = vpop.f32.mrf.mxu0
      %752 = vmatprep.mubr.bf16.mxu0 0
      %753 = vmatmul.mubr.bf16.gmra.mxu0 %v691
      %v754 = vpop.f32.mrf.mxu0
      %v755 = vadd.f32 0.0, %v754
      %v756 = vpop.f32.mrf.mxu0
      %v757 = vpop.f32.mrf.mxu0
      %v758 = vadd.f32 0.0, %v757
      %v759 = vpop.f32.mrf.mxu0
      %760 = vdwg.mxu0
      %v761 = vadd.f32 %v642, %v731
      %v762 = vadd.f32 %v643, %v734
      %v763 = vadd.f32 %v644, %v739
      %v764 = vadd.f32 %v645, %v742
      %v765 = vadd.f32 %v646, %v747
      %v766 = vadd.f32 %v647, %v750
      %v767 = vadd.f32 %v648, %v755
      %v768 = vadd.f32 %v649, %v758
      %s769 = scalar_lea.vmem %s1, 8
      %v770 = vld [vmem:[%s769] sm:$0x3]
      %771 = vrot.lane.b32.xlu0 %v677, 124
      %v772 = vpop.permute.xlu0 %771
      %773 = vrot.lane.b32.xlu0 %v678, 124
      %v774 = vpop.permute.xlu0 %773
      %775 = vrot.lane.b32.xlu0 %v679, 124
      %v776 = vpop.permute.xlu0 %775
      %777 = vrot.lane.b32.xlu0 %v680, 124
      %v778 = vpop.permute.xlu0 %777
      %v780 = vsel %vm255, %v772, 0
      %v783 = vsel %vm255, %v774, 0
      %v786 = vsel %vm255, %v776, 0
      %v789 = vsel %vm255, %v778, 0
      %v792 = vsel %vm268, %v770, 0
      %794 = vmatprep.subr.bf16.mxu0 0
      %795 = vmatpush1.bf16.msra.mxu0 0
      %796 = vmatprep.subr.bf16.mxu0 0
      %797 = vmatpush1.bf16.msra.mxu0 0
      %798 = vmatprep.subr.bf16.mxu0 0
      %799 = vmatpush1.bf16.msra.mxu0 0
      %800 = vmatprep.subr.bf16.mxu0 0
      %801 = vmatpush1.bf16.msra.mxu0 0
      %802 = vmatprep.subr.bf16.mxu0 0
      %803 = vmatpush1.bf16.msra.mxu0 0
      %804 = vmatprep.subr.bf16.mxu0 0
      %805 = vmatpush1.bf16.msra.mxu0 0
      %806 = vmatprep.subr.bf16.mxu0 0
      %807 = vmatpush1.bf16.msra.mxu0 0
      %808 = vmatprep.subr.bf16.mxu0 0
      %809 = vmatpush1.bf16.msra.mxu0 %v792
      %810 = vmatprep.subr.bf16.mxu0 0
      %811 = vmatpush2.bf16.msra.mxu0 0
      %812 = vmatprep.subr.bf16.mxu0 0
      %813 = vmatpush2.bf16.msra.mxu0 0
      %814 = vmatprep.subr.bf16.mxu0 0
      %815 = vmatpush2.bf16.msra.mxu0 0
      %816 = vmatprep.subr.bf16.mxu0 0
      %817 = vmatpush2.bf16.msra.mxu0 0
      %818 = vmatprep.subr.bf16.mxu0 0
      %819 = vmatpush2.bf16.msra.mxu0 0
      %820 = vmatprep.subr.bf16.mxu0 0
      %821 = vmatpush2.bf16.msra.mxu0 0
      %822 = vmatprep.subr.bf16.mxu0 0
      %823 = vmatpush2.bf16.msra.mxu0 0
      %824 = vmatprep.subr.bf16.mxu0 0
      %825 = vmatpush2.bf16.msra.mxu0 0
      %826 = vmatprep.mubr.bf16.mxu0 0
      %827 = vmatmul.mubr.bf16.gmra.mxu0 %v780
      %v828 = vpop.f32.mrf.mxu0
      %v829 = vadd.f32 0.0, %v828
      %v830 = vpop.f32.mrf.mxu0
      %v831 = vpop.f32.mrf.mxu0
      %v832 = vadd.f32 0.0, %v831
      %v833 = vpop.f32.mrf.mxu0
      %834 = vmatprep.mubr.bf16.mxu0 0
      %835 = vmatmul.mubr.bf16.gmra.mxu0 %v783
      %v836 = vpop.f32.mrf.mxu0
      %v837 = vadd.f32 0.0, %v836
      %v838 = vpop.f32.mrf.mxu0
      %v839 = vpop.f32.mrf.mxu0
      %v840 = vadd.f32 0.0, %v839
      %v841 = vpop.f32.mrf.mxu0
      %842 = vmatprep.mubr.bf16.mxu0 0
      %843 = vmatmul.mubr.bf16.gmra.mxu0 %v786
      %v844 = vpop.f32.mrf.mxu0
      %v845 = vadd.f32 0.0, %v844
      %v846 = vpop.f32.mrf.mxu0
      %v847 = vpop.f32.mrf.mxu0
      %v848 = vadd.f32 0.0, %v847
      %v849 = vpop.f32.mrf.mxu0
      %850 = vmatprep.mubr.bf16.mxu0 0
      %851 = vmatmul.mubr.bf16.gmra.mxu0 %v789
      %v852 = vpop.f32.mrf.mxu0
      %v853 = vadd.f32 0.0, %v852
      %v854 = vpop.f32.mrf.mxu0
      %v855 = vpop.f32.mrf.mxu0
      %v856 = vadd.f32 0.0, %v855
      %v857 = vpop.f32.mrf.mxu0
      %858 = vdwg.mxu0
      %v859 = vadd.f32 %v761, %v829
      %v860 = vadd.f32 %v762, %v832
      %v861 = vadd.f32 %v763, %v837
      %v862 = vadd.f32 %v764, %v840
      %v863 = vadd.f32 %v765, %v845
      %v864 = vadd.f32 %v766, %v848
      %v865 = vadd.f32 %v767, %v853
      %v866 = vadd.f32 %v768, %v856
      %v867 = vld [vmem:[%s650] sm:$0xf]
      %v868 = vld [vmem:[%s650 + $0x4] sm:$0x1]
      %v869 = vld [vmem:[%s650 + $0x10] sm:$0xf]
      %v870 = vld [vmem:[%s650 + $0x14] sm:$0x1]
      %v871 = vld [vmem:[%s650 + $0x20] sm:$0xf]
      %v872 = vld [vmem:[%s650 + $0x24] sm:$0x1]
      %v873 = vld [vmem:[%s650 + $0x30] sm:$0xf]
      %v874 = vld [vmem:[%s650 + $0x34] sm:$0x1]
      %v875 = vld [vmem:[%s650 + $0x40] sm:$0xf]
      %v876 = vld [vmem:[%s650 + $0x44] sm:$0x1]
      %v877 = vld [vmem:[%s650 + $0x50] sm:$0xf]
      %v878 = vld [vmem:[%s650 + $0x54] sm:$0x1]
      %v879 = vld [vmem:[%s650 + $0x60] sm:$0xf]
      %v880 = vld [vmem:[%s650 + $0x64] sm:$0x1]
      %v881 = vld [vmem:[%s650 + $0x70] sm:$0xf]
      %v882 = vld [vmem:[%s650 + $0x74] sm:$0x1]
      %v884 = vshrl.u32 %v867, 16
      %v886 = vrot.slane %v884, 4
      %v887 = vshll.u32 %v867, 16
      %v889 = vrot.slane %v887, 5
      %v890 = vor.u32 %v886, %v889
      %v891 = vrot.slane %v890, 4
      %v893 = vshll.u32 %v868, 16
      %v895 = vrot.slane %v893, 5
      %v896 = vsel %vm435, %v891, %v895
      %v898 = vshrl.u32 %v869, 16
      %v900 = vrot.slane %v898, 4
      %v901 = vshll.u32 %v869, 16
      %v903 = vrot.slane %v901, 5
      %v904 = vor.u32 %v900, %v903
      %v905 = vrot.slane %v904, 4
      %v907 = vshll.u32 %v870, 16
      %v909 = vrot.slane %v907, 5
      %v910 = vsel %vm435, %v905, %v909
      %v912 = vshrl.u32 %v871, 16
      %v914 = vrot.slane %v912, 4
      %v915 = vshll.u32 %v871, 16
      %v917 = vrot.slane %v915, 5
      %v918 = vor.u32 %v914, %v917
      %v919 = vrot.slane %v918, 4
      %v921 = vshll.u32 %v872, 16
      %v923 = vrot.slane %v921, 5
      %v924 = vsel %vm435, %v919, %v923
      %v926 = vshrl.u32 %v873, 16
      %v928 = vrot.slane %v926, 4
      %v929 = vshll.u32 %v873, 16
      %v931 = vrot.slane %v929, 5
      %v932 = vor.u32 %v928, %v931
      %v933 = vrot.slane %v932, 4
      %v935 = vshll.u32 %v874, 16
      %v937 = vrot.slane %v935, 5
      %v938 = vsel %vm435, %v933, %v937
      %v940 = vshrl.u32 %v875, 16
      %v942 = vrot.slane %v940, 4
      %v943 = vshll.u32 %v875, 16
      %v945 = vrot.slane %v943, 5
      %v946 = vor.u32 %v942, %v945
      %v947 = vrot.slane %v946, 4
      %v949 = vshll.u32 %v876, 16
      %v951 = vrot.slane %v949, 5
      %v952 = vsel %vm435, %v947, %v951
      %v954 = vshrl.u32 %v877, 16
      %v956 = vrot.slane %v954, 4
      %v957 = vshll.u32 %v877, 16
      %v959 = vrot.slane %v957, 5
      %v960 = vor.u32 %v956, %v959
      %v961 = vrot.slane %v960, 4
      %v963 = vshll.u32 %v878, 16
      %v965 = vrot.slane %v963, 5
      %v966 = vsel %vm435, %v961, %v965
      %v968 = vshrl.u32 %v879, 16
      %v970 = vrot.slane %v968, 4
      %v971 = vshll.u32 %v879, 16
      %v973 = vrot.slane %v971, 5
      %v974 = vor.u32 %v970, %v973
      %v975 = vrot.slane %v974, 4
      %v977 = vshll.u32 %v880, 16
      %v979 = vrot.slane %v977, 5
      %v980 = vsel %vm435, %v975, %v979
      %v982 = vshrl.u32 %v881, 16
      %v984 = vrot.slane %v982, 4
      %v985 = vshll.u32 %v881, 16
      %v987 = vrot.slane %v985, 5
      %v988 = vor.u32 %v984, %v987
      %v989 = vrot.slane %v988, 4
      %v991 = vshll.u32 %v882, 16
      %v993 = vrot.slane %v991, 5
      %v994 = vsel %vm435, %v989, %v993
      %s995 = scalar_lea.vmem %s1, 10
      %v996 = vld [vmem:[%s995] sm:$0x3]
      %v997 = vunpack.c.l.b16 %v896
      %v998 = vunpack.c.l.b16 %v910
      %v999 = vunpack.c.l.b16 %v924
      %v1000 = vunpack.c.l.b16 %v938
      %v1001 = vunpack.c.l.b16 %v952
      %v1002 = vunpack.c.l.b16 %v966
      %v1003 = vunpack.c.l.b16 %v980
      %v1004 = vunpack.c.l.b16 %v994
      %v1005 = vpack.c.b16 %v998, %v997
      %v1006 = vpack.c.b16 %v1000, %v999
      %v1007 = vpack.c.b16 %v1002, %v1001
      %v1008 = vpack.c.b16 %v1004, %v1003
      %v1010 = vsel %vm255, %v1005, 0
      %v1013 = vsel %vm255, %v1006, 0
      %v1016 = vsel %vm255, %v1007, 0
      %v1019 = vsel %vm255, %v1008, 0
      %v1022 = vsel %vm268, %v996, 0
      %1024 = vmatprep.subr.bf16.mxu0 0
      %1025 = vmatpush1.bf16.msra.mxu0 0
      %1026 = vmatprep.subr.bf16.mxu0 0
      %1027 = vmatpush1.bf16.msra.mxu0 0
      %1028 = vmatprep.subr.bf16.mxu0 0
      %1029 = vmatpush1.bf16.msra.mxu0 0
      %1030 = vmatprep.subr.bf16.mxu0 0
      %1031 = vmatpush1.bf16.msra.mxu0 0
      %1032 = vmatprep.subr.bf16.mxu0 0
      %1033 = vmatpush1.bf16.msra.mxu0 0
      %1034 = vmatprep.subr.bf16.mxu0 0
      %1035 = vmatpush1.bf16.msra.mxu0 0
      %1036 = vmatprep.subr.bf16.mxu0 0
      %1037 = vmatpush1.bf16.msra.mxu0 0
      %1038 = vmatprep.subr.bf16.mxu0 0
      %1039 = vmatpush1.bf16.msra.mxu0 %v1022
      %1040 = vmatprep.subr.bf16.mxu0 0
      %1041 = vmatpush2.bf16.msra.mxu0 0
      %1042 = vmatprep.subr.bf16.mxu0 0
      %1043 = vmatpush2.bf16.msra.mxu0 0
      %1044 = vmatprep.subr.bf16.mxu0 0
      %1045 = vmatpush2.bf16.msra.mxu0 0
      %1046 = vmatprep.subr.bf16.mxu0 0
      %1047 = vmatpush2.bf16.msra.mxu0 0
      %1048 = vmatprep.subr.bf16.mxu0 0
      %1049 = vmatpush2.bf16.msra.mxu0 0
      %1050 = vmatprep.subr.bf16.mxu0 0
      %1051 = vmatpush2.bf16.msra.mxu0 0
      %1052 = vmatprep.subr.bf16.mxu0 0
      %1053 = vmatpush2.bf16.msra.mxu0 0
      %1054 = vmatprep.subr.bf16.mxu0 0
      %1055 = vmatpush2.bf16.msra.mxu0 0
      %1056 = vmatprep.mubr.bf16.mxu0 0
      %1057 = vmatmul.mubr.bf16.gmra.mxu0 %v1010
      %v1058 = vpop.f32.mrf.mxu0
      %v1059 = vadd.f32 0.0, %v1058
      %v1060 = vpop.f32.mrf.mxu0
      %v1061 = vpop.f32.mrf.mxu0
      %v1062 = vadd.f32 0.0, %v1061
      %v1063 = vpop.f32.mrf.mxu0
      %1064 = vmatprep.mubr.bf16.mxu0 0
      %1065 = vmatmul.mubr.bf16.gmra.mxu0 %v1013
      %v1066 = vpop.f32.mrf.mxu0
      %v1067 = vadd.f32 0.0, %v1066
      %v1068 = vpop.f32.mrf.mxu0
      %v1069 = vpop.f32.mrf.mxu0
      %v1070 = vadd.f32 0.0, %v1069
      %v1071 = vpop.f32.mrf.mxu0
      %1072 = vmatprep.mubr.bf16.mxu0 0
      %1073 = vmatmul.mubr.bf16.gmra.mxu0 %v1016
      %v1074 = vpop.f32.mrf.mxu0
      %v1075 = vadd.f32 0.0, %v1074
      %v1076 = vpop.f32.mrf.mxu0
      %v1077 = vpop.f32.mrf.mxu0
      %v1078 = vadd.f32 0.0, %v1077
      %v1079 = vpop.f32.mrf.mxu0
      %1080 = vmatprep.mubr.bf16.mxu0 0
      %1081 = vmatmul.mubr.bf16.gmra.mxu0 %v1019
      %v1082 = vpop.f32.mrf.mxu0
      %v1083 = vadd.f32 0.0, %v1082
      %v1084 = vpop.f32.mrf.mxu0
      %v1085 = vpop.f32.mrf.mxu0
      %v1086 = vadd.f32 0.0, %v1085
      %v1087 = vpop.f32.mrf.mxu0
      %1088 = vdwg.mxu0
      %v1089 = vadd.f32 %v859, %v1059
      %v1090 = vadd.f32 %v860, %v1062
      %v1091 = vadd.f32 %v861, %v1067
      %v1092 = vadd.f32 %v862, %v1070
      %v1093 = vadd.f32 %v863, %v1075
      %v1094 = vadd.f32 %v864, %v1078
      %v1095 = vadd.f32 %v865, %v1083
      %v1096 = vadd.f32 %v866, %v1086
      %s1097 = scalar_lea.vmem %s203, 16
      %v1098 = vld [vmem:[%s1097] sm:$0xf]
      %v1099 = vld [vmem:[%s1097 + $0x10] sm:$0xf]
      %v1100 = vld [vmem:[%s1097 + $0x20] sm:$0xf]
      %v1101 = vld [vmem:[%s1097 + $0x30] sm:$0xf]
      %v1102 = vld [vmem:[%s1097 + $0x40] sm:$0xf]
      %v1103 = vld [vmem:[%s1097 + $0x50] sm:$0xf]
      %v1104 = vld [vmem:[%s1097 + $0x60] sm:$0xf]
      %v1105 = vld [vmem:[%s1097 + $0x70] sm:$0xf]
      %s1106 = scalar_lea.vmem %s1, 12
      %v1107 = vld [vmem:[%s1106] sm:$0x3]
      %v1116 = vunpack.c.l.b16 %v1098
      %v1117 = vunpack.c.l.b16 %v1099
      %v1118 = vunpack.c.l.b16 %v1100
      %v1119 = vunpack.c.l.b16 %v1101
      %v1120 = vunpack.c.l.b16 %v1102
      %v1121 = vunpack.c.l.b16 %v1103
      %v1122 = vunpack.c.l.b16 %v1104
      %v1123 = vunpack.c.l.b16 %v1105
      %v1124 = vpack.c.b16 %v1117, %v1116
      %v1125 = vpack.c.b16 %v1119, %v1118
      %v1126 = vpack.c.b16 %v1121, %v1120
      %v1127 = vpack.c.b16 %v1123, %v1122
      %v1129 = vsel %vm255, %v1124, 0
      %v1132 = vsel %vm255, %v1125, 0
      %v1135 = vsel %vm255, %v1126, 0
      %v1138 = vsel %vm255, %v1127, 0
      %v1141 = vsel %vm268, %v1107, 0
      %1143 = vmatprep.subr.bf16.mxu0 0
      %1144 = vmatpush1.bf16.msra.mxu0 0
      %1145 = vmatprep.subr.bf16.mxu0 0
      %1146 = vmatpush1.bf16.msra.mxu0 0
      %1147 = vmatprep.subr.bf16.mxu0 0
      %1148 = vmatpush1.bf16.msra.mxu0 0
      %1149 = vmatprep.subr.bf16.mxu0 0
      %1150 = vmatpush1.bf16.msra.mxu0 0
      %1151 = vmatprep.subr.bf16.mxu0 0
      %1152 = vmatpush1.bf16.msra.mxu0 0
      %1153 = vmatprep.subr.bf16.mxu0 0
      %1154 = vmatpush1.bf16.msra.mxu0 0
      %1155 = vmatprep.subr.bf16.mxu0 0
      %1156 = vmatpush1.bf16.msra.mxu0 0
      %1157 = vmatprep.subr.bf16.mxu0 0
      %1158 = vmatpush1.bf16.msra.mxu0 %v1141
      %1159 = vmatprep.subr.bf16.mxu0 0
      %1160 = vmatpush2.bf16.msra.mxu0 0
      %1161 = vmatprep.subr.bf16.mxu0 0
      %1162 = vmatpush2.bf16.msra.mxu0 0
      %1163 = vmatprep.subr.bf16.mxu0 0
      %1164 = vmatpush2.bf16.msra.mxu0 0
      %1165 = vmatprep.subr.bf16.mxu0 0
      %1166 = vmatpush2.bf16.msra.mxu0 0
      %1167 = vmatprep.subr.bf16.mxu0 0
      %1168 = vmatpush2.bf16.msra.mxu0 0
      %1169 = vmatprep.subr.bf16.mxu0 0
      %1170 = vmatpush2.bf16.msra.mxu0 0
      %1171 = vmatprep.subr.bf16.mxu0 0
      %1172 = vmatpush2.bf16.msra.mxu0 0
      %1173 = vmatprep.subr.bf16.mxu0 0
      %1174 = vmatpush2.bf16.msra.mxu0 0
      %1175 = vmatprep.mubr.bf16.mxu0 0
      %1176 = vmatmul.mubr.bf16.gmra.mxu0 %v1129
      %v1177 = vpop.f32.mrf.mxu0
      %v1178 = vadd.f32 0.0, %v1177
      %v1179 = vpop.f32.mrf.mxu0
      %v1180 = vpop.f32.mrf.mxu0
      %v1181 = vadd.f32 0.0, %v1180
      %v1182 = vpop.f32.mrf.mxu0
      %1183 = vmatprep.mubr.bf16.mxu0 0
      %1184 = vmatmul.mubr.bf16.gmra.mxu0 %v1132
      %v1185 = vpop.f32.mrf.mxu0
      %v1186 = vadd.f32 0.0, %v1185
      %v1187 = vpop.f32.mrf.mxu0
      %v1188 = vpop.f32.mrf.mxu0
      %v1189 = vadd.f32 0.0, %v1188
      %v1190 = vpop.f32.mrf.mxu0
      %1191 = vmatprep.mubr.bf16.mxu0 0
      %1192 = vmatmul.mubr.bf16.gmra.mxu0 %v1135
      %v1193 = vpop.f32.mrf.mxu0
      %v1194 = vadd.f32 0.0, %v1193
      %v1195 = vpop.f32.mrf.mxu0
      %v1196 = vpop.f32.mrf.mxu0
      %v1197 = vadd.f32 0.0, %v1196
      %v1198 = vpop.f32.mrf.mxu0
      %1199 = vmatprep.mubr.bf16.mxu0 0
      %1200 = vmatmul.mubr.bf16.gmra.mxu0 %v1138
      %v1201 = vpop.f32.mrf.mxu0
      %v1202 = vadd.f32 0.0, %v1201
      %v1203 = vpop.f32.mrf.mxu0
      %v1204 = vpop.f32.mrf.mxu0
      %v1205 = vadd.f32 0.0, %v1204
      %v1206 = vpop.f32.mrf.mxu0
      %1207 = vdwg.mxu0
      %v1208 = vadd.f32 %v1089, %v1178
      %v1209 = vadd.f32 %v1090, %v1181
      %v1210 = vadd.f32 %v1091, %v1186
      %v1211 = vadd.f32 %v1092, %v1189
      %v1212 = vadd.f32 %v1093, %v1194
      %v1213 = vadd.f32 %v1094, %v1197
      %v1214 = vadd.f32 %v1095, %v1202
      %v1215 = vadd.f32 %v1096, %v1205
      %s1216 = scalar_lea.vmem %s1, 14
      %v1217 = vld [vmem:[%s1216] sm:$0x3]
      %1218 = vrot.lane.b32.xlu0 %v1124, 124
      %v1219 = vpop.permute.xlu0 %1218
      %1220 = vrot.lane.b32.xlu0 %v1125, 124
      %v1221 = vpop.permute.xlu0 %1220
      %1222 = vrot.lane.b32.xlu0 %v1126, 124
      %v1223 = vpop.permute.xlu0 %1222
      %1224 = vrot.lane.b32.xlu0 %v1127, 124
      %v1225 = vpop.permute.xlu0 %1224
      %v1227 = vsel %vm255, %v1219, 0
      %v1230 = vsel %vm255, %v1221, 0
      %v1233 = vsel %vm255, %v1223, 0
      %v1236 = vsel %vm255, %v1225, 0
      %v1239 = vsel %vm268, %v1217, 0
      %1241 = vmatprep.subr.bf16.mxu0 0
      %1242 = vmatpush1.bf16.msra.mxu0 0
      %1243 = vmatprep.subr.bf16.mxu0 0
      %1244 = vmatpush1.bf16.msra.mxu0 0
      %1245 = vmatprep.subr.bf16.mxu0 0
      %1246 = vmatpush1.bf16.msra.mxu0 0
      %1247 = vmatprep.subr.bf16.mxu0 0
      %1248 = vmatpush1.bf16.msra.mxu0 0
      %1249 = vmatprep.subr.bf16.mxu0 0
      %1250 = vmatpush1.bf16.msra.mxu0 0
      %1251 = vmatprep.subr.bf16.mxu0 0
      %1252 = vmatpush1.bf16.msra.mxu0 0
      %1253 = vmatprep.subr.bf16.mxu0 0
      %1254 = vmatpush1.bf16.msra.mxu0 0
      %1255 = vmatprep.subr.bf16.mxu0 0
      %1256 = vmatpush1.bf16.msra.mxu0 %v1239
      %1257 = vmatprep.subr.bf16.mxu0 0
      %1258 = vmatpush2.bf16.msra.mxu0 0
      %1259 = vmatprep.subr.bf16.mxu0 0
      %1260 = vmatpush2.bf16.msra.mxu0 0
      %1261 = vmatprep.subr.bf16.mxu0 0
      %1262 = vmatpush2.bf16.msra.mxu0 0
      %1263 = vmatprep.subr.bf16.mxu0 0
      %1264 = vmatpush2.bf16.msra.mxu0 0
      %1265 = vmatprep.subr.bf16.mxu0 0
      %1266 = vmatpush2.bf16.msra.mxu0 0
      %1267 = vmatprep.subr.bf16.mxu0 0
      %1268 = vmatpush2.bf16.msra.mxu0 0
      %1269 = vmatprep.subr.bf16.mxu0 0
      %1270 = vmatpush2.bf16.msra.mxu0 0
      %1271 = vmatprep.subr.bf16.mxu0 0
      %1272 = vmatpush2.bf16.msra.mxu0 0
      %1273 = vmatprep.mubr.bf16.mxu0 0
      %1274 = vmatmul.mubr.bf16.gmra.mxu0 %v1227
      %v1275 = vpop.f32.mrf.mxu0
      %v1276 = vadd.f32 0.0, %v1275
      %v1277 = vpop.f32.mrf.mxu0
      %v1278 = vpop.f32.mrf.mxu0
      %v1279 = vadd.f32 0.0, %v1278
      %v1280 = vpop.f32.mrf.mxu0
      %1281 = vmatprep.mubr.bf16.mxu0 0
      %1282 = vmatmul.mubr.bf16.gmra.mxu0 %v1230
      %v1283 = vpop.f32.mrf.mxu0
      %v1284 = vadd.f32 0.0, %v1283
      %v1285 = vpop.f32.mrf.mxu0
      %v1286 = vpop.f32.mrf.mxu0
      %v1287 = vadd.f32 0.0, %v1286
      %v1288 = vpop.f32.mrf.mxu0
      %1289 = vmatprep.mubr.bf16.mxu0 0
      %1290 = vmatmul.mubr.bf16.gmra.mxu0 %v1233
      %v1291 = vpop.f32.mrf.mxu0
      %v1292 = vadd.f32 0.0, %v1291
      %v1293 = vpop.f32.mrf.mxu0
      %v1294 = vpop.f32.mrf.mxu0
      %v1295 = vadd.f32 0.0, %v1294
      %v1296 = vpop.f32.mrf.mxu0
      %1297 = vmatprep.mubr.bf16.mxu0 0
      %1298 = vmatmul.mubr.bf16.gmra.mxu0 %v1236
      %v1299 = vpop.f32.mrf.mxu0
      %v1300 = vadd.f32 0.0, %v1299
      %v1301 = vpop.f32.mrf.mxu0
      %v1302 = vpop.f32.mrf.mxu0
      %v1303 = vadd.f32 0.0, %v1302
      %v1304 = vpop.f32.mrf.mxu0
      %1305 = vdwg.mxu0
      %v1306 = vadd.f32 %v1208, %v1276
      %v1307 = vadd.f32 %v1209, %v1279
      %v1308 = vadd.f32 %v1210, %v1284
      %v1309 = vadd.f32 %v1211, %v1287
      %v1310 = vadd.f32 %v1212, %v1292
      %v1311 = vadd.f32 %v1213, %v1295
      %v1312 = vadd.f32 %v1214, %v1300
      %v1313 = vadd.f32 %v1215, %v1303
      %v1314 = vld [vmem:[%s1097] sm:$0xf]
      %v1315 = vld [vmem:[%s1097 + $0x4] sm:$0x1]
      %v1316 = vld [vmem:[%s1097 + $0x10] sm:$0xf]
      %v1317 = vld [vmem:[%s1097 + $0x14] sm:$0x1]
      %v1318 = vld [vmem:[%s1097 + $0x20] sm:$0xf]
      %v1319 = vld [vmem:[%s1097 + $0x24] sm:$0x1]
      %v1320 = vld [vmem:[%s1097 + $0x30] sm:$0xf]
      %v1321 = vld [vmem:[%s1097 + $0x34] sm:$0x1]
      %v1322 = vld [vmem:[%s1097 + $0x40] sm:$0xf]
      %v1323 = vld [vmem:[%s1097 + $0x44] sm:$0x1]
      %v1324 = vld [vmem:[%s1097 + $0x50] sm:$0xf]
      %v1325 = vld [vmem:[%s1097 + $0x54] sm:$0x1]
      %v1326 = vld [vmem:[%s1097 + $0x60] sm:$0xf]
      %v1327 = vld [vmem:[%s1097 + $0x64] sm:$0x1]
      %v1328 = vld [vmem:[%s1097 + $0x70] sm:$0xf]
      %v1329 = vld [vmem:[%s1097 + $0x74] sm:$0x1]
      %v1331 = vshrl.u32 %v1314, 16
      %v1333 = vrot.slane %v1331, 4
      %v1334 = vshll.u32 %v1314, 16
      %v1336 = vrot.slane %v1334, 5
      %v1337 = vor.u32 %v1333, %v1336
      %v1338 = vrot.slane %v1337, 4
      %v1340 = vshll.u32 %v1315, 16
      %v1342 = vrot.slane %v1340, 5
      %v1343 = vsel %vm435, %v1338, %v1342
      %v1345 = vshrl.u32 %v1316, 16
      %v1347 = vrot.slane %v1345, 4
      %v1348 = vshll.u32 %v1316, 16
      %v1350 = vrot.slane %v1348, 5
      %v1351 = vor.u32 %v1347, %v1350
      %v1352 = vrot.slane %v1351, 4
      %v1354 = vshll.u32 %v1317, 16
      %v1356 = vrot.slane %v1354, 5
      %v1357 = vsel %vm435, %v1352, %v1356
      %v1359 = vshrl.u32 %v1318, 16
      %v1361 = vrot.slane %v1359, 4
      %v1362 = vshll.u32 %v1318, 16
      %v1364 = vrot.slane %v1362, 5
      %v1365 = vor.u32 %v1361, %v1364
      %v1366 = vrot.slane %v1365, 4
      %v1368 = vshll.u32 %v1319, 16
      %v1370 = vrot.slane %v1368, 5
      %v1371 = vsel %vm435, %v1366, %v1370
      %v1373 = vshrl.u32 %v1320, 16
      %v1375 = vrot.slane %v1373, 4
      %v1376 = vshll.u32 %v1320, 16
      %v1378 = vrot.slane %v1376, 5
      %v1379 = vor.u32 %v1375, %v1378
      %v1380 = vrot.slane %v1379, 4
      %v1382 = vshll.u32 %v1321, 16
      %v1384 = vrot.slane %v1382, 5
      %v1385 = vsel %vm435, %v1380, %v1384
      %v1387 = vshrl.u32 %v1322, 16
      %v1389 = vrot.slane %v1387, 4
      %v1390 = vshll.u32 %v1322, 16
      %v1392 = vrot.slane %v1390, 5
      %v1393 = vor.u32 %v1389, %v1392
      %v1394 = vrot.slane %v1393, 4
      %v1396 = vshll.u32 %v1323, 16
      %v1398 = vrot.slane %v1396, 5
      %v1399 = vsel %vm435, %v1394, %v1398
      %v1401 = vshrl.u32 %v1324, 16
      %v1403 = vrot.slane %v1401, 4
      %v1404 = vshll.u32 %v1324, 16
      %v1406 = vrot.slane %v1404, 5
      %v1407 = vor.u32 %v1403, %v1406
      %v1408 = vrot.slane %v1407, 4
      %v1410 = vshll.u32 %v1325, 16
      %v1412 = vrot.slane %v1410, 5
      %v1413 = vsel %vm435, %v1408, %v1412
      %v1415 = vshrl.u32 %v1326, 16
      %v1417 = vrot.slane %v1415, 4
      %v1418 = vshll.u32 %v1326, 16
      %v1420 = vrot.slane %v1418, 5
      %v1421 = vor.u32 %v1417, %v1420
      %v1422 = vrot.slane %v1421, 4
      %v1424 = vshll.u32 %v1327, 16
      %v1426 = vrot.slane %v1424, 5
      %v1427 = vsel %vm435, %v1422, %v1426
      %v1429 = vshrl.u32 %v1328, 16
      %v1431 = vrot.slane %v1429, 4
      %v1432 = vshll.u32 %v1328, 16
      %v1434 = vrot.slane %v1432, 5
      %v1435 = vor.u32 %v1431, %v1434
      %v1436 = vrot.slane %v1435, 4
      %v1438 = vshll.u32 %v1329, 16
      %v1440 = vrot.slane %v1438, 5
      %v1441 = vsel %vm435, %v1436, %v1440
      %s1442 = scalar_lea.vmem %s1, 16
      %v1443 = vld [vmem:[%s1442] sm:$0x3]
      %v1444 = vunpack.c.l.b16 %v1343
      %v1445 = vunpack.c.l.b16 %v1357
      %v1446 = vunpack.c.l.b16 %v1371
      %v1447 = vunpack.c.l.b16 %v1385
      %v1448 = vunpack.c.l.b16 %v1399
      %v1449 = vunpack.c.l.b16 %v1413
      %v1450 = vunpack.c.l.b16 %v1427
      %v1451 = vunpack.c.l.b16 %v1441
      %v1452 = vpack.c.b16 %v1445, %v1444
      %v1453 = vpack.c.b16 %v1447, %v1446
      %v1454 = vpack.c.b16 %v1449, %v1448
      %v1455 = vpack.c.b16 %v1451, %v1450
      %v1457 = vsel %vm255, %v1452, 0
      %v1460 = vsel %vm255, %v1453, 0
      %v1463 = vsel %vm255, %v1454, 0
      %v1466 = vsel %vm255, %v1455, 0
      %v1469 = vsel %vm268, %v1443, 0
      %1471 = vmatprep.subr.bf16.mxu0 0
      %1472 = vmatpush1.bf16.msra.mxu0 0
      %1473 = vmatprep.subr.bf16.mxu0 0
      %1474 = vmatpush1.bf16.msra.mxu0 0
      %1475 = vmatprep.subr.bf16.mxu0 0
      %1476 = vmatpush1.bf16.msra.mxu0 0
      %1477 = vmatprep.subr.bf16.mxu0 0
      %1478 = vmatpush1.bf16.msra.mxu0 0
      %1479 = vmatprep.subr.bf16.mxu0 0
      %1480 = vmatpush1.bf16.msra.mxu0 0
      %1481 = vmatprep.subr.bf16.mxu0 0
      %1482 = vmatpush1.bf16.msra.mxu0 0
      %1483 = vmatprep.subr.bf16.mxu0 0
      %1484 = vmatpush1.bf16.msra.mxu0 0
      %1485 = vmatprep.subr.bf16.mxu0 0
      %1486 = vmatpush1.bf16.msra.mxu0 %v1469
      %1487 = vmatprep.subr.bf16.mxu0 0
      %1488 = vmatpush2.bf16.msra.mxu0 0
      %1489 = vmatprep.subr.bf16.mxu0 0
      %1490 = vmatpush2.bf16.msra.mxu0 0
      %1491 = vmatprep.subr.bf16.mxu0 0
      %1492 = vmatpush2.bf16.msra.mxu0 0
      %1493 = vmatprep.subr.bf16.mxu0 0
      %1494 = vmatpush2.bf16.msra.mxu0 0
      %1495 = vmatprep.subr.bf16.mxu0 0
      %1496 = vmatpush2.bf16.msra.mxu0 0
      %1497 = vmatprep.subr.bf16.mxu0 0
      %1498 = vmatpush2.bf16.msra.mxu0 0
      %1499 = vmatprep.subr.bf16.mxu0 0
      %1500 = vmatpush2.bf16.msra.mxu0 0
      %1501 = vmatprep.subr.bf16.mxu0 0
      %1502 = vmatpush2.bf16.msra.mxu0 0
      %1503 = vmatprep.mubr.bf16.mxu0 0
      %1504 = vmatmul.mubr.bf16.gmra.mxu0 %v1457
      %v1505 = vpop.f32.mrf.mxu0
      %v1506 = vadd.f32 0.0, %v1505
      %v1507 = vpop.f32.mrf.mxu0
      %v1508 = vpop.f32.mrf.mxu0
      %v1509 = vadd.f32 0.0, %v1508
      %v1510 = vpop.f32.mrf.mxu0
      %1511 = vmatprep.mubr.bf16.mxu0 0
      %1512 = vmatmul.mubr.bf16.gmra.mxu0 %v1460
      %v1513 = vpop.f32.mrf.mxu0
      %v1514 = vadd.f32 0.0, %v1513
      %v1515 = vpop.f32.mrf.mxu0
      %v1516 = vpop.f32.mrf.mxu0
      %v1517 = vadd.f32 0.0, %v1516
      %v1518 = vpop.f32.mrf.mxu0
      %1519 = vmatprep.mubr.bf16.mxu0 0
      %1520 = vmatmul.mubr.bf16.gmra.mxu0 %v1463
      %v1521 = vpop.f32.mrf.mxu0
      %v1522 = vadd.f32 0.0, %v1521
      %v1523 = vpop.f32.mrf.mxu0
      %v1524 = vpop.f32.mrf.mxu0
      %v1525 = vadd.f32 0.0, %v1524
      %v1526 = vpop.f32.mrf.mxu0
      %1527 = vmatprep.mubr.bf16.mxu0 0
      %1528 = vmatmul.mubr.bf16.gmra.mxu0 %v1466
      %v1529 = vpop.f32.mrf.mxu0
      %v1530 = vadd.f32 0.0, %v1529
      %v1531 = vpop.f32.mrf.mxu0
      %v1532 = vpop.f32.mrf.mxu0
      %v1533 = vadd.f32 0.0, %v1532
      %v1534 = vpop.f32.mrf.mxu0
      %1535 = vdwg.mxu0
      %v1536 = vadd.f32 %v1306, %v1506
      %v1537 = vadd.f32 %v1307, %v1509
      %v1538 = vadd.f32 %v1308, %v1514
      %v1539 = vadd.f32 %v1309, %v1517
      %v1540 = vadd.f32 %v1310, %v1522
      %v1541 = vadd.f32 %v1311, %v1525
      %v1542 = vadd.f32 %v1312, %v1530
      %v1543 = vadd.f32 %v1313, %v1533
      %v1544 = vpack.c.bf16 %v1537, %v1536
      %v1545 = vpack.c.bf16 %v1539, %v1538
      %v1546 = vpack.c.bf16 %v1541, %v1540
      %v1547 = vpack.c.bf16 %v1543, %v1542
      %v1552 = vunpack.c.l.b16 %v1544
      %v1553 = vunpack.c.h.b16 %v1544
      %v1554 = vunpack.c.l.b16 %v1545
      %v1555 = vunpack.c.h.b16 %v1545
      %v1556 = vunpack.c.l.b16 %v1546
      %v1557 = vunpack.c.h.b16 %v1546
      %v1558 = vunpack.c.l.b16 %v1547
      %v1559 = vunpack.c.h.b16 %v1547
      %v1560 = vpack.c.b16 %v1552, %v1552
      %v1561 = vpack.c.b16 %v1553, %v1553
      %v1562 = vpack.c.b16 %v1554, %v1554
      %v1563 = vpack.c.b16 %v1555, %v1555
      %v1564 = vpack.c.b16 %v1556, %v1556
      %v1565 = vpack.c.b16 %v1557, %v1557
      %v1566 = vpack.c.b16 %v1558, %v1558
      %v1567 = vpack.c.b16 %v1559, %v1559
      %1576 = vst [vmem:[%s208] sm:$0xf] %v1560
      %1577 = vst [vmem:[%s208 + $0x4] sm:$0xf] %v1561
      %1578 = vst [vmem:[%s208 + $0x8] sm:$0xf] %v1562
      %1579 = vst [vmem:[%s208 + $0xc] sm:$0xf] %v1563
      %1580 = vst [vmem:[%s208 + $0x10] sm:$0xf] %v1564
      %1581 = vst [vmem:[%s208 + $0x14] sm:$0xf] %v1565
      %1582 = vst [vmem:[%s208 + $0x18] sm:$0xf] %v1566
      %1583 = vst [vmem:[%s208 + $0x1c] sm:$0xf] %v1567
      %v1584 = vadd.f32 %v1536, %v1537
      %v1585 = vadd.f32 %v1584, %v1538
      %v1586 = vadd.f32 %v1585, %v1539
      %v1587 = vadd.f32 %v1586, %v1540
      %v1588 = vadd.f32 %v1587, %v1541
      %v1589 = vadd.f32 %v1588, %v1542
      %v1590 = vadd.f32 %v1589, %v1543
      %v1591 = vrot.slane %v1590, 4
      %v1592 = vadd.f32 %v1590, %v1591
      %v1593 = vrot.slane %v1592, 2
      %v1594 = vadd.f32 %v1592, %v1593
      %v1595 = vrot.slane %v1594, 1
      %v1596 = vadd.f32 %v1594, %v1595
      %1597 = vst [vmem:[%s211] sm:$0x1] %v1596
      %v1598 = vmul.f32 %v1536, %v1536
      %v1599 = vmul.f32 %v1537, %v1537
      %v1600 = vmul.f32 %v1538, %v1538
      %v1601 = vmul.f32 %v1539, %v1539
      %v1602 = vmul.f32 %v1540, %v1540
      %v1603 = vmul.f32 %v1541, %v1541
      %v1604 = vmul.f32 %v1542, %v1542
      %v1605 = vmul.f32 %v1543, %v1543
      %v1606 = vadd.f32 %v1598, %v1599
      %v1607 = vadd.f32 %v1606, %v1600
      %v1608 = vadd.f32 %v1607, %v1601
      %v1609 = vadd.f32 %v1608, %v1602
      %v1610 = vadd.f32 %v1609, %v1603
      %v1611 = vadd.f32 %v1610, %v1604
      %v1612 = vadd.f32 %v1611, %v1605
      %v1613 = vrot.slane %v1612, 4
      %v1614 = vadd.f32 %v1612, %v1613
      %v1615 = vrot.slane %v1614, 2
      %v1616 = vadd.f32 %v1614, %v1615
      %v1617 = vrot.slane %v1616, 1
      %v1618 = vadd.f32 %v1616, %v1617
      %1619 = vst [vmem:[%s214] sm:$0x1] %v1618
      %p1620 = scmp.lt.s32.totalorder %s16, 1
      %s1621 = scalar_select %p1620, %s16, 1
      %s1622 = smul.addr %s1621, 8
      %s1623 = smul.addr %s1622, 4
      %s1624 = scalar_lea.vmem %s2, %s1623
      %p1625 = scmp.lt.s32.totalorder %s16, 1
      %s1626 = scalar_select %p1625, %s16, 1
      %s1627 = scalar_lea.vmem %s3, %s1626
      %p1628 = scmp.lt.s32.totalorder %s16, 1
      %s1629 = scalar_select %p1628, %s16, 1
      %s1630 = scalar_lea.vmem %s4, %s1629
      // Predicated region
      $region29: #{basic_block_forward.6} parent=27 // pred_check
        %p1631 = pneg %p81
      $region30: #{basic_block_forward.6} parent=27 // pred_check_branch
        %1633 = sbr.rel (%p1631) target = $region32
      $region31: #{basic_block_forward.6} parent=27 // pred_region
        _
      $region32: #{basic_block_forward.6} parent=27 // pred_fallthru
        _
      // Predicated region
      $region33: #{basic_block_forward.6} parent=27 // pred_check
        %p1634 = pneg %p107
      $region34: #{basic_block_forward.6} parent=27 // pred_check_branch
        %1636 = sbr.rel (%p1634) target = $region36
      $region35: #{basic_block_forward.6} parent=27 // pred_region
        _
      $region36: #{basic_block_forward.6} parent=27 // pred_fallthru
        _
      // Predicated region
      $region37: #{basic_block_forward.6} parent=27 // pred_check
        %p1637 = pneg %p133
      $region38: #{basic_block_forward.6} parent=27 // pred_check_branch
        %1639 = sbr.rel (%p1637) target = $region40
      $region39: #{basic_block_forward.6} parent=27 // pred_region
        _
      $region40: #{basic_block_forward.6} parent=27 // pred_fallthru
        _
    $region28: #{basic_block_forward.6} parent=5 // pred_fallthru
      _
    %p1640 = scmp.le.s32.totalorder 2, %s11
    // Predicated region
    $region41: #{basic_block_forward.6} parent=5 // pred_check
      %p1641 = pneg %p1640
    $region42: #{basic_block_forward.6} parent=5 // pred_check_branch
      %1643 = sbr.rel (%p1641) target = $region44
    $region43: #{basic_block_forward.6} parent=5 // pred_region
      %s1644 = ssub.s32 %s11, 2
      // Predicated region
      $region45: #{basic_block_forward.6} parent=43 // pred_check
        %p1645 = pneg %p87
      $region46: #{basic_block_forward.6} parent=43 // pred_check_branch
        %1647 = sbr.rel (%p1645) target = $region48
      $region47: #{basic_block_forward.6} parent=43 // pred_region
        %p1648 = scmp.lt.s32.totalorder %s17, 1
        %s1649 = scalar_select %p1648, %s17, 1
        %s1650 = smul.addr %s1649, 8
        %s1651 = smul.addr %s1650, 4
        %s1652 = scalar_lea.vmem %s2, %s1651
      $region48: #{basic_block_forward.6} parent=43 // pred_fallthru
        _
      // Predicated region
      $region49: #{basic_block_forward.6} parent=43 // pred_check
        %p1653 = pneg %p113
      $region50: #{basic_block_forward.6} parent=43 // pred_check_branch
        %1655 = sbr.rel (%p1653) target = $region52
      $region51: #{basic_block_forward.6} parent=43 // pred_region
        %p1656 = scmp.lt.s32.totalorder %s17, 1
        %s1657 = scalar_select %p1656, %s17, 1
        %s1658 = scalar_lea.vmem %s3, %s1657
      $region52: #{basic_block_forward.6} parent=43 // pred_fallthru
        _
      // Predicated region
      $region53: #{basic_block_forward.6} parent=43 // pred_check
        %p1659 = pneg %p139
      $region54: #{basic_block_forward.6} parent=43 // pred_check_branch
        %1661 = sbr.rel (%p1659) target = $region56
      $region55: #{basic_block_forward.6} parent=43 // pred_region
        %p1662 = scmp.lt.s32.totalorder %s17, 1
        %s1663 = scalar_select %p1662, %s17, 1
        %s1664 = scalar_lea.vmem %s4, %s1663
      $region56: #{basic_block_forward.6} parent=43 // pred_fallthru
        _
    $region44: #{basic_block_forward.6} parent=5 // pred_fallthru
      _
  $region6: #{basic_block_forward.6} parent=0 // loop_footer
    %s15 = sadd.s32 1, %s11
  $region7: #{basic_block_forward.6} parent=0 // loop_footer_branch
    %10 = sbr.rel target = $region3
  $region8: #{basic_block_forward.6} parent=0 // loop_exit
    _

// kernel: basic_block_forward.11
$region0: #{basic_block_forward.11}
  #allocation0 [shape = 'u32[]', space=smem, size = 0x4, offset = 0x4, fixed_abs, tag = 'smem constant byte address 0x4 - core index']
  #allocation1 [shape = 'u32[144,128]{1,0:T(1,128)}', space=vmem, size = 0x12000, scoped, tag = 'internal scratch']
  %s0 = inlined_call_operand.vmem [shape: bf16[2,64,128], index: 0, kind: input, shape index: {}]
  %s1 = inlined_call_operand.vmem [shape: f32[2,1,128], index: 1, kind: input, shape index: {}]
  %s2 = inlined_call_operand.vmem [shape: f32[2,1,128], index: 2, kind: input, shape index: {}]
  %s3 = inlined_call_operand.vmem [shape: f32[1,128], index: 3, kind: input, shape index: {}]
  %s4 = inlined_call_operand.vmem [shape: f32[1,128], index: 4, kind: input, shape index: {}]
  %s5 = inlined_call_operand.vmem [shape: bf16[2,64,128], index: 5, kind: input, shape index: {}]
  %s6 = inlined_call_operand.vmem [shape: f32[2,64,128], index: 6, kind: output, shape index: {}]
  %s7 = sld [smem:[#allocation0]]
  $region57: #{basic_block_forward.11} parent=0
    _
  %s9 = ssub.s32 1, %s7
  %s10 = scalar_select 0, %s9, %s7
  loop: start=0, step=1, limit=4
  $region2: #{basic_block_forward.11} parent=0 // loop_pre_header
    _
  $region3: #{basic_block_forward.11} parent=0 // loop_header
    %s12 = sphi 0, %s16
    %p13 = scmp.ge.s32.totalorder %s12, 4
    %s22 = sphi 0, %s24
    %s25 = sphi 0, %s22
    %s26 = sphi 0, %s25
    %s42 = sphi 0, %s26
    %s46 = sphi 0, %s46
    %s48 = sphi 0, %s46
    %s49 = sphi 0, %s48
    %s63 = sphi 0, %s49
    %s67 = sphi 0, %s67
    %s69 = sphi 0, %s67
    %s70 = sphi 0, %s69
    %s84 = sphi 0, %s70
    %s88 = sphi 0, %s88
    %s90 = sphi 0, %s88
    %s91 = sphi 0, %s90
    %s105 = sphi 0, %s91
    %s109 = sphi 0, %s109
    %s111 = sphi 0, %s109
    %s112 = sphi 0, %s111
    %s126 = sphi 0, %s112
    %s132 = sphi 0, %s134
    %s135 = sphi 0, %s132
    %s136 = sphi 0, %s135
    %s152 = sphi 0, %s136
    %s158 = sphi 0, %s160
    %s161 = sphi 0, %s158
    %s162 = sphi 0, %s161
    %s178 = sphi 0, %s162
  $region4: #{basic_block_forward.11} parent=0 // loop_header_branch
    %15 = sbr.rel (%p13) target = $region8
  $region5: #{basic_block_forward.11} parent=0 // loop_body
    %s17 = ssub.s32 %s12, 1
    %s18 = ssub.s32 %s12, 2
    %s19 = sadd.s32 %s12, 1
    %s20 = ssub.s32 %s12, %s19
    %p21 = scmp.eq.s32.totalorder %s20, 0
    %s23 = sadd.s32 %s22, 1
    %s24 = scalar_select %p21, %s22, %s23
    %p27 = pneg %p21
    %p28 = scmp.eq.s32.totalorder %s12, 1
    %p29 = por %p27, %p28
    %p30 = scmp.ne.s32.totalorder %s22, %s25
    %p31 = scmp.eq.s32.totalorder %s12, 0
    %p32 = por %p30, %p31
    %p33 = scmp.ne.s32.totalorder %s22, %s25
    %p34 = scmp.eq.s32.totalorder %s17, 1
    %p35 = por %p33, %p34
    %p36 = scmp.ne.s32.totalorder %s25, %s26
    %p37 = scmp.eq.s32.totalorder %s17, 0
    %p38 = por %p36, %p37
    %p39 = scmp.ne.s32.totalorder %s25, %s26
    %p40 = scmp.eq.s32.totalorder %s18, 1
    %p41 = por %p39, %p40
    %p43 = scmp.ne.s32.totalorder %s26, %s42
    %p44 = scmp.eq.s32.totalorder %s18, 0
    %p45 = por %p43, %p44
    %s47 = sadd.s32 %s46, 1
    %p50 = scmp.eq.s32.totalorder %s12, 1
    %p51 = scmp.ne.s32.totalorder %s46, %s48
    %p52 = scmp.eq.s32.totalorder %s12, 0
    %p53 = por %p51, %p52
    %p54 = scmp.ne.s32.totalorder %s46, %s48
    %p55 = scmp.eq.s32.totalorder %s17, 1
    %p56 = por %p54, %p55
    %p57 = scmp.ne.s32.totalorder %s48, %s49
    %p58 = scmp.eq.s32.totalorder %s17, 0
    %p59 = por %p57, %p58
    %p60 = scmp.ne.s32.totalorder %s48, %s49
    %p61 = scmp.eq.s32.totalorder %s18, 1
    %p62 = por %p60, %p61
    %p64 = scmp.ne.s32.totalorder %s49, %s63
    %p65 = scmp.eq.s32.totalorder %s18, 0
    %p66 = por %p64, %p65
    %s68 = sadd.s32 %s67, 1
    %p71 = scmp.eq.s32.totalorder %s12, 1
    %p72 = scmp.ne.s32.totalorder %s67, %s69
    %p73 = scmp.eq.s32.totalorder %s12, 0
    %p74 = por %p72, %p73
    %p75 = scmp.ne.s32.totalorder %s67, %s69
    %p76 = scmp.eq.s32.totalorder %s17, 1
    %p77 = por %p75, %p76
    %p78 = scmp.ne.s32.totalorder %s69, %s70
    %p79 = scmp.eq.s32.totalorder %s17, 0
    %p80 = por %p78, %p79
    %p81 = scmp.ne.s32.totalorder %s69, %s70
    %p82 = scmp.eq.s32.totalorder %s18, 1
    %p83 = por %p81, %p82
    %p85 = scmp.ne.s32.totalorder %s70, %s84
    %p86 = scmp.eq.s32.totalorder %s18, 0
    %p87 = por %p85, %p86
    %s89 = sadd.s32 %s88, 1
    %p92 = scmp.eq.s32.totalorder %s12, 1
    %p93 = scmp.ne.s32.totalorder %s88, %s90
    %p94 = scmp.eq.s32.totalorder %s12, 0
    %p95 = por %p93, %p94
    %p96 = scmp.ne.s32.totalorder %s88, %s90
    %p97 = scmp.eq.s32.totalorder %s17, 1
    %p98 = por %p96, %p97
    %p99 = scmp.ne.s32.totalorder %s90, %s91
    %p100 = scmp.eq.s32.totalorder %s17, 0
    %p101 = por %p99, %p100
    %p102 = scmp.ne.s32.totalorder %s90, %s91
    %p103 = scmp.eq.s32.totalorder %s18, 1
    %p104 = por %p102, %p103
    %p106 = scmp.ne.s32.totalorder %s91, %s105
    %p107 = scmp.eq.s32.totalorder %s18, 0
    %p108 = por %p106, %p107
    %s110 = sadd.s32 %s109, 1
    %p113 = scmp.eq.s32.totalorder %s12, 1
    %p114 = scmp.ne.s32.totalorder %s109, %s111
    %p115 = scmp.eq.s32.totalorder %s12, 0
    %p116 = por %p114, %p115
    %p117 = scmp.ne.s32.totalorder %s109, %s111
    %p118 = scmp.eq.s32.totalorder %s17, 1
    %p119 = por %p117, %p118
    %p120 = scmp.ne.s32.totalorder %s111, %s112
    %p121 = scmp.eq.s32.totalorder %s17, 0
    %p122 = por %p120, %p121
    %p123 = scmp.ne.s32.totalorder %s111, %s112
    %p124 = scmp.eq.s32.totalorder %s18, 1
    %p125 = por %p123, %p124
    %p127 = scmp.ne.s32.totalorder %s112, %s126
    %p128 = scmp.eq.s32.totalorder %s18, 0
    %p129 = por %p127, %p128
    %s130 = ssub.s32 %s12, %s19
    %p131 = scmp.eq.s32.totalorder %s130, 0
    %s133 = sadd.s32 %s132, 1
    %s134 = scalar_select %p131, %s132, %s133
    %p137 = pneg %p131
    %p138 = scmp.eq.s32.totalorder %s12, 1
    %p139 = por %p137, %p138
    %p140 = scmp.ne.s32.totalorder %s132, %s135
    %p141 = scmp.eq.s32.totalorder %s12, 0
    %p142 = por %p140, %p141
    %p143 = scmp.ne.s32.totalorder %s132, %s135
    %p144 = scmp.eq.s32.totalorder %s17, 1
    %p145 = por %p143, %p144
    %p146 = scmp.ne.s32.totalorder %s135, %s136
    %p147 = scmp.eq.s32.totalorder %s17, 0
    %p148 = por %p146, %p147
    %p149 = scmp.ne.s32.totalorder %s135, %s136
    %p150 = scmp.eq.s32.totalorder %s18, 1
    %p151 = por %p149, %p150
    %p153 = scmp.ne.s32.totalorder %s136, %s152
    %p154 = scmp.eq.s32.totalorder %s18, 0
    %p155 = por %p153, %p154
    %s156 = ssub.s32 %s12, %s19
    %p157 = scmp.eq.s32.totalorder %s156, 0
    %s159 = sadd.s32 %s158, 1
    %s160 = scalar_select %p157, %s158, %s159
    %p163 = pneg %p157
    %p164 = scmp.eq.s32.totalorder %s12, 1
    %p165 = por %p163, %p164
    %p166 = scmp.ne.s32.totalorder %s158, %s161
    %p167 = scmp.eq.s32.totalorder %s12, 0
    %p168 = por %p166, %p167
    %p169 = scmp.ne.s32.totalorder %s158, %s161
    %p170 = scmp.eq.s32.totalorder %s17, 1
    %p171 = por %p169, %p170
    %p172 = scmp.ne.s32.totalorder %s161, %s162
    %p173 = scmp.eq.s32.totalorder %s17, 0
    %p174 = por %p172, %p173
    %p175 = scmp.ne.s32.totalorder %s161, %s162
    %p176 = scmp.eq.s32.totalorder %s18, 1
    %p177 = por %p175, %p176
    %p179 = scmp.ne.s32.totalorder %s162, %s178
    %p180 = scmp.eq.s32.totalorder %s18, 0
    %p181 = por %p179, %p180
    %p182 = scmp.le.s32.totalorder 1, %s12
    %p183 = scmp.lt.s32.totalorder %s12, 3
    %p184 = pnand %p182, %p183
    %p185 = pneg %p184
    // Predicated region
    $region9: #{basic_block_forward.11} parent=5 // pred_check
      _
    $region10: #{basic_block_forward.11} parent=5 // pred_check_branch
      %187 = sbr.rel (%p184) target = $region12
    $region11: #{basic_block_forward.11} parent=5 // pred_region
      %s188 = ssub.s32 %s12, 1
      // Predicated region
      $region13: #{basic_block_forward.11} parent=11 // pred_check
        %p189 = pneg %p59
      $region14: #{basic_block_forward.11} parent=11 // pred_check_branch
        %191 = sbr.rel (%p189) target = $region16
      $region15: #{basic_block_forward.11} parent=11 // pred_region
        _
      $region16: #{basic_block_forward.11} parent=11 // pred_fallthru
        _
      // Predicated region
      $region17: #{basic_block_forward.11} parent=11 // pred_check
        %p192 = pneg %p80
      $region18: #{basic_block_forward.11} parent=11 // pred_check_branch
        %194 = sbr.rel (%p192) target = $region20
      $region19: #{basic_block_forward.11} parent=11 // pred_region
        _
      $region20: #{basic_block_forward.11} parent=11 // pred_fallthru
        _
      // Predicated region
      $region21: #{basic_block_forward.11} parent=11 // pred_check
        %p195 = pneg %p101
      $region22: #{basic_block_forward.11} parent=11 // pred_check_branch
        %197 = sbr.rel (%p195) target = $region24
      $region23: #{basic_block_forward.11} parent=11 // pred_region
        _
      $region24: #{basic_block_forward.11} parent=11 // pred_fallthru
        _
      // Predicated region
      $region25: #{basic_block_forward.11} parent=11 // pred_check
        %p198 = pneg %p122
      $region26: #{basic_block_forward.11} parent=11 // pred_check_branch
        %200 = sbr.rel (%p198) target = $region28
      $region27: #{basic_block_forward.11} parent=11 // pred_region
        _
      $region28: #{basic_block_forward.11} parent=11 // pred_fallthru
        _
    $region12: #{basic_block_forward.11} parent=5 // pred_fallthru
      _
    %p201 = scmp.lt.s32.totalorder %s12, 2
    // Predicated region
    $region29: #{basic_block_forward.11} parent=5 // pred_check
      %p202 = pneg %p201
    $region30: #{basic_block_forward.11} parent=5 // pred_check_branch
      %204 = sbr.rel (%p202) target = $region32
    $region31: #{basic_block_forward.11} parent=5 // pred_region
      // Predicated region
      $region33: #{basic_block_forward.11} parent=31 // pred_check
        %p205 = pneg %p32
      $region34: #{basic_block_forward.11} parent=31 // pred_check_branch
        %207 = sbr.rel (%p205) target = $region36
      $region35: #{basic_block_forward.11} parent=31 // pred_region
        %p208 = scmp.lt.s32.totalorder %s12, 1
        %s209 = scalar_select %p208, %s12, 1
        %s210 = smul.addr %s209, 8
        %s211 = smul.addr %s210, 4
        %s212 = scalar_lea.vmem %s0, %s211
      $region36: #{basic_block_forward.11} parent=31 // pred_fallthru
        _
      // Predicated region
      $region37: #{basic_block_forward.11} parent=31 // pred_check
        %p213 = pneg %p142
      $region38: #{basic_block_forward.11} parent=31 // pred_check_branch
        %215 = sbr.rel (%p213) target = $region40
      $region39: #{basic_block_forward.11} parent=31 // pred_region
        %p216 = scmp.lt.s32.totalorder %s12, 1
        %s217 = scalar_select %p216, %s12, 1
        %s218 = smul.addr %s217, 8
        %s219 = smul.addr %s218, 4
        %s220 = scalar_lea.vmem %s5, %s219
      $region40: #{basic_block_forward.11} parent=31 // pred_fallthru
        _
    $region32: #{basic_block_forward.11} parent=5 // pred_fallthru
      _
    %p221 = scmp.le.s32.totalorder 1, %s12
    %p222 = scmp.lt.s32.totalorder %s12, 3
    %p223 = pnand %p221, %p222
    %p224 = pneg %p223
    // Predicated region
    $region41: #{basic_block_forward.11} parent=5 // pred_check
      _
    $region42: #{basic_block_forward.11} parent=5 // pred_check_branch
      %226 = sbr.rel (%p223) target = $region44
    $region43: #{basic_block_forward.11} parent=5 // pred_region
      %s227 = ssub.s32 %s12, 1
      %p228 = scmp.lt.s32.totalorder %s17, 1
      %s229 = scalar_select %p228, %s17, 1
      %s230 = smul.addr %s229, 8
      %s231 = smul.addr %s230, 4
      %s232 = scalar_lea.vmem %s0, %s231
      %p233 = pneg %p38
      %p234 = pneg %p35
      %p235 = pneg %p59
      %p236 = pneg %p56
      %p237 = pneg %p80
      %p238 = pneg %p77
      %p239 = pneg %p101
      %p240 = pneg %p98
      %p241 = pneg %p122
      %p242 = pneg %p119
      %p243 = scmp.lt.s32.totalorder %s17, 1
      %s244 = scalar_select %p243, %s17, 1
      %s245 = smul.addr %s244, 8
      %s246 = smul.addr %s245, 4
      %s247 = scalar_lea.vmem %s5, %s246
      %p248 = pneg %p148
      %p249 = pneg %p145
      %p250 = pneg %p174
      %p251 = pneg %p171
      %p252 = scmp.lt.s32.totalorder %s17, 1
      %s253 = scalar_select %p252, %s17, 1
      %s254 = smul.addr %s253, 8
      %s255 = smul.addr %s254, 8
      %s256 = scalar_lea.vmem %s6, %s255
      %p257 = scmp.lt.s32.totalorder %s17, 1
      %s258 = scalar_select %p257, %s17, 1
      %s259 = smul.addr %s258, 8
      %s260 = smul.addr %s259, 4
      %s261 = scalar_lea.vmem %s0, %s260
      %p262 = scmp.lt.s32.totalorder %s17, 1
      %s263 = scalar_select %p262, %s17, 1
      %s264 = smul.addr %s263, 8
      %s265 = smul.addr %s264, 4
      %s266 = scalar_lea.vmem %s5, %s265
      %p267 = scmp.lt.s32.totalorder %s17, 1
      %s268 = scalar_select %p267, %s17, 1
      %s269 = smul.addr %s268, 8
      %s270 = smul.addr %s269, 8
      %s271 = scalar_lea.vmem %s6, %s270
      %v272 = vld [vmem:[%s1] sm:$0x1]
      %v273 = vld [vmem:[%s1 + $0x1] sm:$0x1]
      %v274 = vld [vmem:[%s2] sm:$0x1]
      %v275 = vld [vmem:[%s2 + $0x1] sm:$0x1]
      %v276 = vld [vmem:[%s3] sm:$0x1]
      %v277 = vld [vmem:[%s4] sm:$0x1]
      %vm278 = vcmask 1040384
      %v279 = vsel %vm278, %v272, 0.0
      %v280 = vsel %vm278, %v273, 0.0
      %v281 = vadd.f32 %v279, %v280
      %v282 = vrcp.pop 128.0
      %v283 = vmul.f32 %v281, %v282
      %v284 = vsel %vm278, %v274, 0.0
      %v285 = vsel %vm278, %v275, 0.0
      %v286 = vadd.f32 %v284, %v285
      %v287 = vmul.f32 %v286, %v282
      %v288 = vmul.f32 %v283, %v283
      %v289 = vsub.f32 %v287, %v288
      %v290 = vmax.f32 %v289, 0.0
      %v291 = vadd.f32 %v290, 1e-05
      %v292 = vrsqrt.pop %v291
      %v293 = vmul.f32 %v276, %v292
      %v294 = vmul.f32 %v283, %v293
      %v295 = vsub.f32 %v277, %v294
      %v296 = vld [vmem:[%s261] sm:$0xf]
      %v297 = vld [vmem:[%s261 + $0x4] sm:$0xf]
      %v298 = vld [vmem:[%s261 + $0x8] sm:$0xf]
      %v299 = vld [vmem:[%s261 + $0xc] sm:$0xf]
      %v300 = vld [vmem:[%s261 + $0x10] sm:$0xf]
      %v301 = vld [vmem:[%s261 + $0x14] sm:$0xf]
      %v302 = vld [vmem:[%s261 + $0x18] sm:$0xf]
      %v303 = vld [vmem:[%s261 + $0x1c] sm:$0xf]
      %v304 = vunpack.c.l.bf16 %v296
      %v305 = vunpack.c.l.bf16 %v297
      %v306 = vunpack.c.l.bf16 %v298
      %v307 = vunpack.c.l.bf16 %v299
      %v308 = vunpack.c.l.bf16 %v300
      %v309 = vunpack.c.l.bf16 %v301
      %v310 = vunpack.c.l.bf16 %v302
      %v311 = vunpack.c.l.bf16 %v303
      %v313 = vlaneseq
      %v314 = vshrl.u32 %v313, 7
      %v315 = vsub.s32 0, %v314
      %v316 = vrot.slane %v293, %v315
      %v318 = vmul.f32 %v304, %v316
      %v319 = vmul.f32 %v305, %v316
      %v320 = vmul.f32 %v306, %v316
      %v321 = vmul.f32 %v307, %v316
      %v322 = vmul.f32 %v308, %v316
      %v323 = vmul.f32 %v309, %v316
      %v324 = vmul.f32 %v310, %v316
      %v325 = vmul.f32 %v311, %v316
      %v327 = vlaneseq
      %v328 = vshrl.u32 %v327, 7
      %v329 = vsub.s32 0, %v328
      %v330 = vrot.slane %v295, %v329
      %v332 = vadd.f32 %v318, %v330
      %v333 = vadd.f32 %v319, %v330
      %v334 = vadd.f32 %v320, %v330
      %v335 = vadd.f32 %v321, %v330
      %v336 = vadd.f32 %v322, %v330
      %v337 = vadd.f32 %v323, %v330
      %v338 = vadd.f32 %v324, %v330
      %v339 = vadd.f32 %v325, %v330
      %v340 = vld [vmem:[%s266] sm:$0xf]
      %v341 = vld [vmem:[%s266 + $0x4] sm:$0xf]
      %v342 = vld [vmem:[%s266 + $0x8] sm:$0xf]
      %v343 = vld [vmem:[%s266 + $0xc] sm:$0xf]
      %v344 = vld [vmem:[%s266 + $0x10] sm:$0xf]
      %v345 = vld [vmem:[%s266 + $0x14] sm:$0xf]
      %v346 = vld [vmem:[%s266 + $0x18] sm:$0xf]
      %v347 = vld [vmem:[%s266 + $0x1c] sm:$0xf]
      %v348 = vunpack.c.l.bf16 %v340
      %v349 = vunpack.c.l.bf16 %v341
      %v350 = vunpack.c.l.bf16 %v342
      %v351 = vunpack.c.l.bf16 %v343
      %v352 = vunpack.c.l.bf16 %v344
      %v353 = vunpack.c.l.bf16 %v345
      %v354 = vunpack.c.l.bf16 %v346
      %v355 = vunpack.c.l.bf16 %v347
      %v356 = vadd.f32 %v332, %v348
      %v357 = vadd.f32 %v333, %v349
      %v358 = vadd.f32 %v334, %v350
      %v359 = vadd.f32 %v335, %v351
      %v360 = vadd.f32 %v336, %v352
      %v361 = vadd.f32 %v337, %v353
      %v362 = vadd.f32 %v338, %v354
      %v363 = vadd.f32 %v339, %v355
      %v364 = vmax.f32 %v356, 0.0
      %v365 = vmax.f32 %v357, 0.0
      %v366 = vmax.f32 %v358, 0.0
      %v367 = vmax.f32 %v359, 0.0
      %v368 = vmax.f32 %v360, 0.0
      %v369 = vmax.f32 %v361, 0.0
      %v370 = vmax.f32 %v362, 0.0
      %v371 = vmax.f32 %v363, 0.0
      %372 = vst [vmem:[%s271] sm:$0xff] %v364
      %373 = vst [vmem:[%s271 + $0x8] sm:$0xff] %v365
      %374 = vst [vmem:[%s271 + $0x10] sm:$0xff] %v366
      %375 = vst [vmem:[%s271 + $0x18] sm:$0xff] %v367
      %376 = vst [vmem:[%s271 + $0x20] sm:$0xff] %v368
      %377 = vst [vmem:[%s271 + $0x28] sm:$0xff] %v369
      %378 = vst [vmem:[%s271 + $0x30] sm:$0xff] %v370
      %379 = vst [vmem:[%s271 + $0x38] sm:$0xff] %v371
      %p380 = scmp.lt.s32.totalorder %s17, 1
      %s381 = scalar_select %p380, %s17, 1
      %s382 = smul.addr %s381, 8
      %s383 = smul.addr %s382, 8
      %s384 = scalar_lea.vmem %s6, %s383
      // Predicated region
      $region45: #{basic_block_forward.11} parent=43 // pred_check
        %p385 = pneg %p171
      $region46: #{basic_block_forward.11} parent=43 // pred_check_branch
        %387 = sbr.rel (%p385) target = $region48
      $region47: #{basic_block_forward.11} parent=43 // pred_region
        _
      $region48: #{basic_block_forward.11} parent=43 // pred_fallthru
        _
    $region44: #{basic_block_forward.11} parent=5 // pred_fallthru
      _
    %p388 = scmp.le.s32.totalorder 2, %s12
    // Predicated region
    $region49: #{basic_block_forward.11} parent=5 // pred_check
      %p389 = pneg %p388
    $region50: #{basic_block_forward.11} parent=5 // pred_check_branch
      %391 = sbr.rel (%p389) target = $region52
    $region51: #{basic_block_forward.11} parent=5 // pred_region
      %s392 = ssub.s32 %s12, 2
      // Predicated region
      $region53: #{basic_block_forward.11} parent=51 // pred_check
        %p393 = pneg %p177
      $region54: #{basic_block_forward.11} parent=51 // pred_check_branch
        %395 = sbr.rel (%p393) target = $region56
      $region55: #{basic_block_forward.11} parent=51 // pred_region
        %p396 = scmp.lt.s32.totalorder %s18, 1
        %s397 = scalar_select %p396, %s18, 1
        %s398 = smul.addr %s397, 8
        %s399 = smul.addr %s398, 8
        %s400 = scalar_lea.vmem %s6, %s399
      $region56: #{basic_block_forward.11} parent=51 // pred_fallthru
        _
    $region52: #{basic_block_forward.11} parent=5 // pred_fallthru
      _
  $region6: #{basic_block_forward.11} parent=0 // loop_footer
    %s16 = sadd.s32 1, %s12
  $region7: #{basic_block_forward.11} parent=0 // loop_footer_branch
    %11 = sbr.rel target = $region3
  $region8: #{basic_block_forward.11} parent=0 // loop_exit
    _

// kernel: basic_block_forward.10
$region0: #{basic_block_forward.10}
  #allocation0 [shape = 'u32[]', space=smem, size = 0x4, offset = 0x4, fixed_abs, tag = 'smem constant byte address 0x4 - core index']
  #allocation1 [shape = 'u32[144,128]{1,0:T(1,128)}', space=vmem, size = 0x12000, scoped, tag = 'internal scratch']
  %s0 = inlined_call_operand.vmem [shape: bf16[2,10,1,10,128], index: 0, kind: input, shape index: {}]
  %s1 = inlined_call_operand.vmem [shape: bf16[9,128,128], index: 1, kind: input, shape index: {}]
  %s2 = inlined_call_operand.vmem [shape: bf16[2,64,128], index: 2, kind: output, shape index: {0}]
  %s3 = inlined_call_operand.vmem [shape: f32[2,1,128], index: 3, kind: output, shape index: {1}]
  %s4 = inlined_call_operand.vmem [shape: f32[2,1,128], index: 4, kind: output, shape index: {2}]
  %5 = xla_tuple %s2, %s3, %s4
  %s6 = sld [smem:[#allocation0]]
  $region57: #{basic_block_forward.10} parent=0
    _
  %s8 = ssub.s32 1, %s6
  %s9 = scalar_select 0, %s8, %s6
  loop: start=0, step=1, limit=4
  $region2: #{basic_block_forward.10} parent=0 // loop_pre_header
    _
  $region3: #{basic_block_forward.10} parent=0 // loop_header
    %s11 = sphi 0, %s15
    %p12 = scmp.ge.s32.totalorder %s11, 4
    %s21 = sphi 0, %s23
    %s24 = sphi 0, %s21
    %s25 = sphi 0, %s24
    %s41 = sphi 0, %s25
    %s45 = sphi 0, %s45
    %s47 = sphi 0, %s45
    %s48 = sphi 0, %s47
    %s62 = sphi 0, %s48
    %s68 = sphi 0, %s70
    %s71 = sphi 0, %s68
    %s72 = sphi 0, %s71
    %s88 = sphi 0, %s72
    %s94 = sphi 0, %s96
    %s97 = sphi 0, %s94
    %s98 = sphi 0, %s97
    %s114 = sphi 0, %s98
    %s120 = sphi 0, %s122
    %s123 = sphi 0, %s120
    %s124 = sphi 0, %s123
    %s140 = sphi 0, %s124
  $region4: #{basic_block_forward.10} parent=0 // loop_header_branch
    %14 = sbr.rel (%p12) target = $region8
  $region5: #{basic_block_forward.10} parent=0 // loop_body
    %s16 = ssub.s32 %s11, 1
    %s17 = ssub.s32 %s11, 2
    %s18 = sadd.s32 %s11, 1
    %s19 = ssub.s32 %s11, %s18
    %p20 = scmp.eq.s32.totalorder %s19, 0
    %s22 = sadd.s32 %s21, 1
    %s23 = scalar_select %p20, %s21, %s22
    %p26 = pneg %p20
    %p27 = scmp.eq.s32.totalorder %s11, 1
    %p28 = por %p26, %p27
    %p29 = scmp.ne.s32.totalorder %s21, %s24
    %p30 = scmp.eq.s32.totalorder %s11, 0
    %p31 = por %p29, %p30
    %p32 = scmp.ne.s32.totalorder %s21, %s24
    %p33 = scmp.eq.s32.totalorder %s16, 1
    %p34 = por %p32, %p33
    %p35 = scmp.ne.s32.totalorder %s24, %s25
    %p36 = scmp.eq.s32.totalorder %s16, 0
    %p37 = por %p35, %p36
    %p38 = scmp.ne.s32.totalorder %s24, %s25
    %p39 = scmp.eq.s32.totalorder %s17, 1
    %p40 = por %p38, %p39
    %p42 = scmp.ne.s32.totalorder %s25, %s41
    %p43 = scmp.eq.s32.totalorder %s17, 0
    %p44 = por %p42, %p43
    %s46 = sadd.s32 %s45, 1
    %p49 = scmp.eq.s32.totalorder %s11, 1
    %p50 = scmp.ne.s32.totalorder %s45, %s47
    %p51 = scmp.eq.s32.totalorder %s11, 0
    %p52 = por %p50, %p51
    %p53 = scmp.ne.s32.totalorder %s45, %s47
    %p54 = scmp.eq.s32.totalorder %s16, 1
    %p55 = por %p53, %p54
    %p56 = scmp.ne.s32.totalorder %s47, %s48
    %p57 = scmp.eq.s32.totalorder %s16, 0
    %p58 = por %p56, %p57
    %p59 = scmp.ne.s32.totalorder %s47, %s48
    %p60 = scmp.eq.s32.totalorder %s17, 1
    %p61 = por %p59, %p60
    %p63 = scmp.ne.s32.totalorder %s48, %s62
    %p64 = scmp.eq.s32.totalorder %s17, 0
    %p65 = por %p63, %p64
    %s66 = ssub.s32 %s11, %s18
    %p67 = scmp.eq.s32.totalorder %s66, 0
    %s69 = sadd.s32 %s68, 1
    %s70 = scalar_select %p67, %s68, %s69
    %p73 = pneg %p67
    %p74 = scmp.eq.s32.totalorder %s11, 1
    %p75 = por %p73, %p74
    %p76 = scmp.ne.s32.totalorder %s68, %s71
    %p77 = scmp.eq.s32.totalorder %s11, 0
    %p78 = por %p76, %p77
    %p79 = scmp.ne.s32.totalorder %s68, %s71
    %p80 = scmp.eq.s32.totalorder %s16, 1
    %p81 = por %p79, %p80
    %p82 = scmp.ne.s32.totalorder %s71, %s72
    %p83 = scmp.eq.s32.totalorder %s16, 0
    %p84 = por %p82, %p83
    %p85 = scmp.ne.s32.totalorder %s71, %s72
    %p86 = scmp.eq.s32.totalorder %s17, 1
    %p87 = por %p85, %p86
    %p89 = scmp.ne.s32.totalorder %s72, %s88
    %p90 = scmp.eq.s32.totalorder %s17, 0
    %p91 = por %p89, %p90
    %s92 = ssub.s32 %s11, %s18
    %p93 = scmp.eq.s32.totalorder %s92, 0
    %s95 = sadd.s32 %s94, 1
    %s96 = scalar_select %p93, %s94, %s95
    %p99 = pneg %p93
    %p100 = scmp.eq.s32.totalorder %s11, 1
    %p101 = por %p99, %p100
    %p102 = scmp.ne.s32.totalorder %s94, %s97
    %p103 = scmp.eq.s32.totalorder %s11, 0
    %p104 = por %p102, %p103
    %p105 = scmp.ne.s32.totalorder %s94, %s97
    %p106 = scmp.eq.s32.totalorder %s16, 1
    %p107 = por %p105, %p106
    %p108 = scmp.ne.s32.totalorder %s97, %s98
    %p109 = scmp.eq.s32.totalorder %s16, 0
    %p110 = por %p108, %p109
    %p111 = scmp.ne.s32.totalorder %s97, %s98
    %p112 = scmp.eq.s32.totalorder %s17, 1
    %p113 = por %p111, %p112
    %p115 = scmp.ne.s32.totalorder %s98, %s114
    %p116 = scmp.eq.s32.totalorder %s17, 0
    %p117 = por %p115, %p116
    %s118 = ssub.s32 %s11, %s18
    %p119 = scmp.eq.s32.totalorder %s118, 0
    %s121 = sadd.s32 %s120, 1
    %s122 = scalar_select %p119, %s120, %s121
    %p125 = pneg %p119
    %p126 = scmp.eq.s32.totalorder %s11, 1
    %p127 = por %p125, %p126
    %p128 = scmp.ne.s32.totalorder %s120, %s123
    %p129 = scmp.eq.s32.totalorder %s11, 0
    %p130 = por %p128, %p129
    %p131 = scmp.ne.s32.totalorder %s120, %s123
    %p132 = scmp.eq.s32.totalorder %s16, 1
    %p133 = por %p131, %p132
    %p134 = scmp.ne.s32.totalorder %s123, %s124
    %p135 = scmp.eq.s32.totalorder %s16, 0
    %p136 = por %p134, %p135
    %p137 = scmp.ne.s32.totalorder %s123, %s124
    %p138 = scmp.eq.s32.totalorder %s17, 1
    %p139 = por %p137, %p138
    %p141 = scmp.ne.s32.totalorder %s124, %s140
    %p142 = scmp.eq.s32.totalorder %s17, 0
    %p143 = por %p141, %p142
    %p144 = scmp.le.s32.totalorder 1, %s11
    %p145 = scmp.lt.s32.totalorder %s11, 3
    %p146 = pnand %p144, %p145
    %p147 = pneg %p146
    // Predicated region
    $region9: #{basic_block_forward.10} parent=5 // pred_check
      _
    $region10: #{basic_block_forward.10} parent=5 // pred_check_branch
      %149 = sbr.rel (%p146) target = $region12
    $region11: #{basic_block_forward.10} parent=5 // pred_region
      %s150 = ssub.s32 %s11, 1
      // Predicated region
      $region13: #{basic_block_forward.10} parent=11 // pred_check
        %p151 = pneg %p58
      $region14: #{basic_block_forward.10} parent=11 // pred_check_branch
        %153 = sbr.rel (%p151) target = $region16
      $region15: #{basic_block_forward.10} parent=11 // pred_region
        _
      $region16: #{basic_block_forward.10} parent=11 // pred_fallthru
        _
    $region12: #{basic_block_forward.10} parent=5 // pred_fallthru
      _
    %p154 = scmp.lt.s32.totalorder %s11, 2
    // Predicated region
    $region17: #{basic_block_forward.10} parent=5 // pred_check
      %p155 = pneg %p154
    $region18: #{basic_block_forward.10} parent=5 // pred_check_branch
      %157 = sbr.rel (%p155) target = $region20
    $region19: #{basic_block_forward.10} parent=5 // pred_region
      // Predicated region
      $region21: #{basic_block_forward.10} parent=19 // pred_check
        %p158 = pneg %p31
      $region22: #{basic_block_forward.10} parent=19 // pred_check_branch
        %160 = sbr.rel (%p158) target = $region24
      $region23: #{basic_block_forward.10} parent=19 // pred_region
        %p161 = scmp.lt.s32.totalorder %s11, 1
        %s162 = scalar_select %p161, %s11, 1
        %s163 = smul.addr %s162, 20
        %s164 = smul.addr %s163, 4
        %s165 = scalar_lea.vmem %s0, %s164
      $region24: #{basic_block_forward.10} parent=19 // pred_fallthru
        _
    $region20: #{basic_block_forward.10} parent=5 // pred_fallthru
      _
    %p166 = scmp.le.s32.totalorder 1, %s11
    %p167 = scmp.lt.s32.totalorder %s11, 3
    %p168 = pnand %p166, %p167
    %p169 = pneg %p168
    // Predicated region
    $region25: #{basic_block_forward.10} parent=5 // pred_check
      _
    $region26: #{basic_block_forward.10} parent=5 // pred_check_branch
      %171 = sbr.rel (%p168) target = $region28
    $region27: #{basic_block_forward.10} parent=5 // pred_region
      %s172 = ssub.s32 %s11, 1
      %p173 = scmp.lt.s32.totalorder %s16, 1
      %s174 = scalar_select %p173, %s16, 1
      %s175 = smul.addr %s174, 20
      %s176 = smul.addr %s175, 4
      %s177 = scalar_lea.vmem %s0, %s176
      %p178 = pneg %p37
      %p179 = pneg %p34
      %p180 = pneg %p58
      %p181 = pneg %p55
      %p182 = pneg %p84
      %p183 = pneg %p81
      %p184 = scmp.lt.s32.totalorder %s16, 1
      %s185 = scalar_select %p184, %s16, 1
      %s186 = smul.addr %s185, 8
      %s187 = smul.addr %s186, 4
      %s188 = scalar_lea.vmem %s2, %s187
      %p189 = pneg %p110
      %p190 = pneg %p107
      %p191 = scmp.lt.s32.totalorder %s16, 1
      %s192 = scalar_select %p191, %s16, 1
      %s193 = scalar_lea.vmem %s3, %s192
      %p194 = pneg %p136
      %p195 = pneg %p133
      %p196 = scmp.lt.s32.totalorder %s16, 1
      %s197 = scalar_select %p196, %s16, 1
      %s198 = scalar_lea.vmem %s4, %s197
      %p199 = scmp.lt.s32.totalorder %s16, 1
      %s200 = scalar_select %p199, %s16, 1
      %s201 = smul.addr %s200, 20
      %s202 = smul.addr %s201, 4
      %s203 = scalar_lea.vmem %s0, %s202
      %p204 = scmp.lt.s32.totalorder %s16, 1
      %s205 = scalar_select %p204, %s16, 1
      %s206 = smul.addr %s205, 8
      %s207 = smul.addr %s206, 4
      %s208 = scalar_lea.vmem %s2, %s207
      %p209 = scmp.lt.s32.totalorder %s16, 1
      %s210 = scalar_select %p209, %s16, 1
      %s211 = scalar_lea.vmem %s3, %s210
      %p212 = scmp.lt.s32.totalorder %s16, 1
      %s213 = scalar_select %p212, %s16, 1
      %s214 = scalar_lea.vmem %s4, %s213
      %v216 = vld [vmem:[%s203] sm:$0xf]
      %v217 = vld [vmem:[%s203 + $0x8] sm:$0xf]
      %v218 = vld [vmem:[%s203 + $0x10] sm:$0xf]
      %v219 = vld [vmem:[%s203 + $0x18] sm:$0xf]
      %v220 = vld [vmem:[%s203 + $0x20] sm:$0xf]
      %v221 = vld [vmem:[%s203 + $0x28] sm:$0xf]
      %v222 = vld [vmem:[%s203 + $0x30] sm:$0xf]
      %v223 = vld [vmem:[%s203 + $0x38] sm:$0xf]
      %v224 = vld [vmem:[%s1] sm:$0xf]
      %v225 = vld [vmem:[%s1 + $0x4] sm:$0xf]
      %v226 = vld [vmem:[%s1 + $0x8] sm:$0xf]
      %v227 = vld [vmem:[%s1 + $0xc] sm:$0xf]
      %v228 = vld [vmem:[%s1 + $0x10] sm:$0xf]
      %v229 = vld [vmem:[%s1 + $0x14] sm:$0xf]
      %v230 = vld [vmem:[%s1 + $0x18] sm:$0xf]
      %v231 = vld [vmem:[%s1 + $0x1c] sm:$0xf]
      %v232 = vld [vmem:[%s1 + $0x20] sm:$0xf]
      %v233 = vld [vmem:[%s1 + $0x24] sm:$0xf]
      %v234 = vld [vmem:[%s1 + $0x28] sm:$0xf]
      %v235 = vld [vmem:[%s1 + $0x2c] sm:$0xf]
      %v236 = vld [vmem:[%s1 + $0x30] sm:$0xf]
      %v237 = vld [vmem:[%s1 + $0x34] sm:$0xf]
      %v238 = vld [vmem:[%s1 + $0x38] sm:$0xf]
      %v239 = vld [vmem:[%s1 + $0x3c] sm:$0xf]
      %v240 = vld [vmem:[%s203 + $0x4] sm:$0x1]
      %v241 = vld [vmem:[%s203 + $0xc] sm:$0x1]
      %v242 = vld [vmem:[%s203 + $0x14] sm:$0x1]
      %v243 = vld [vmem:[%s203 + $0x1c] sm:$0x1]
      %v244 = vld [vmem:[%s203 + $0x24] sm:$0x1]
      %v245 = vld [vmem:[%s203 + $0x2c] sm:$0x1]
      %v246 = vld [vmem:[%s203 + $0x34] sm:$0x1]
      %v247 = vld [vmem:[%s203 + $0x3c] sm:$0x1]
      %vm248 = vsmask.f32 3328
      %vm249 = vsmask.f32 7440
      %vm250 = vmor %vm248, %vm249
      %v252 = vshrl.u32 %v216, 16
      %v254 = vrot.slane %v252, 4
      %v255 = vshll.u32 %v216, 16
      %v257 = vrot.slane %v255, 5
      %v258 = vor.u32 %v254, %v257
      %v259 = vrot.slane %v258, 4
      %v261 = vshll.u32 %v240, 16
      %v263 = vrot.slane %v261, 5
      %v264 = vsel %vm250, %v259, %v263
      %v266 = vshrl.u32 %v217, 16
      %v268 = vrot.slane %v266, 4
      %v269 = vshll.u32 %v217, 16
      %v271 = vrot.slane %v269, 5
      %v272 = vor.u32 %v268, %v271
      %v273 = vrot.slane %v272, 4
      %v275 = vshll.u32 %v241, 16
      %v277 = vrot.slane %v275, 5
      %v278 = vsel %vm250, %v273, %v277
      %v280 = vshrl.u32 %v218, 16
      %v282 = vrot.slane %v280, 4
      %v283 = vshll.u32 %v218, 16
      %v285 = vrot.slane %v283, 5
      %v286 = vor.u32 %v282, %v285
      %v287 = vrot.slane %v286, 4
      %v289 = vshll.u32 %v242, 16
      %v291 = vrot.slane %v289, 5
      %v292 = vsel %vm250, %v287, %v291
      %v294 = vshrl.u32 %v219, 16
      %v296 = vrot.slane %v294, 4
      %v297 = vshll.u32 %v219, 16
      %v299 = vrot.slane %v297, 5
      %v300 = vor.u32 %v296, %v299
      %v301 = vrot.slane %v300, 4
      %v303 = vshll.u32 %v243, 16
      %v305 = vrot.slane %v303, 5
      %v306 = vsel %vm250, %v301, %v305
      %v308 = vshrl.u32 %v220, 16
      %v310 = vrot.slane %v308, 4
      %v311 = vshll.u32 %v220, 16
      %v313 = vrot.slane %v311, 5
      %v314 = vor.u32 %v310, %v313
      %v315 = vrot.slane %v314, 4
      %v317 = vshll.u32 %v244, 16
      %v319 = vrot.slane %v317, 5
      %v320 = vsel %vm250, %v315, %v319
      %v322 = vshrl.u32 %v221, 16
      %v324 = vrot.slane %v322, 4
      %v325 = vshll.u32 %v221, 16
      %v327 = vrot.slane %v325, 5
      %v328 = vor.u32 %v324, %v327
      %v329 = vrot.slane %v328, 4
      %v331 = vshll.u32 %v245, 16
      %v333 = vrot.slane %v331, 5
      %v334 = vsel %vm250, %v329, %v333
      %v336 = vshrl.u32 %v222, 16
      %v338 = vrot.slane %v336, 4
      %v339 = vshll.u32 %v222, 16
      %v341 = vrot.slane %v339, 5
      %v342 = vor.u32 %v338, %v341
      %v343 = vrot.slane %v342, 4
      %v345 = vshll.u32 %v246, 16
      %v347 = vrot.slane %v345, 5
      %v348 = vsel %vm250, %v343, %v347
      %v350 = vshrl.u32 %v223, 16
      %v352 = vrot.slane %v350, 4
      %v353 = vshll.u32 %v223, 16
      %v355 = vrot.slane %v353, 5
      %v356 = vor.u32 %v352, %v355
      %v357 = vrot.slane %v356, 4
      %v359 = vshll.u32 %v247, 16
      %v361 = vrot.slane %v359, 5
      %v362 = vsel %vm250, %v357, %v361
      %s363 = scalar_lea.vmem %s1, 64
      %v364 = vld [vmem:[%s363] sm:$0xf]
      %v365 = vld [vmem:[%s363 + $0x4] sm:$0xf]
      %v366 = vld [vmem:[%s363 + $0x8] sm:$0xf]
      %v367 = vld [vmem:[%s363 + $0xc] sm:$0xf]
      %v368 = vld [vmem:[%s363 + $0x10] sm:$0xf]
      %v369 = vld [vmem:[%s363 + $0x14] sm:$0xf]
      %v370 = vld [vmem:[%s363 + $0x18] sm:$0xf]
      %v371 = vld [vmem:[%s363 + $0x1c] sm:$0xf]
      %v372 = vld [vmem:[%s363 + $0x20] sm:$0xf]
      %v373 = vld [vmem:[%s363 + $0x24] sm:$0xf]
      %v374 = vld [vmem:[%s363 + $0x28] sm:$0xf]
      %v375 = vld [vmem:[%s363 + $0x2c] sm:$0xf]
      %v376 = vld [vmem:[%s363 + $0x30] sm:$0xf]
      %v377 = vld [vmem:[%s363 + $0x34] sm:$0xf]
      %v378 = vld [vmem:[%s363 + $0x38] sm:$0xf]
      %v379 = vld [vmem:[%s363 + $0x3c] sm:$0xf]
      %v380 = vunpack.c.l.b16 %v264
      %v381 = vunpack.c.l.b16 %v278
      %v382 = vunpack.c.l.b16 %v292
      %v383 = vunpack.c.l.b16 %v306
      %v384 = vunpack.c.l.b16 %v320
      %v385 = vunpack.c.l.b16 %v334
      %v386 = vunpack.c.l.b16 %v348
      %v387 = vunpack.c.l.b16 %v362
      %v388 = vpack.c.b16 %v381, %v380
      %v389 = vpack.c.b16 %v383, %v382
      %v390 = vpack.c.b16 %v385, %v384
      %v391 = vpack.c.b16 %v387, %v386
      %v412 = vunpack.c.l.b16 %v364
      %v413 = vunpack.c.l.b16 %v365
      %v414 = vunpack.c.l.b16 %v366
      %v415 = vunpack.c.l.b16 %v367
      %v416 = vunpack.c.l.b16 %v368
      %v417 = vunpack.c.l.b16 %v369
      %v418 = vunpack.c.l.b16 %v370
      %v419 = vunpack.c.l.b16 %v371
      %v420 = vunpack.c.l.b16 %v372
      %v421 = vunpack.c.l.b16 %v373
      %v422 = vunpack.c.l.b16 %v374
      %v423 = vunpack.c.l.b16 %v375
      %v424 = vunpack.c.l.b16 %v376
      %v425 = vunpack.c.l.b16 %v377
      %v426 = vunpack.c.l.b16 %v378
      %v427 = vunpack.c.l.b16 %v379
      %v428 = vpack.c.b16 %v413, %v412
      %v429 = vpack.c.b16 %v415, %v414
      %v430 = vpack.c.b16 %v417, %v416
      %v431 = vpack.c.b16 %v419, %v418
      %v432 = vpack.c.b16 %v421, %v420
      %v433 = vpack.c.b16 %v423, %v422
      %v434 = vpack.c.b16 %v425, %v424
      %v435 = vpack.c.b16 %v427, %v426
      %444 = vmatprep.subr.bf16.mxu0 0
      %445 = vmatpush1.bf16.msra.mxu0 %v435
      %446 = vmatprep.subr.bf16.mxu0 0
      %447 = vmatpush1.bf16.msra.mxu0 %v434
      %448 = vmatprep.subr.bf16.mxu0 0
      %449 = vmatpush1.bf16.msra.mxu0 %v433
      %450 = vmatprep.subr.bf16.mxu0 0
      %451 = vmatpush1.bf16.msra.mxu0 %v432
      %452 = vmatprep.subr.bf16.mxu0 0
      %453 = vmatpush1.bf16.msra.mxu0 %v431
      %454 = vmatprep.subr.bf16.mxu0 0
      %455 = vmatpush1.bf16.msra.mxu0 %v430
      %456 = vmatprep.subr.bf16.mxu0 0
      %457 = vmatpush1.bf16.msra.mxu0 %v429
      %458 = vmatprep.subr.bf16.mxu0 0
      %459 = vmatpush1.bf16.msra.mxu0 %v428
      %460 = vmatprep.subr.bf16.mxu0 0
      %461 = vmatpush2.bf16.msra.mxu0 0
      %462 = vmatprep.subr.bf16.mxu0 0
      %463 = vmatpush2.bf16.msra.mxu0 0
      %464 = vmatprep.subr.bf16.mxu0 0
      %465 = vmatpush2.bf16.msra.mxu0 0
      %466 = vmatprep.subr.bf16.mxu0 0
      %467 = vmatpush2.bf16.msra.mxu0 0
      %468 = vmatprep.subr.bf16.mxu0 0
      %469 = vmatpush2.bf16.msra.mxu0 0
      %470 = vmatprep.subr.bf16.mxu0 0
      %471 = vmatpush2.bf16.msra.mxu0 0
      %472 = vmatprep.subr.bf16.mxu0 0
      %473 = vmatpush2.bf16.msra.mxu0 0
      %474 = vmatprep.subr.bf16.mxu0 0
      %475 = vmatpush2.bf16.msra.mxu0 0
      %476 = vmatprep.mubr.bf16.mxu0 0
      %477 = vmatmul.mubr.bf16.gmra.mxu0 %v388
      %v478 = vpop.f32.mrf.mxu0
      %v479 = vadd.f32 0.0, %v478
      %v480 = vpop.f32.mrf.mxu0
      %v481 = vpop.f32.mrf.mxu0
      %v482 = vadd.f32 0.0, %v481
      %v483 = vpop.f32.mrf.mxu0
      %484 = vmatprep.mubr.bf16.mxu0 0
      %485 = vmatmul.mubr.bf16.gmra.mxu0 %v389
      %v486 = vpop.f32.mrf.mxu0
      %v487 = vadd.f32 0.0, %v486
      %v488 = vpop.f32.mrf.mxu0
      %v489 = vpop.f32.mrf.mxu0
      %v490 = vadd.f32 0.0, %v489
      %v491 = vpop.f32.mrf.mxu0
      %492 = vmatprep.mubr.bf16.mxu0 0
      %493 = vmatmul.mubr.bf16.gmra.mxu0 %v390
      %v494 = vpop.f32.mrf.mxu0
      %v495 = vadd.f32 0.0, %v494
      %v496 = vpop.f32.mrf.mxu0
      %v497 = vpop.f32.mrf.mxu0
      %v498 = vadd.f32 0.0, %v497
      %v499 = vpop.f32.mrf.mxu0
      %500 = vmatprep.mubr.bf16.mxu0 0
      %501 = vmatmul.mubr.bf16.gmra.mxu0 %v391
      %v502 = vpop.f32.mrf.mxu0
      %v503 = vadd.f32 0.0, %v502
      %v504 = vpop.f32.mrf.mxu0
      %v505 = vpop.f32.mrf.mxu0
      %v506 = vadd.f32 0.0, %v505
      %v507 = vpop.f32.mrf.mxu0
      %508 = vdwg.mxu0
      %v517 = vunpack.c.l.b16 %v216
      %v518 = vunpack.c.l.b16 %v217
      %v519 = vunpack.c.l.b16 %v218
      %v520 = vunpack.c.l.b16 %v219
      %v521 = vunpack.c.l.b16 %v220
      %v522 = vunpack.c.l.b16 %v221
      %v523 = vunpack.c.l.b16 %v222
      %v524 = vunpack.c.l.b16 %v223
      %v525 = vpack.c.b16 %v518, %v517
      %v526 = vpack.c.b16 %v520, %v519
      %v527 = vpack.c.b16 %v522, %v521
      %v528 = vpack.c.b16 %v524, %v523
      %v549 = vunpack.c.l.b16 %v224
      %v550 = vunpack.c.l.b16 %v225
      %v551 = vunpack.c.l.b16 %v226
      %v552 = vunpack.c.l.b16 %v227
      %v553 = vunpack.c.l.b16 %v228
      %v554 = vunpack.c.l.b16 %v229
      %v555 = vunpack.c.l.b16 %v230
      %v556 = vunpack.c.l.b16 %v231
      %v557 = vunpack.c.l.b16 %v232
      %v558 = vunpack.c.l.b16 %v233
      %v559 = vunpack.c.l.b16 %v234
      %v560 = vunpack.c.l.b16 %v235
      %v561 = vunpack.c.l.b16 %v236
      %v562 = vunpack.c.l.b16 %v237
      %v563 = vunpack.c.l.b16 %v238
      %v564 = vunpack.c.l.b16 %v239
      %v565 = vpack.c.b16 %v550, %v549
      %v566 = vpack.c.b16 %v552, %v551
      %v567 = vpack.c.b16 %v554, %v553
      %v568 = vpack.c.b16 %v556, %v555
      %v569 = vpack.c.b16 %v558, %v557
      %v570 = vpack.c.b16 %v560, %v559
      %v571 = vpack.c.b16 %v562, %v561
      %v572 = vpack.c.b16 %v564, %v563
      %581 = vmatprep.subr.bf16.mxu0 0
      %582 = vmatpush1.bf16.msra.mxu0 %v572
      %583 = vmatprep.subr.bf16.mxu0 0
      %584 = vmatpush1.bf16.msra.mxu0 %v571
      %585 = vmatprep.subr.bf16.mxu0 0
      %586 = vmatpush1.bf16.msra.mxu0 %v570
      %587 = vmatprep.subr.bf16.mxu0 0
      %588 = vmatpush1.bf16.msra.mxu0 %v569
      %589 = vmatprep.subr.bf16.mxu0 0
      %590 = vmatpush1.bf16.msra.mxu0 %v568
      %591 = vmatprep.subr.bf16.mxu0 0
      %592 = vmatpush1.bf16.msra.mxu0 %v567
      %593 = vmatprep.subr.bf16.mxu0 0
      %594 = vmatpush1.bf16.msra.mxu0 %v566
      %595 = vmatprep.subr.bf16.mxu0 0
      %596 = vmatpush1.bf16.msra.mxu0 %v565
      %597 = vmatprep.subr.bf16.mxu0 0
      %598 = vmatpush2.bf16.msra.mxu0 0
      %599 = vmatprep.subr.bf16.mxu0 0
      %600 = vmatpush2.bf16.msra.mxu0 0
      %601 = vmatprep.subr.bf16.mxu0 0
      %602 = vmatpush2.bf16.msra.mxu0 0
      %603 = vmatprep.subr.bf16.mxu0 0
      %604 = vmatpush2.bf16.msra.mxu0 0
      %605 = vmatprep.subr.bf16.mxu0 0
      %606 = vmatpush2.bf16.msra.mxu0 0
      %607 = vmatprep.subr.bf16.mxu0 0
      %608 = vmatpush2.bf16.msra.mxu0 0
      %609 = vmatprep.subr.bf16.mxu0 0
      %610 = vmatpush2.bf16.msra.mxu0 0
      %611 = vmatprep.subr.bf16.mxu0 0
      %612 = vmatpush2.bf16.msra.mxu0 0
      %613 = vmatprep.mubr.bf16.mxu0 0
      %614 = vmatmul.mubr.bf16.gmra.mxu0 %v525
      %v615 = vpop.f32.mrf.mxu0
      %v616 = vadd.f32 %v479, %v615
      %v617 = vpop.f32.mrf.mxu0
      %v618 = vpop.f32.mrf.mxu0
      %v619 = vadd.f32 %v482, %v618
      %v620 = vpop.f32.mrf.mxu0
      %621 = vmatprep.mubr.bf16.mxu0 0
      %622 = vmatmul.mubr.bf16.gmra.mxu0 %v526
      %v623 = vpop.f32.mrf.mxu0
      %v624 = vadd.f32 %v487, %v623
      %v625 = vpop.f32.mrf.mxu0
      %v626 = vpop.f32.mrf.mxu0
      %v627 = vadd.f32 %v490, %v626
      %v628 = vpop.f32.mrf.mxu0
      %629 = vmatprep.mubr.bf16.mxu0 0
      %630 = vmatmul.mubr.bf16.gmra.mxu0 %v527
      %v631 = vpop.f32.mrf.mxu0
      %v632 = vadd.f32 %v495, %v631
      %v633 = vpop.f32.mrf.mxu0
      %v634 = vpop.f32.mrf.mxu0
      %v635 = vadd.f32 %v498, %v634
      %v636 = vpop.f32.mrf.mxu0
      %637 = vmatprep.mubr.bf16.mxu0 0
      %638 = vmatmul.mubr.bf16.gmra.mxu0 %v528
      %v639 = vpop.f32.mrf.mxu0
      %v640 = vadd.f32 %v503, %v639
      %v641 = vpop.f32.mrf.mxu0
      %v642 = vpop.f32.mrf.mxu0
      %v643 = vadd.f32 %v506, %v642
      %v644 = vpop.f32.mrf.mxu0
      %645 = vdwg.mxu0
      %v646 = vld [vmem:[%s203] sm:$0xe]
      %v647 = vld [vmem:[%s203 + $0x8] sm:$0xe]
      %v648 = vld [vmem:[%s203 + $0x10] sm:$0xe]
      %v649 = vld [vmem:[%s203 + $0x18] sm:$0xe]
      %v650 = vld [vmem:[%s203 + $0x20] sm:$0xe]
      %v651 = vld [vmem:[%s203 + $0x28] sm:$0xe]
      %v652 = vld [vmem:[%s203 + $0x30] sm:$0xe]
      %v653 = vld [vmem:[%s203 + $0x38] sm:$0xe]
      %vm670 = vcmask 1042432
      %vm671 = vcmask 1046532
      %vm672 = vmor %vm670, %vm671
      %v673 = vrot.slane %v646, 5
      %v674 = vrot.slane %v673, 4
      %v675 = vrot.slane %v240, 5
      %v676 = vsel %vm672, %v674, %v675
      %v677 = vrot.slane %v647, 5
      %v678 = vrot.slane %v677, 4
      %v679 = vrot.slane %v241, 5
      %v680 = vsel %vm672, %v678, %v679
      %v681 = vrot.slane %v648, 5
      %v682 = vrot.slane %v681, 4
      %v683 = vrot.slane %v242, 5
      %v684 = vsel %vm672, %v682, %v683
      %v685 = vrot.slane %v649, 5
      %v686 = vrot.slane %v685, 4
      %v687 = vrot.slane %v243, 5
      %v688 = vsel %vm672, %v686, %v687
      %v689 = vrot.slane %v650, 5
      %v690 = vrot.slane %v689, 4
      %v691 = vrot.slane %v244, 5
      %v692 = vsel %vm672, %v690, %v691
      %v693 = vrot.slane %v651, 5
      %v694 = vrot.slane %v693, 4
      %v695 = vrot.slane %v245, 5
      %v696 = vsel %vm672, %v694, %v695
      %v697 = vrot.slane %v652, 5
      %v698 = vrot.slane %v697, 4
      %v699 = vrot.slane %v246, 5
      %v700 = vsel %vm672, %v698, %v699
      %v701 = vrot.slane %v653, 5
      %v702 = vrot.slane %v701, 4
      %v703 = vrot.slane %v247, 5
      %v704 = vsel %vm672, %v702, %v703
      %s705 = scalar_lea.vmem %s1, 128
      %v706 = vld [vmem:[%s705] sm:$0xf]
      %v707 = vld [vmem:[%s705 + $0x4] sm:$0xf]
      %v708 = vld [vmem:[%s705 + $0x8] sm:$0xf]
      %v709 = vld [vmem:[%s705 + $0xc] sm:$0xf]
      %v710 = vld [vmem:[%s705 + $0x10] sm:$0xf]
      %v711 = vld [vmem:[%s705 + $0x14] sm:$0xf]
      %v712 = vld [vmem:[%s705 + $0x18] sm:$0xf]
      %v713 = vld [vmem:[%s705 + $0x1c] sm:$0xf]
      %v714 = vld [vmem:[%s705 + $0x20] sm:$0xf]
      %v715 = vld [vmem:[%s705 + $0x24] sm:$0xf]
      %v716 = vld [vmem:[%s705 + $0x28] sm:$0xf]
      %v717 = vld [vmem:[%s705 + $0x2c] sm:$0xf]
      %v718 = vld [vmem:[%s705 + $0x30] sm:$0xf]
      %v719 = vld [vmem:[%s705 + $0x34] sm:$0xf]
      %v720 = vld [vmem:[%s705 + $0x38] sm:$0xf]
      %v721 = vld [vmem:[%s705 + $0x3c] sm:$0xf]
      %v722 = vunpack.c.l.b16 %v676
      %v723 = vunpack.c.l.b16 %v680
      %v724 = vunpack.c.l.b16 %v684
      %v725 = vunpack.c.l.b16 %v688
      %v726 = vunpack.c.l.b16 %v692
      %v727 = vunpack.c.l.b16 %v696
      %v728 = vunpack.c.l.b16 %v700
      %v729 = vunpack.c.l.b16 %v704
      %v730 = vpack.c.b16 %v723, %v722
      %v731 = vpack.c.b16 %v725, %v724
      %v732 = vpack.c.b16 %v727, %v726
      %v733 = vpack.c.b16 %v729, %v728
      %v754 = vunpack.c.l.b16 %v706
      %v755 = vunpack.c.l.b16 %v707
      %v756 = vunpack.c.l.b16 %v708
      %v757 = vunpack.c.l.b16 %v709
      %v758 = vunpack.c.l.b16 %v710
      %v759 = vunpack.c.l.b16 %v711
      %v760 = vunpack.c.l.b16 %v712
      %v761 = vunpack.c.l.b16 %v713
      %v762 = vunpack.c.l.b16 %v714
      %v763 = vunpack.c.l.b16 %v715
      %v764 = vunpack.c.l.b16 %v716
      %v765 = vunpack.c.l.b16 %v717
      %v766 = vunpack.c.l.b16 %v718
      %v767 = vunpack.c.l.b16 %v719
      %v768 = vunpack.c.l.b16 %v720
      %v769 = vunpack.c.l.b16 %v721
      %v770 = vpack.c.b16 %v755, %v754
      %v771 = vpack.c.b16 %v757, %v756
      %v772 = vpack.c.b16 %v759, %v758
      %v773 = vpack.c.b16 %v761, %v760
      %v774 = vpack.c.b16 %v763, %v762
      %v775 = vpack.c.b16 %v765, %v764
      %v776 = vpack.c.b16 %v767, %v766
      %v777 = vpack.c.b16 %v769, %v768
      %786 = vmatprep.subr.bf16.mxu0 0
      %787 = vmatpush1.bf16.msra.mxu0 %v777
      %788 = vmatprep.subr.bf16.mxu0 0
      %789 = vmatpush1.bf16.msra.mxu0 %v776
      %790 = vmatprep.subr.bf16.mxu0 0
      %791 = vmatpush1.bf16.msra.mxu0 %v775
      %792 = vmatprep.subr.bf16.mxu0 0
      %793 = vmatpush1.bf16.msra.mxu0 %v774
      %794 = vmatprep.subr.bf16.mxu0 0
      %795 = vmatpush1.bf16.msra.mxu0 %v773
      %796 = vmatprep.subr.bf16.mxu0 0
      %797 = vmatpush1.bf16.msra.mxu0 %v772
      %798 = vmatprep.subr.bf16.mxu0 0
      %799 = vmatpush1.bf16.msra.mxu0 %v771
      %800 = vmatprep.subr.bf16.mxu0 0
      %801 = vmatpush1.bf16.msra.mxu0 %v770
      %802 = vmatprep.subr.bf16.mxu0 0
      %803 = vmatpush2.bf16.msra.mxu0 0
      %804 = vmatprep.subr.bf16.mxu0 0
      %805 = vmatpush2.bf16.msra.mxu0 0
      %806 = vmatprep.subr.bf16.mxu0 0
      %807 = vmatpush2.bf16.msra.mxu0 0
      %808 = vmatprep.subr.bf16.mxu0 0
      %809 = vmatpush2.bf16.msra.mxu0 0
      %810 = vmatprep.subr.bf16.mxu0 0
      %811 = vmatpush2.bf16.msra.mxu0 0
      %812 = vmatprep.subr.bf16.mxu0 0
      %813 = vmatpush2.bf16.msra.mxu0 0
      %814 = vmatprep.subr.bf16.mxu0 0
      %815 = vmatpush2.bf16.msra.mxu0 0
      %816 = vmatprep.subr.bf16.mxu0 0
      %817 = vmatpush2.bf16.msra.mxu0 0
      %818 = vmatprep.mubr.bf16.mxu0 0
      %819 = vmatmul.mubr.bf16.gmra.mxu0 %v730
      %v820 = vpop.f32.mrf.mxu0
      %v821 = vadd.f32 0.0, %v820
      %v822 = vpop.f32.mrf.mxu0
      %v823 = vpop.f32.mrf.mxu0
      %v824 = vadd.f32 0.0, %v823
      %v825 = vpop.f32.mrf.mxu0
      %826 = vmatprep.mubr.bf16.mxu0 0
      %827 = vmatmul.mubr.bf16.gmra.mxu0 %v731
      %v828 = vpop.f32.mrf.mxu0
      %v829 = vadd.f32 0.0, %v828
      %v830 = vpop.f32.mrf.mxu0
      %v831 = vpop.f32.mrf.mxu0
      %v832 = vadd.f32 0.0, %v831
      %v833 = vpop.f32.mrf.mxu0
      %834 = vmatprep.mubr.bf16.mxu0 0
      %835 = vmatmul.mubr.bf16.gmra.mxu0 %v732
      %v836 = vpop.f32.mrf.mxu0
      %v837 = vadd.f32 0.0, %v836
      %v838 = vpop.f32.mrf.mxu0
      %v839 = vpop.f32.mrf.mxu0
      %v840 = vadd.f32 0.0, %v839
      %v841 = vpop.f32.mrf.mxu0
      %842 = vmatprep.mubr.bf16.mxu0 0
      %843 = vmatmul.mubr.bf16.gmra.mxu0 %v733
      %v844 = vpop.f32.mrf.mxu0
      %v845 = vadd.f32 0.0, %v844
      %v846 = vpop.f32.mrf.mxu0
      %v847 = vpop.f32.mrf.mxu0
      %v848 = vadd.f32 0.0, %v847
      %v849 = vpop.f32.mrf.mxu0
      %850 = vdwg.mxu0
      %v851 = vadd.f32 %v616, %v821
      %v852 = vadd.f32 %v619, %v824
      %v853 = vadd.f32 %v624, %v829
      %v854 = vadd.f32 %v627, %v832
      %v855 = vadd.f32 %v632, %v837
      %v856 = vadd.f32 %v635, %v840
      %v857 = vadd.f32 %v640, %v845
      %v858 = vadd.f32 %v643, %v848
      %s859 = scalar_lea.vmem %s203, 8
      %v860 = vld [vmem:[%s859] sm:$0xf]
      %v861 = vld [vmem:[%s859 + $0x8] sm:$0xf]
      %v862 = vld [vmem:[%s859 + $0x10] sm:$0xf]
      %v863 = vld [vmem:[%s859 + $0x18] sm:$0xf]
      %v864 = vld [vmem:[%s859 + $0x20] sm:$0xf]
      %v865 = vld [vmem:[%s859 + $0x28] sm:$0xf]
      %v866 = vld [vmem:[%s859 + $0x30] sm:$0xf]
      %v867 = vld [vmem:[%s859 + $0x38] sm:$0xf]
      %s868 = scalar_lea.vmem %s1, 192
      %v869 = vld [vmem:[%s868] sm:$0xf]
      %v870 = vld [vmem:[%s868 + $0x4] sm:$0xf]
      %v871 = vld [vmem:[%s868 + $0x8] sm:$0xf]
      %v872 = vld [vmem:[%s868 + $0xc] sm:$0xf]
      %v873 = vld [vmem:[%s868 + $0x10] sm:$0xf]
      %v874 = vld [vmem:[%s868 + $0x14] sm:$0xf]
      %v875 = vld [vmem:[%s868 + $0x18] sm:$0xf]
      %v876 = vld [vmem:[%s868 + $0x1c] sm:$0xf]
      %v877 = vld [vmem:[%s868 + $0x20] sm:$0xf]
      %v878 = vld [vmem:[%s868 + $0x24] sm:$0xf]
      %v879 = vld [vmem:[%s868 + $0x28] sm:$0xf]
      %v880 = vld [vmem:[%s868 + $0x2c] sm:$0xf]
      %v881 = vld [vmem:[%s868 + $0x30] sm:$0xf]
      %v882 = vld [vmem:[%s868 + $0x34] sm:$0xf]
      %v883 = vld [vmem:[%s868 + $0x38] sm:$0xf]
      %v884 = vld [vmem:[%s868 + $0x3c] sm:$0xf]
      %v893 = vunpack.c.l.b16 %v860
      %v894 = vunpack.c.l.b16 %v861
      %v895 = vunpack.c.l.b16 %v862
      %v896 = vunpack.c.l.b16 %v863
      %v897 = vunpack.c.l.b16 %v864
      %v898 = vunpack.c.l.b16 %v865
      %v899 = vunpack.c.l.b16 %v866
      %v900 = vunpack.c.l.b16 %v867
      %v901 = vpack.c.b16 %v894, %v893
      %v902 = vpack.c.b16 %v896, %v895
      %v903 = vpack.c.b16 %v898, %v897
      %v904 = vpack.c.b16 %v900, %v899
      %v925 = vunpack.c.l.b16 %v869
      %v926 = vunpack.c.l.b16 %v870
      %v927 = vunpack.c.l.b16 %v871
      %v928 = vunpack.c.l.b16 %v872
      %v929 = vunpack.c.l.b16 %v873
      %v930 = vunpack.c.l.b16 %v874
      %v931 = vunpack.c.l.b16 %v875
      %v932 = vunpack.c.l.b16 %v876
      %v933 = vunpack.c.l.b16 %v877
      %v934 = vunpack.c.l.b16 %v878
      %v935 = vunpack.c.l.b16 %v879
      %v936 = vunpack.c.l.b16 %v880
      %v937 = vunpack.c.l.b16 %v881
      %v938 = vunpack.c.l.b16 %v882
      %v939 = vunpack.c.l.b16 %v883
      %v940 = vunpack.c.l.b16 %v884
      %v941 = vpack.c.b16 %v926, %v925
      %v942 = vpack.c.b16 %v928, %v927
      %v943 = vpack.c.b16 %v930, %v929
      %v944 = vpack.c.b16 %v932, %v931
      %v945 = vpack.c.b16 %v934, %v933
      %v946 = vpack.c.b16 %v936, %v935
      %v947 = vpack.c.b16 %v938, %v937
      %v948 = vpack.c.b16 %v940, %v939
      %957 = vmatprep.subr.bf16.mxu0 0
      %958 = vmatpush1.bf16.msra.mxu0 %v948
      %959 = vmatprep.subr.bf16.mxu0 0
      %960 = vmatpush1.bf16.msra.mxu0 %v947
      %961 = vmatprep.subr.bf16.mxu0 0
      %962 = vmatpush1.bf16.msra.mxu0 %v946
      %963 = vmatprep.subr.bf16.mxu0 0
      %964 = vmatpush1.bf16.msra.mxu0 %v945
      %965 = vmatprep.subr.bf16.mxu0 0
      %966 = vmatpush1.bf16.msra.mxu0 %v944
      %967 = vmatprep.subr.bf16.mxu0 0
      %968 = vmatpush1.bf16.msra.mxu0 %v943
      %969 = vmatprep.subr.bf16.mxu0 0
      %970 = vmatpush1.bf16.msra.mxu0 %v942
      %971 = vmatprep.subr.bf16.mxu0 0
      %972 = vmatpush1.bf16.msra.mxu0 %v941
      %973 = vmatprep.subr.bf16.mxu0 0
      %974 = vmatpush2.bf16.msra.mxu0 0
      %975 = vmatprep.subr.bf16.mxu0 0
      %976 = vmatpush2.bf16.msra.mxu0 0
      %977 = vmatprep.subr.bf16.mxu0 0
      %978 = vmatpush2.bf16.msra.mxu0 0
      %979 = vmatprep.subr.bf16.mxu0 0
      %980 = vmatpush2.bf16.msra.mxu0 0
      %981 = vmatprep.subr.bf16.mxu0 0
      %982 = vmatpush2.bf16.msra.mxu0 0
      %983 = vmatprep.subr.bf16.mxu0 0
      %984 = vmatpush2.bf16.msra.mxu0 0
      %985 = vmatprep.subr.bf16.mxu0 0
      %986 = vmatpush2.bf16.msra.mxu0 0
      %987 = vmatprep.subr.bf16.mxu0 0
      %988 = vmatpush2.bf16.msra.mxu0 0
      %989 = vmatprep.mubr.bf16.mxu0 0
      %990 = vmatmul.mubr.bf16.gmra.mxu0 %v901
      %v991 = vpop.f32.mrf.mxu0
      %v992 = vadd.f32 0.0, %v991
      %v993 = vpop.f32.mrf.mxu0
      %v994 = vpop.f32.mrf.mxu0
      %v995 = vadd.f32 0.0, %v994
      %v996 = vpop.f32.mrf.mxu0
      %997 = vmatprep.mubr.bf16.mxu0 0
      %998 = vmatmul.mubr.bf16.gmra.mxu0 %v902
      %v999 = vpop.f32.mrf.mxu0
      %v1000 = vadd.f32 0.0, %v999
      %v1001 = vpop.f32.mrf.mxu0
      %v1002 = vpop.f32.mrf.mxu0
      %v1003 = vadd.f32 0.0, %v1002
      %v1004 = vpop.f32.mrf.mxu0
      %1005 = vmatprep.mubr.bf16.mxu0 0
      %1006 = vmatmul.mubr.bf16.gmra.mxu0 %v903
      %v1007 = vpop.f32.mrf.mxu0
      %v1008 = vadd.f32 0.0, %v1007
      %v1009 = vpop.f32.mrf.mxu0
      %v1010 = vpop.f32.mrf.mxu0
      %v1011 = vadd.f32 0.0, %v1010
      %v1012 = vpop.f32.mrf.mxu0
      %1013 = vmatprep.mubr.bf16.mxu0 0
      %1014 = vmatmul.mubr.bf16.gmra.mxu0 %v904
      %v1015 = vpop.f32.mrf.mxu0
      %v1016 = vadd.f32 0.0, %v1015
      %v1017 = vpop.f32.mrf.mxu0
      %v1018 = vpop.f32.mrf.mxu0
      %v1019 = vadd.f32 0.0, %v1018
      %v1020 = vpop.f32.mrf.mxu0
      %1021 = vdwg.mxu0
      %v1022 = vadd.f32 %v851, %v992
      %v1023 = vadd.f32 %v852, %v995
      %v1024 = vadd.f32 %v853, %v1000
      %v1025 = vadd.f32 %v854, %v1003
      %v1026 = vadd.f32 %v855, %v1008
      %v1027 = vadd.f32 %v856, %v1011
      %v1028 = vadd.f32 %v857, %v1016
      %v1029 = vadd.f32 %v858, %v1019
      %v1030 = vld [vmem:[%s859] sm:$0xf]
      %v1031 = vld [vmem:[%s859 + $0x4] sm:$0x1]
      %v1032 = vld [vmem:[%s859 + $0x8] sm:$0xf]
      %v1033 = vld [vmem:[%s859 + $0xc] sm:$0x1]
      %v1034 = vld [vmem:[%s859 + $0x10] sm:$0xf]
      %v1035 = vld [vmem:[%s859 + $0x14] sm:$0x1]
      %v1036 = vld [vmem:[%s859 + $0x18] sm:$0xf]
      %v1037 = vld [vmem:[%s859 + $0x1c] sm:$0x1]
      %v1038 = vld [vmem:[%s859 + $0x20] sm:$0xf]
      %v1039 = vld [vmem:[%s859 + $0x24] sm:$0x1]
      %v1040 = vld [vmem:[%s859 + $0x28] sm:$0xf]
      %v1041 = vld [vmem:[%s859 + $0x2c] sm:$0x1]
      %v1042 = vld [vmem:[%s859 + $0x30] sm:$0xf]
      %v1043 = vld [vmem:[%s859 + $0x34] sm:$0x1]
      %v1044 = vld [vmem:[%s859 + $0x38] sm:$0xf]
      %v1045 = vld [vmem:[%s859 + $0x3c] sm:$0x1]
      %v1047 = vshrl.u32 %v1030, 16
      %v1049 = vrot.slane %v1047, 4
      %v1050 = vshll.u32 %v1030, 16
      %v1052 = vrot.slane %v1050, 5
      %v1053 = vor.u32 %v1049, %v1052
      %v1054 = vrot.slane %v1053, 4
      %v1056 = vshll.u32 %v1031, 16
      %v1058 = vrot.slane %v1056, 5
      %v1059 = vsel %vm250, %v1054, %v1058
      %v1061 = vshrl.u32 %v1032, 16
      %v1063 = vrot.slane %v1061, 4
      %v1064 = vshll.u32 %v1032, 16
      %v1066 = vrot.slane %v1064, 5
      %v1067 = vor.u32 %v1063, %v1066
      %v1068 = vrot.slane %v1067, 4
      %v1070 = vshll.u32 %v1033, 16
      %v1072 = vrot.slane %v1070, 5
      %v1073 = vsel %vm250, %v1068, %v1072
      %v1075 = vshrl.u32 %v1034, 16
      %v1077 = vrot.slane %v1075, 4
      %v1078 = vshll.u32 %v1034, 16
      %v1080 = vrot.slane %v1078, 5
      %v1081 = vor.u32 %v1077, %v1080
      %v1082 = vrot.slane %v1081, 4
      %v1084 = vshll.u32 %v1035, 16
      %v1086 = vrot.slane %v1084, 5
      %v1087 = vsel %vm250, %v1082, %v1086
      %v1089 = vshrl.u32 %v1036, 16
      %v1091 = vrot.slane %v1089, 4
      %v1092 = vshll.u32 %v1036, 16
      %v1094 = vrot.slane %v1092, 5
      %v1095 = vor.u32 %v1091, %v1094
      %v1096 = vrot.slane %v1095, 4
      %v1098 = vshll.u32 %v1037, 16
      %v1100 = vrot.slane %v1098, 5
      %v1101 = vsel %vm250, %v1096, %v1100
      %v1103 = vshrl.u32 %v1038, 16
      %v1105 = vrot.slane %v1103, 4
      %v1106 = vshll.u32 %v1038, 16
      %v1108 = vrot.slane %v1106, 5
      %v1109 = vor.u32 %v1105, %v1108
      %v1110 = vrot.slane %v1109, 4
      %v1112 = vshll.u32 %v1039, 16
      %v1114 = vrot.slane %v1112, 5
      %v1115 = vsel %vm250, %v1110, %v1114
      %v1117 = vshrl.u32 %v1040, 16
      %v1119 = vrot.slane %v1117, 4
      %v1120 = vshll.u32 %v1040, 16
      %v1122 = vrot.slane %v1120, 5
      %v1123 = vor.u32 %v1119, %v1122
      %v1124 = vrot.slane %v1123, 4
      %v1126 = vshll.u32 %v1041, 16
      %v1128 = vrot.slane %v1126, 5
      %v1129 = vsel %vm250, %v1124, %v1128
      %v1131 = vshrl.u32 %v1042, 16
      %v1133 = vrot.slane %v1131, 4
      %v1134 = vshll.u32 %v1042, 16
      %v1136 = vrot.slane %v1134, 5
      %v1137 = vor.u32 %v1133, %v1136
      %v1138 = vrot.slane %v1137, 4
      %v1140 = vshll.u32 %v1043, 16
      %v1142 = vrot.slane %v1140, 5
      %v1143 = vsel %vm250, %v1138, %v1142
      %v1145 = vshrl.u32 %v1044, 16
      %v1147 = vrot.slane %v1145, 4
      %v1148 = vshll.u32 %v1044, 16
      %v1150 = vrot.slane %v1148, 5
      %v1151 = vor.u32 %v1147, %v1150
      %v1152 = vrot.slane %v1151, 4
      %v1154 = vshll.u32 %v1045, 16
      %v1156 = vrot.slane %v1154, 5
      %v1157 = vsel %vm250, %v1152, %v1156
      %s1158 = scalar_lea.vmem %s1, 256
      %v1159 = vld [vmem:[%s1158] sm:$0xf]
      %v1160 = vld [vmem:[%s1158 + $0x4] sm:$0xf]
      %v1161 = vld [vmem:[%s1158 + $0x8] sm:$0xf]
      %v1162 = vld [vmem:[%s1158 + $0xc] sm:$0xf]
      %v1163 = vld [vmem:[%s1158 + $0x10] sm:$0xf]
      %v1164 = vld [vmem:[%s1158 + $0x14] sm:$0xf]
      %v1165 = vld [vmem:[%s1158 + $0x18] sm:$0xf]
      %v1166 = vld [vmem:[%s1158 + $0x1c] sm:$0xf]
      %v1167 = vld [vmem:[%s1158 + $0x20] sm:$0xf]
      %v1168 = vld [vmem:[%s1158 + $0x24] sm:$0xf]
      %v1169 = vld [vmem:[%s1158 + $0x28] sm:$0xf]
      %v1170 = vld [vmem:[%s1158 + $0x2c] sm:$0xf]
      %v1171 = vld [vmem:[%s1158 + $0x30] sm:$0xf]
      %v1172 = vld [vmem:[%s1158 + $0x34] sm:$0xf]
      %v1173 = vld [vmem:[%s1158 + $0x38] sm:$0xf]
      %v1174 = vld [vmem:[%s1158 + $0x3c] sm:$0xf]
      %v1175 = vunpack.c.l.b16 %v1059
      %v1176 = vunpack.c.l.b16 %v1073
      %v1177 = vunpack.c.l.b16 %v1087
      %v1178 = vunpack.c.l.b16 %v1101
      %v1179 = vunpack.c.l.b16 %v1115
      %v1180 = vunpack.c.l.b16 %v1129
      %v1181 = vunpack.c.l.b16 %v1143
      %v1182 = vunpack.c.l.b16 %v1157
      %v1183 = vpack.c.b16 %v1176, %v1175
      %v1184 = vpack.c.b16 %v1178, %v1177
      %v1185 = vpack.c.b16 %v1180, %v1179
      %v1186 = vpack.c.b16 %v1182, %v1181
      %v1207 = vunpack.c.l.b16 %v1159
      %v1208 = vunpack.c.l.b16 %v1160
      %v1209 = vunpack.c.l.b16 %v1161
      %v1210 = vunpack.c.l.b16 %v1162
      %v1211 = vunpack.c.l.b16 %v1163
      %v1212 = vunpack.c.l.b16 %v1164
      %v1213 = vunpack.c.l.b16 %v1165
      %v1214 = vunpack.c.l.b16 %v1166
      %v1215 = vunpack.c.l.b16 %v1167
      %v1216 = vunpack.c.l.b16 %v1168
      %v1217 = vunpack.c.l.b16 %v1169
      %v1218 = vunpack.c.l.b16 %v1170
      %v1219 = vunpack.c.l.b16 %v1171
      %v1220 = vunpack.c.l.b16 %v1172
      %v1221 = vunpack.c.l.b16 %v1173
      %v1222 = vunpack.c.l.b16 %v1174
      %v1223 = vpack.c.b16 %v1208, %v1207
      %v1224 = vpack.c.b16 %v1210, %v1209
      %v1225 = vpack.c.b16 %v1212, %v1211
      %v1226 = vpack.c.b16 %v1214, %v1213
      %v1227 = vpack.c.b16 %v1216, %v1215
      %v1228 = vpack.c.b16 %v1218, %v1217
      %v1229 = vpack.c.b16 %v1220, %v1219
      %v1230 = vpack.c.b16 %v1222, %v1221
      %1239 = vmatprep.subr.bf16.mxu0 0
      %1240 = vmatpush1.bf16.msra.mxu0 %v1230
      %1241 = vmatprep.subr.bf16.mxu0 0
      %1242 = vmatpush1.bf16.msra.mxu0 %v1229
      %1243 = vmatprep.subr.bf16.mxu0 0
      %1244 = vmatpush1.bf16.msra.mxu0 %v1228
      %1245 = vmatprep.subr.bf16.mxu0 0
      %1246 = vmatpush1.bf16.msra.mxu0 %v1227
      %1247 = vmatprep.subr.bf16.mxu0 0
      %1248 = vmatpush1.bf16.msra.mxu0 %v1226
      %1249 = vmatprep.subr.bf16.mxu0 0
      %1250 = vmatpush1.bf16.msra.mxu0 %v1225
      %1251 = vmatprep.subr.bf16.mxu0 0
      %1252 = vmatpush1.bf16.msra.mxu0 %v1224
      %1253 = vmatprep.subr.bf16.mxu0 0
      %1254 = vmatpush1.bf16.msra.mxu0 %v1223
      %1255 = vmatprep.subr.bf16.mxu0 0
      %1256 = vmatpush2.bf16.msra.mxu0 0
      %1257 = vmatprep.subr.bf16.mxu0 0
      %1258 = vmatpush2.bf16.msra.mxu0 0
      %1259 = vmatprep.subr.bf16.mxu0 0
      %1260 = vmatpush2.bf16.msra.mxu0 0
      %1261 = vmatprep.subr.bf16.mxu0 0
      %1262 = vmatpush2.bf16.msra.mxu0 0
      %1263 = vmatprep.subr.bf16.mxu0 0
      %1264 = vmatpush2.bf16.msra.mxu0 0
      %1265 = vmatprep.subr.bf16.mxu0 0
      %1266 = vmatpush2.bf16.msra.mxu0 0
      %1267 = vmatprep.subr.bf16.mxu0 0
      %1268 = vmatpush2.bf16.msra.mxu0 0
      %1269 = vmatprep.subr.bf16.mxu0 0
      %1270 = vmatpush2.bf16.msra.mxu0 0
      %1271 = vmatprep.mubr.bf16.mxu0 0
      %1272 = vmatmul.mubr.bf16.gmra.mxu0 %v1183
      %v1273 = vpop.f32.mrf.mxu0
      %v1274 = vadd.f32 0.0, %v1273
      %v1275 = vpop.f32.mrf.mxu0
      %v1276 = vpop.f32.mrf.mxu0
      %v1277 = vadd.f32 0.0, %v1276
      %v1278 = vpop.f32.mrf.mxu0
      %1279 = vmatprep.mubr.bf16.mxu0 0
      %1280 = vmatmul.mubr.bf16.gmra.mxu0 %v1184
      %v1281 = vpop.f32.mrf.mxu0
      %v1282 = vadd.f32 0.0, %v1281
      %v1283 = vpop.f32.mrf.mxu0
      %v1284 = vpop.f32.mrf.mxu0
      %v1285 = vadd.f32 0.0, %v1284
      %v1286 = vpop.f32.mrf.mxu0
      %1287 = vmatprep.mubr.bf16.mxu0 0
      %1288 = vmatmul.mubr.bf16.gmra.mxu0 %v1185
      %v1289 = vpop.f32.mrf.mxu0
      %v1290 = vadd.f32 0.0, %v1289
      %v1291 = vpop.f32.mrf.mxu0
      %v1292 = vpop.f32.mrf.mxu0
      %v1293 = vadd.f32 0.0, %v1292
      %v1294 = vpop.f32.mrf.mxu0
      %1295 = vmatprep.mubr.bf16.mxu0 0
      %1296 = vmatmul.mubr.bf16.gmra.mxu0 %v1186
      %v1297 = vpop.f32.mrf.mxu0
      %v1298 = vadd.f32 0.0, %v1297
      %v1299 = vpop.f32.mrf.mxu0
      %v1300 = vpop.f32.mrf.mxu0
      %v1301 = vadd.f32 0.0, %v1300
      %v1302 = vpop.f32.mrf.mxu0
      %1303 = vdwg.mxu0
      %v1304 = vadd.f32 %v1022, %v1274
      %v1305 = vadd.f32 %v1023, %v1277
      %v1306 = vadd.f32 %v1024, %v1282
      %v1307 = vadd.f32 %v1025, %v1285
      %v1308 = vadd.f32 %v1026, %v1290
      %v1309 = vadd.f32 %v1027, %v1293
      %v1310 = vadd.f32 %v1028, %v1298
      %v1311 = vadd.f32 %v1029, %v1301
      %v1312 = vld [vmem:[%s859] sm:$0xe]
      %v1313 = vld [vmem:[%s859 + $0x8] sm:$0xe]
      %v1314 = vld [vmem:[%s859 + $0x10] sm:$0xe]
      %v1315 = vld [vmem:[%s859 + $0x18] sm:$0xe]
      %v1316 = vld [vmem:[%s859 + $0x20] sm:$0xe]
      %v1317 = vld [vmem:[%s859 + $0x28] sm:$0xe]
      %v1318 = vld [vmem:[%s859 + $0x30] sm:$0xe]
      %v1319 = vld [vmem:[%s859 + $0x38] sm:$0xe]
      %v1336 = vrot.slane %v1312, 5
      %v1337 = vrot.slane %v1336, 4
      %v1338 = vrot.slane %v1031, 5
      %v1339 = vsel %vm672, %v1337, %v1338
      %v1340 = vrot.slane %v1313, 5
      %v1341 = vrot.slane %v1340, 4
      %v1342 = vrot.slane %v1033, 5
      %v1343 = vsel %vm672, %v1341, %v1342
      %v1344 = vrot.slane %v1314, 5
      %v1345 = vrot.slane %v1344, 4
      %v1346 = vrot.slane %v1035, 5
      %v1347 = vsel %vm672, %v1345, %v1346
      %v1348 = vrot.slane %v1315, 5
      %v1349 = vrot.slane %v1348, 4
      %v1350 = vrot.slane %v1037, 5
      %v1351 = vsel %vm672, %v1349, %v1350
      %v1352 = vrot.slane %v1316, 5
      %v1353 = vrot.slane %v1352, 4
      %v1354 = vrot.slane %v1039, 5
      %v1355 = vsel %vm672, %v1353, %v1354
      %v1356 = vrot.slane %v1317, 5
      %v1357 = vrot.slane %v1356, 4
      %v1358 = vrot.slane %v1041, 5
      %v1359 = vsel %vm672, %v1357, %v1358
      %v1360 = vrot.slane %v1318, 5
      %v1361 = vrot.slane %v1360, 4
      %v1362 = vrot.slane %v1043, 5
      %v1363 = vsel %vm672, %v1361, %v1362
      %v1364 = vrot.slane %v1319, 5
      %v1365 = vrot.slane %v1364, 4
      %v1366 = vrot.slane %v1045, 5
      %v1367 = vsel %vm672, %v1365, %v1366
      %s1368 = scalar_lea.vmem %s1, 320
      %v1369 = vld [vmem:[%s1368] sm:$0xf]
      %v1370 = vld [vmem:[%s1368 + $0x4] sm:$0xf]
      %v1371 = vld [vmem:[%s1368 + $0x8] sm:$0xf]
      %v1372 = vld [vmem:[%s1368 + $0xc] sm:$0xf]
      %v1373 = vld [vmem:[%s1368 + $0x10] sm:$0xf]
      %v1374 = vld [vmem:[%s1368 + $0x14] sm:$0xf]
      %v1375 = vld [vmem:[%s1368 + $0x18] sm:$0xf]
      %v1376 = vld [vmem:[%s1368 + $0x1c] sm:$0xf]
      %v1377 = vld [vmem:[%s1368 + $0x20] sm:$0xf]
      %v1378 = vld [vmem:[%s1368 + $0x24] sm:$0xf]
      %v1379 = vld [vmem:[%s1368 + $0x28] sm:$0xf]
      %v1380 = vld [vmem:[%s1368 + $0x2c] sm:$0xf]
      %v1381 = vld [vmem:[%s1368 + $0x30] sm:$0xf]
      %v1382 = vld [vmem:[%s1368 + $0x34] sm:$0xf]
      %v1383 = vld [vmem:[%s1368 + $0x38] sm:$0xf]
      %v1384 = vld [vmem:[%s1368 + $0x3c] sm:$0xf]
      %v1385 = vunpack.c.l.b16 %v1339
      %v1386 = vunpack.c.l.b16 %v1343
      %v1387 = vunpack.c.l.b16 %v1347
      %v1388 = vunpack.c.l.b16 %v1351
      %v1389 = vunpack.c.l.b16 %v1355
      %v1390 = vunpack.c.l.b16 %v1359
      %v1391 = vunpack.c.l.b16 %v1363
      %v1392 = vunpack.c.l.b16 %v1367
      %v1393 = vpack.c.b16 %v1386, %v1385
      %v1394 = vpack.c.b16 %v1388, %v1387
      %v1395 = vpack.c.b16 %v1390, %v1389
      %v1396 = vpack.c.b16 %v1392, %v1391
      %v1417 = vunpack.c.l.b16 %v1369
      %v1418 = vunpack.c.l.b16 %v1370
      %v1419 = vunpack.c.l.b16 %v1371
      %v1420 = vunpack.c.l.b16 %v1372
      %v1421 = vunpack.c.l.b16 %v1373
      %v1422 = vunpack.c.l.b16 %v1374
      %v1423 = vunpack.c.l.b16 %v1375
      %v1424 = vunpack.c.l.b16 %v1376
      %v1425 = vunpack.c.l.b16 %v1377
      %v1426 = vunpack.c.l.b16 %v1378
      %v1427 = vunpack.c.l.b16 %v1379
      %v1428 = vunpack.c.l.b16 %v1380
      %v1429 = vunpack.c.l.b16 %v1381
      %v1430 = vunpack.c.l.b16 %v1382
      %v1431 = vunpack.c.l.b16 %v1383
      %v1432 = vunpack.c.l.b16 %v1384
      %v1433 = vpack.c.b16 %v1418, %v1417
      %v1434 = vpack.c.b16 %v1420, %v1419
      %v1435 = vpack.c.b16 %v1422, %v1421
      %v1436 = vpack.c.b16 %v1424, %v1423
      %v1437 = vpack.c.b16 %v1426, %v1425
      %v1438 = vpack.c.b16 %v1428, %v1427
      %v1439 = vpack.c.b16 %v1430, %v1429
      %v1440 = vpack.c.b16 %v1432, %v1431
      %1449 = vmatprep.subr.bf16.mxu0 0
      %1450 = vmatpush1.bf16.msra.mxu0 %v1440
      %1451 = vmatprep.subr.bf16.mxu0 0
      %1452 = vmatpush1.bf16.msra.mxu0 %v1439
      %1453 = vmatprep.subr.bf16.mxu0 0
      %1454 = vmatpush1.bf16.msra.mxu0 %v1438
      %1455 = vmatprep.subr.bf16.mxu0 0
      %1456 = vmatpush1.bf16.msra.mxu0 %v1437
      %1457 = vmatprep.subr.bf16.mxu0 0
      %1458 = vmatpush1.bf16.msra.mxu0 %v1436
      %1459 = vmatprep.subr.bf16.mxu0 0
      %1460 = vmatpush1.bf16.msra.mxu0 %v1435
      %1461 = vmatprep.subr.bf16.mxu0 0
      %1462 = vmatpush1.bf16.msra.mxu0 %v1434
      %1463 = vmatprep.subr.bf16.mxu0 0
      %1464 = vmatpush1.bf16.msra.mxu0 %v1433
      %1465 = vmatprep.subr.bf16.mxu0 0
      %1466 = vmatpush2.bf16.msra.mxu0 0
      %1467 = vmatprep.subr.bf16.mxu0 0
      %1468 = vmatpush2.bf16.msra.mxu0 0
      %1469 = vmatprep.subr.bf16.mxu0 0
      %1470 = vmatpush2.bf16.msra.mxu0 0
      %1471 = vmatprep.subr.bf16.mxu0 0
      %1472 = vmatpush2.bf16.msra.mxu0 0
      %1473 = vmatprep.subr.bf16.mxu0 0
      %1474 = vmatpush2.bf16.msra.mxu0 0
      %1475 = vmatprep.subr.bf16.mxu0 0
      %1476 = vmatpush2.bf16.msra.mxu0 0
      %1477 = vmatprep.subr.bf16.mxu0 0
      %1478 = vmatpush2.bf16.msra.mxu0 0
      %1479 = vmatprep.subr.bf16.mxu0 0
      %1480 = vmatpush2.bf16.msra.mxu0 0
      %1481 = vmatprep.mubr.bf16.mxu0 0
      %1482 = vmatmul.mubr.bf16.gmra.mxu0 %v1393
      %v1483 = vpop.f32.mrf.mxu0
      %v1484 = vadd.f32 0.0, %v1483
      %v1485 = vpop.f32.mrf.mxu0
      %v1486 = vpop.f32.mrf.mxu0
      %v1487 = vadd.f32 0.0, %v1486
      %v1488 = vpop.f32.mrf.mxu0
      %1489 = vmatprep.mubr.bf16.mxu0 0
      %1490 = vmatmul.mubr.bf16.gmra.mxu0 %v1394
      %v1491 = vpop.f32.mrf.mxu0
      %v1492 = vadd.f32 0.0, %v1491
      %v1493 = vpop.f32.mrf.mxu0
      %v1494 = vpop.f32.mrf.mxu0
      %v1495 = vadd.f32 0.0, %v1494
      %v1496 = vpop.f32.mrf.mxu0
      %1497 = vmatprep.mubr.bf16.mxu0 0
      %1498 = vmatmul.mubr.bf16.gmra.mxu0 %v1395
      %v1499 = vpop.f32.mrf.mxu0
      %v1500 = vadd.f32 0.0, %v1499
      %v1501 = vpop.f32.mrf.mxu0
      %v1502 = vpop.f32.mrf.mxu0
      %v1503 = vadd.f32 0.0, %v1502
      %v1504 = vpop.f32.mrf.mxu0
      %1505 = vmatprep.mubr.bf16.mxu0 0
      %1506 = vmatmul.mubr.bf16.gmra.mxu0 %v1396
      %v1507 = vpop.f32.mrf.mxu0
      %v1508 = vadd.f32 0.0, %v1507
      %v1509 = vpop.f32.mrf.mxu0
      %v1510 = vpop.f32.mrf.mxu0
      %v1511 = vadd.f32 0.0, %v1510
      %v1512 = vpop.f32.mrf.mxu0
      %1513 = vdwg.mxu0
      %v1514 = vadd.f32 %v1304, %v1484
      %v1515 = vadd.f32 %v1305, %v1487
      %v1516 = vadd.f32 %v1306, %v1492
      %v1517 = vadd.f32 %v1307, %v1495
      %v1518 = vadd.f32 %v1308, %v1500
      %v1519 = vadd.f32 %v1309, %v1503
      %v1520 = vadd.f32 %v1310, %v1508
      %v1521 = vadd.f32 %v1311, %v1511
      %s1522 = scalar_lea.vmem %s203, 16
      %v1523 = vld [vmem:[%s1522] sm:$0xf]
      %v1524 = vld [vmem:[%s1522 + $0x8] sm:$0xf]
      %v1525 = vld [vmem:[%s1522 + $0x10] sm:$0xf]
      %v1526 = vld [vmem:[%s1522 + $0x18] sm:$0xf]
      %v1527 = vld [vmem:[%s1522 + $0x20] sm:$0xf]
      %v1528 = vld [vmem:[%s1522 + $0x28] sm:$0xf]
      %v1529 = vld [vmem:[%s1522 + $0x30] sm:$0xf]
      %v1530 = vld [vmem:[%s1522 + $0x38] sm:$0xf]
      %s1531 = scalar_lea.vmem %s1, 384
      %v1532 = vld [vmem:[%s1531] sm:$0xf]
      %v1533 = vld [vmem:[%s1531 + $0x4] sm:$0xf]
      %v1534 = vld [vmem:[%s1531 + $0x8] sm:$0xf]
      %v1535 = vld [vmem:[%s1531 + $0xc] sm:$0xf]
      %v1536 = vld [vmem:[%s1531 + $0x10] sm:$0xf]
      %v1537 = vld [vmem:[%s1531 + $0x14] sm:$0xf]
      %v1538 = vld [vmem:[%s1531 + $0x18] sm:$0xf]
      %v1539 = vld [vmem:[%s1531 + $0x1c] sm:$0xf]
      %v1540 = vld [vmem:[%s1531 + $0x20] sm:$0xf]
      %v1541 = vld [vmem:[%s1531 + $0x24] sm:$0xf]
      %v1542 = vld [vmem:[%s1531 + $0x28] sm:$0xf]
      %v1543 = vld [vmem:[%s1531 + $0x2c] sm:$0xf]
      %v1544 = vld [vmem:[%s1531 + $0x30] sm:$0xf]
      %v1545 = vld [vmem:[%s1531 + $0x34] sm:$0xf]
      %v1546 = vld [vmem:[%s1531 + $0x38] sm:$0xf]
      %v1547 = vld [vmem:[%s1531 + $0x3c] sm:$0xf]
      %v1556 = vunpack.c.l.b16 %v1523
      %v1557 = vunpack.c.l.b16 %v1524
      %v1558 = vunpack.c.l.b16 %v1525
      %v1559 = vunpack.c.l.b16 %v1526
      %v1560 = vunpack.c.l.b16 %v1527
      %v1561 = vunpack.c.l.b16 %v1528
      %v1562 = vunpack.c.l.b16 %v1529
      %v1563 = vunpack.c.l.b16 %v1530
      %v1564 = vpack.c.b16 %v1557, %v1556
      %v1565 = vpack.c.b16 %v1559, %v1558
      %v1566 = vpack.c.b16 %v1561, %v1560
      %v1567 = vpack.c.b16 %v1563, %v1562
      %v1588 = vunpack.c.l.b16 %v1532
      %v1589 = vunpack.c.l.b16 %v1533
      %v1590 = vunpack.c.l.b16 %v1534
      %v1591 = vunpack.c.l.b16 %v1535
      %v1592 = vunpack.c.l.b16 %v1536
      %v1593 = vunpack.c.l.b16 %v1537
      %v1594 = vunpack.c.l.b16 %v1538
      %v1595 = vunpack.c.l.b16 %v1539
      %v1596 = vunpack.c.l.b16 %v1540
      %v1597 = vunpack.c.l.b16 %v1541
      %v1598 = vunpack.c.l.b16 %v1542
      %v1599 = vunpack.c.l.b16 %v1543
      %v1600 = vunpack.c.l.b16 %v1544
      %v1601 = vunpack.c.l.b16 %v1545
      %v1602 = vunpack.c.l.b16 %v1546
      %v1603 = vunpack.c.l.b16 %v1547
      %v1604 = vpack.c.b16 %v1589, %v1588
      %v1605 = vpack.c.b16 %v1591, %v1590
      %v1606 = vpack.c.b16 %v1593, %v1592
      %v1607 = vpack.c.b16 %v1595, %v1594
      %v1608 = vpack.c.b16 %v1597, %v1596
      %v1609 = vpack.c.b16 %v1599, %v1598
      %v1610 = vpack.c.b16 %v1601, %v1600
      %v1611 = vpack.c.b16 %v1603, %v1602
      %1620 = vmatprep.subr.bf16.mxu0 0
      %1621 = vmatpush1.bf16.msra.mxu0 %v1611
      %1622 = vmatprep.subr.bf16.mxu0 0
      %1623 = vmatpush1.bf16.msra.mxu0 %v1610
      %1624 = vmatprep.subr.bf16.mxu0 0
      %1625 = vmatpush1.bf16.msra.mxu0 %v1609
      %1626 = vmatprep.subr.bf16.mxu0 0
      %1627 = vmatpush1.bf16.msra.mxu0 %v1608
      %1628 = vmatprep.subr.bf16.mxu0 0
      %1629 = vmatpush1.bf16.msra.mxu0 %v1607
      %1630 = vmatprep.subr.bf16.mxu0 0
      %1631 = vmatpush1.bf16.msra.mxu0 %v1606
      %1632 = vmatprep.subr.bf16.mxu0 0
      %1633 = vmatpush1.bf16.msra.mxu0 %v1605
      %1634 = vmatprep.subr.bf16.mxu0 0
      %1635 = vmatpush1.bf16.msra.mxu0 %v1604
      %1636 = vmatprep.subr.bf16.mxu0 0
      %1637 = vmatpush2.bf16.msra.mxu0 0
      %1638 = vmatprep.subr.bf16.mxu0 0
      %1639 = vmatpush2.bf16.msra.mxu0 0
      %1640 = vmatprep.subr.bf16.mxu0 0
      %1641 = vmatpush2.bf16.msra.mxu0 0
      %1642 = vmatprep.subr.bf16.mxu0 0
      %1643 = vmatpush2.bf16.msra.mxu0 0
      %1644 = vmatprep.subr.bf16.mxu0 0
      %1645 = vmatpush2.bf16.msra.mxu0 0
      %1646 = vmatprep.subr.bf16.mxu0 0
      %1647 = vmatpush2.bf16.msra.mxu0 0
      %1648 = vmatprep.subr.bf16.mxu0 0
      %1649 = vmatpush2.bf16.msra.mxu0 0
      %1650 = vmatprep.subr.bf16.mxu0 0
      %1651 = vmatpush2.bf16.msra.mxu0 0
      %1652 = vmatprep.mubr.bf16.mxu0 0
      %1653 = vmatmul.mubr.bf16.gmra.mxu0 %v1564
      %v1654 = vpop.f32.mrf.mxu0
      %v1655 = vadd.f32 0.0, %v1654
      %v1656 = vpop.f32.mrf.mxu0
      %v1657 = vpop.f32.mrf.mxu0
      %v1658 = vadd.f32 0.0, %v1657
      %v1659 = vpop.f32.mrf.mxu0
      %1660 = vmatprep.mubr.bf16.mxu0 0
      %1661 = vmatmul.mubr.bf16.gmra.mxu0 %v1565
      %v1662 = vpop.f32.mrf.mxu0
      %v1663 = vadd.f32 0.0, %v1662
      %v1664 = vpop.f32.mrf.mxu0
      %v1665 = vpop.f32.mrf.mxu0
      %v1666 = vadd.f32 0.0, %v1665
      %v1667 = vpop.f32.mrf.mxu0
      %1668 = vmatprep.mubr.bf16.mxu0 0
      %1669 = vmatmul.mubr.bf16.gmra.mxu0 %v1566
      %v1670 = vpop.f32.mrf.mxu0
      %v1671 = vadd.f32 0.0, %v1670
      %v1672 = vpop.f32.mrf.mxu0
      %v1673 = vpop.f32.mrf.mxu0
      %v1674 = vadd.f32 0.0, %v1673
      %v1675 = vpop.f32.mrf.mxu0
      %1676 = vmatprep.mubr.bf16.mxu0 0
      %1677 = vmatmul.mubr.bf16.gmra.mxu0 %v1567
      %v1678 = vpop.f32.mrf.mxu0
      %v1679 = vadd.f32 0.0, %v1678
      %v1680 = vpop.f32.mrf.mxu0
      %v1681 = vpop.f32.mrf.mxu0
      %v1682 = vadd.f32 0.0, %v1681
      %v1683 = vpop.f32.mrf.mxu0
      %1684 = vdwg.mxu0
      %v1685 = vadd.f32 %v1514, %v1655
      %v1686 = vadd.f32 %v1515, %v1658
      %v1687 = vadd.f32 %v1516, %v1663
      %v1688 = vadd.f32 %v1517, %v1666
      %v1689 = vadd.f32 %v1518, %v1671
      %v1690 = vadd.f32 %v1519, %v1674
      %v1691 = vadd.f32 %v1520, %v1679
      %v1692 = vadd.f32 %v1521, %v1682
      %v1693 = vld [vmem:[%s1522] sm:$0xf]
      %v1694 = vld [vmem:[%s1522 + $0x4] sm:$0x1]
      %v1695 = vld [vmem:[%s1522 + $0x8] sm:$0xf]
      %v1696 = vld [vmem:[%s1522 + $0xc] sm:$0x1]
      %v1697 = vld [vmem:[%s1522 + $0x10] sm:$0xf]
      %v1698 = vld [vmem:[%s1522 + $0x14] sm:$0x1]
      %v1699 = vld [vmem:[%s1522 + $0x18] sm:$0xf]
      %v1700 = vld [vmem:[%s1522 + $0x1c] sm:$0x1]
      %v1701 = vld [vmem:[%s1522 + $0x20] sm:$0xf]
      %v1702 = vld [vmem:[%s1522 + $0x24] sm:$0x1]
      %v1703 = vld [vmem:[%s1522 + $0x28] sm:$0xf]
      %v1704 = vld [vmem:[%s1522 + $0x2c] sm:$0x1]
      %v1705 = vld [vmem:[%s1522 + $0x30] sm:$0xf]
      %v1706 = vld [vmem:[%s1522 + $0x34] sm:$0x1]
      %v1707 = vld [vmem:[%s1522 + $0x38] sm:$0xf]
      %v1708 = vld [vmem:[%s1522 + $0x3c] sm:$0x1]
      %v1710 = vshrl.u32 %v1693, 16
      %v1712 = vrot.slane %v1710, 4
      %v1713 = vshll.u32 %v1693, 16
      %v1715 = vrot.slane %v1713, 5
      %v1716 = vor.u32 %v1712, %v1715
      %v1717 = vrot.slane %v1716, 4
      %v1719 = vshll.u32 %v1694, 16
      %v1721 = vrot.slane %v1719, 5
      %v1722 = vsel %vm250, %v1717, %v1721
      %v1724 = vshrl.u32 %v1695, 16
      %v1726 = vrot.slane %v1724, 4
      %v1727 = vshll.u32 %v1695, 16
      %v1729 = vrot.slane %v1727, 5
      %v1730 = vor.u32 %v1726, %v1729
      %v1731 = vrot.slane %v1730, 4
      %v1733 = vshll.u32 %v1696, 16
      %v1735 = vrot.slane %v1733, 5
      %v1736 = vsel %vm250, %v1731, %v1735
      %v1738 = vshrl.u32 %v1697, 16
      %v1740 = vrot.slane %v1738, 4
      %v1741 = vshll.u32 %v1697, 16
      %v1743 = vrot.slane %v1741, 5
      %v1744 = vor.u32 %v1740, %v1743
      %v1745 = vrot.slane %v1744, 4
      %v1747 = vshll.u32 %v1698, 16
      %v1749 = vrot.slane %v1747, 5
      %v1750 = vsel %vm250, %v1745, %v1749
      %v1752 = vshrl.u32 %v1699, 16
      %v1754 = vrot.slane %v1752, 4
      %v1755 = vshll.u32 %v1699, 16
      %v1757 = vrot.slane %v1755, 5
      %v1758 = vor.u32 %v1754, %v1757
      %v1759 = vrot.slane %v1758, 4
      %v1761 = vshll.u32 %v1700, 16
      %v1763 = vrot.slane %v1761, 5
      %v1764 = vsel %vm250, %v1759, %v1763
      %v1766 = vshrl.u32 %v1701, 16
      %v1768 = vrot.slane %v1766, 4
      %v1769 = vshll.u32 %v1701, 16
      %v1771 = vrot.slane %v1769, 5
      %v1772 = vor.u32 %v1768, %v1771
      %v1773 = vrot.slane %v1772, 4
      %v1775 = vshll.u32 %v1702, 16
      %v1777 = vrot.slane %v1775, 5
      %v1778 = vsel %vm250, %v1773, %v1777
      %v1780 = vshrl.u32 %v1703, 16
      %v1782 = vrot.slane %v1780, 4
      %v1783 = vshll.u32 %v1703, 16
      %v1785 = vrot.slane %v1783, 5
      %v1786 = vor.u32 %v1782, %v1785
      %v1787 = vrot.slane %v1786, 4
      %v1789 = vshll.u32 %v1704, 16
      %v1791 = vrot.slane %v1789, 5
      %v1792 = vsel %vm250, %v1787, %v1791
      %v1794 = vshrl.u32 %v1705, 16
      %v1796 = vrot.slane %v1794, 4
      %v1797 = vshll.u32 %v1705, 16
      %v1799 = vrot.slane %v1797, 5
      %v1800 = vor.u32 %v1796, %v1799
      %v1801 = vrot.slane %v1800, 4
      %v1803 = vshll.u32 %v1706, 16
      %v1805 = vrot.slane %v1803, 5
      %v1806 = vsel %vm250, %v1801, %v1805
      %v1808 = vshrl.u32 %v1707, 16
      %v1810 = vrot.slane %v1808, 4
      %v1811 = vshll.u32 %v1707, 16
      %v1813 = vrot.slane %v1811, 5
      %v1814 = vor.u32 %v1810, %v1813
      %v1815 = vrot.slane %v1814, 4
      %v1817 = vshll.u32 %v1708, 16
      %v1819 = vrot.slane %v1817, 5
      %v1820 = vsel %vm250, %v1815, %v1819
      %s1821 = scalar_lea.vmem %s1, 448
      %v1822 = vld [vmem:[%s1821] sm:$0xf]
      %v1823 = vld [vmem:[%s1821 + $0x4] sm:$0xf]
      %v1824 = vld [vmem:[%s1821 + $0x8] sm:$0xf]
      %v1825 = vld [vmem:[%s1821 + $0xc] sm:$0xf]
      %v1826 = vld [vmem:[%s1821 + $0x10] sm:$0xf]
      %v1827 = vld [vmem:[%s1821 + $0x14] sm:$0xf]
      %v1828 = vld [vmem:[%s1821 + $0x18] sm:$0xf]
      %v1829 = vld [vmem:[%s1821 + $0x1c] sm:$0xf]
      %v1830 = vld [vmem:[%s1821 + $0x20] sm:$0xf]
      %v1831 = vld [vmem:[%s1821 + $0x24] sm:$0xf]
      %v1832 = vld [vmem:[%s1821 + $0x28] sm:$0xf]
      %v1833 = vld [vmem:[%s1821 + $0x2c] sm:$0xf]
      %v1834 = vld [vmem:[%s1821 + $0x30] sm:$0xf]
      %v1835 = vld [vmem:[%s1821 + $0x34] sm:$0xf]
      %v1836 = vld [vmem:[%s1821 + $0x38] sm:$0xf]
      %v1837 = vld [vmem:[%s1821 + $0x3c] sm:$0xf]
      %v1838 = vunpack.c.l.b16 %v1722
      %v1839 = vunpack.c.l.b16 %v1736
      %v1840 = vunpack.c.l.b16 %v1750
      %v1841 = vunpack.c.l.b16 %v1764
      %v1842 = vunpack.c.l.b16 %v1778
      %v1843 = vunpack.c.l.b16 %v1792
      %v1844 = vunpack.c.l.b16 %v1806
      %v1845 = vunpack.c.l.b16 %v1820
      %v1846 = vpack.c.b16 %v1839, %v1838
      %v1847 = vpack.c.b16 %v1841, %v1840
      %v1848 = vpack.c.b16 %v1843, %v1842
      %v1849 = vpack.c.b16 %v1845, %v1844
      %v1870 = vunpack.c.l.b16 %v1822
      %v1871 = vunpack.c.l.b16 %v1823
      %v1872 = vunpack.c.l.b16 %v1824
      %v1873 = vunpack.c.l.b16 %v1825
      %v1874 = vunpack.c.l.b16 %v1826
      %v1875 = vunpack.c.l.b16 %v1827
      %v1876 = vunpack.c.l.b16 %v1828
      %v1877 = vunpack.c.l.b16 %v1829
      %v1878 = vunpack.c.l.b16 %v1830
      %v1879 = vunpack.c.l.b16 %v1831
      %v1880 = vunpack.c.l.b16 %v1832
      %v1881 = vunpack.c.l.b16 %v1833
      %v1882 = vunpack.c.l.b16 %v1834
      %v1883 = vunpack.c.l.b16 %v1835
      %v1884 = vunpack.c.l.b16 %v1836
      %v1885 = vunpack.c.l.b16 %v1837
      %v1886 = vpack.c.b16 %v1871, %v1870
      %v1887 = vpack.c.b16 %v1873, %v1872
      %v1888 = vpack.c.b16 %v1875, %v1874
      %v1889 = vpack.c.b16 %v1877, %v1876
      %v1890 = vpack.c.b16 %v1879, %v1878
      %v1891 = vpack.c.b16 %v1881, %v1880
      %v1892 = vpack.c.b16 %v1883, %v1882
      %v1893 = vpack.c.b16 %v1885, %v1884
      %1902 = vmatprep.subr.bf16.mxu0 0
      %1903 = vmatpush1.bf16.msra.mxu0 %v1893
      %1904 = vmatprep.subr.bf16.mxu0 0
      %1905 = vmatpush1.bf16.msra.mxu0 %v1892
      %1906 = vmatprep.subr.bf16.mxu0 0
      %1907 = vmatpush1.bf16.msra.mxu0 %v1891
      %1908 = vmatprep.subr.bf16.mxu0 0
      %1909 = vmatpush1.bf16.msra.mxu0 %v1890
      %1910 = vmatprep.subr.bf16.mxu0 0
      %1911 = vmatpush1.bf16.msra.mxu0 %v1889
      %1912 = vmatprep.subr.bf16.mxu0 0
      %1913 = vmatpush1.bf16.msra.mxu0 %v1888
      %1914 = vmatprep.subr.bf16.mxu0 0
      %1915 = vmatpush1.bf16.msra.mxu0 %v1887
      %1916 = vmatprep.subr.bf16.mxu0 0
      %1917 = vmatpush1.bf16.msra.mxu0 %v1886
      %1918 = vmatprep.subr.bf16.mxu0 0
      %1919 = vmatpush2.bf16.msra.mxu0 0
      %1920 = vmatprep.subr.bf16.mxu0 0
      %1921 = vmatpush2.bf16.msra.mxu0 0
      %1922 = vmatprep.subr.bf16.mxu0 0
      %1923 = vmatpush2.bf16.msra.mxu0 0
      %1924 = vmatprep.subr.bf16.mxu0 0
      %1925 = vmatpush2.bf16.msra.mxu0 0
      %1926 = vmatprep.subr.bf16.mxu0 0
      %1927 = vmatpush2.bf16.msra.mxu0 0
      %1928 = vmatprep.subr.bf16.mxu0 0
      %1929 = vmatpush2.bf16.msra.mxu0 0
      %1930 = vmatprep.subr.bf16.mxu0 0
      %1931 = vmatpush2.bf16.msra.mxu0 0
      %1932 = vmatprep.subr.bf16.mxu0 0
      %1933 = vmatpush2.bf16.msra.mxu0 0
      %1934 = vmatprep.mubr.bf16.mxu0 0
      %1935 = vmatmul.mubr.bf16.gmra.mxu0 %v1846
      %v1936 = vpop.f32.mrf.mxu0
      %v1937 = vadd.f32 0.0, %v1936
      %v1938 = vpop.f32.mrf.mxu0
      %v1939 = vpop.f32.mrf.mxu0
      %v1940 = vadd.f32 0.0, %v1939
      %v1941 = vpop.f32.mrf.mxu0
      %1942 = vmatprep.mubr.bf16.mxu0 0
      %1943 = vmatmul.mubr.bf16.gmra.mxu0 %v1847
      %v1944 = vpop.f32.mrf.mxu0
      %v1945 = vadd.f32 0.0, %v1944
      %v1946 = vpop.f32.mrf.mxu0
      %v1947 = vpop.f32.mrf.mxu0
      %v1948 = vadd.f32 0.0, %v1947
      %v1949 = vpop.f32.mrf.mxu0
      %1950 = vmatprep.mubr.bf16.mxu0 0
      %1951 = vmatmul.mubr.bf16.gmra.mxu0 %v1848
      %v1952 = vpop.f32.mrf.mxu0
      %v1953 = vadd.f32 0.0, %v1952
      %v1954 = vpop.f32.mrf.mxu0
      %v1955 = vpop.f32.mrf.mxu0
      %v1956 = vadd.f32 0.0, %v1955
      %v1957 = vpop.f32.mrf.mxu0
      %1958 = vmatprep.mubr.bf16.mxu0 0
      %1959 = vmatmul.mubr.bf16.gmra.mxu0 %v1849
      %v1960 = vpop.f32.mrf.mxu0
      %v1961 = vadd.f32 0.0, %v1960
      %v1962 = vpop.f32.mrf.mxu0
      %v1963 = vpop.f32.mrf.mxu0
      %v1964 = vadd.f32 0.0, %v1963
      %v1965 = vpop.f32.mrf.mxu0
      %1966 = vdwg.mxu0
      %v1967 = vadd.f32 %v1685, %v1937
      %v1968 = vadd.f32 %v1686, %v1940
      %v1969 = vadd.f32 %v1687, %v1945
      %v1970 = vadd.f32 %v1688, %v1948
      %v1971 = vadd.f32 %v1689, %v1953
      %v1972 = vadd.f32 %v1690, %v1956
      %v1973 = vadd.f32 %v1691, %v1961
      %v1974 = vadd.f32 %v1692, %v1964
      %v1975 = vld [vmem:[%s1522] sm:$0xe]
      %v1976 = vld [vmem:[%s1522 + $0x8] sm:$0xe]
      %v1977 = vld [vmem:[%s1522 + $0x10] sm:$0xe]
      %v1978 = vld [vmem:[%s1522 + $0x18] sm:$0xe]
      %v1979 = vld [vmem:[%s1522 + $0x20] sm:$0xe]
      %v1980 = vld [vmem:[%s1522 + $0x28] sm:$0xe]
      %v1981 = vld [vmem:[%s1522 + $0x30] sm:$0xe]
      %v1982 = vld [vmem:[%s1522 + $0x38] sm:$0xe]
      %v1999 = vrot.slane %v1975, 5
      %v2000 = vrot.slane %v1999, 4
      %v2001 = vrot.slane %v1694, 5
      %v2002 = vsel %vm672, %v2000, %v2001
      %v2003 = vrot.slane %v1976, 5
      %v2004 = vrot.slane %v2003, 4
      %v2005 = vrot.slane %v1696, 5
      %v2006 = vsel %vm672, %v2004, %v2005
      %v2007 = vrot.slane %v1977, 5
      %v2008 = vrot.slane %v2007, 4
      %v2009 = vrot.slane %v1698, 5
      %v2010 = vsel %vm672, %v2008, %v2009
      %v2011 = vrot.slane %v1978, 5
      %v2012 = vrot.slane %v2011, 4
      %v2013 = vrot.slane %v1700, 5
      %v2014 = vsel %vm672, %v2012, %v2013
      %v2015 = vrot.slane %v1979, 5
      %v2016 = vrot.slane %v2015, 4
      %v2017 = vrot.slane %v1702, 5
      %v2018 = vsel %vm672, %v2016, %v2017
      %v2019 = vrot.slane %v1980, 5
      %v2020 = vrot.slane %v2019, 4
      %v2021 = vrot.slane %v1704, 5
      %v2022 = vsel %vm672, %v2020, %v2021
      %v2023 = vrot.slane %v1981, 5
      %v2024 = vrot.slane %v2023, 4
      %v2025 = vrot.slane %v1706, 5
      %v2026 = vsel %vm672, %v2024, %v2025
      %v2027 = vrot.slane %v1982, 5
      %v2028 = vrot.slane %v2027, 4
      %v2029 = vrot.slane %v1708, 5
      %v2030 = vsel %vm672, %v2028, %v2029
      %s2031 = scalar_lea.vmem %s1, 512
      %v2032 = vld [vmem:[%s2031] sm:$0xf]
      %v2033 = vld [vmem:[%s2031 + $0x4] sm:$0xf]
      %v2034 = vld [vmem:[%s2031 + $0x8] sm:$0xf]
      %v2035 = vld [vmem:[%s2031 + $0xc] sm:$0xf]
      %v2036 = vld [vmem:[%s2031 + $0x10] sm:$0xf]
      %v2037 = vld [vmem:[%s2031 + $0x14] sm:$0xf]
      %v2038 = vld [vmem:[%s2031 + $0x18] sm:$0xf]
      %v2039 = vld [vmem:[%s2031 + $0x1c] sm:$0xf]
      %v2040 = vld [vmem:[%s2031 + $0x20] sm:$0xf]
      %v2041 = vld [vmem:[%s2031 + $0x24] sm:$0xf]
      %v2042 = vld [vmem:[%s2031 + $0x28] sm:$0xf]
      %v2043 = vld [vmem:[%s2031 + $0x2c] sm:$0xf]
      %v2044 = vld [vmem:[%s2031 + $0x30] sm:$0xf]
      %v2045 = vld [vmem:[%s2031 + $0x34] sm:$0xf]
      %v2046 = vld [vmem:[%s2031 + $0x38] sm:$0xf]
      %v2047 = vld [vmem:[%s2031 + $0x3c] sm:$0xf]
      %v2048 = vunpack.c.l.b16 %v2002
      %v2049 = vunpack.c.l.b16 %v2006
      %v2050 = vunpack.c.l.b16 %v2010
      %v2051 = vunpack.c.l.b16 %v2014
      %v2052 = vunpack.c.l.b16 %v2018
      %v2053 = vunpack.c.l.b16 %v2022
      %v2054 = vunpack.c.l.b16 %v2026
      %v2055 = vunpack.c.l.b16 %v2030
      %v2056 = vpack.c.b16 %v2049, %v2048
      %v2057 = vpack.c.b16 %v2051, %v2050
      %v2058 = vpack.c.b16 %v2053, %v2052
      %v2059 = vpack.c.b16 %v2055, %v2054
      %v2080 = vunpack.c.l.b16 %v2032
      %v2081 = vunpack.c.l.b16 %v2033
      %v2082 = vunpack.c.l.b16 %v2034
      %v2083 = vunpack.c.l.b16 %v2035
      %v2084 = vunpack.c.l.b16 %v2036
      %v2085 = vunpack.c.l.b16 %v2037
      %v2086 = vunpack.c.l.b16 %v2038
      %v2087 = vunpack.c.l.b16 %v2039
      %v2088 = vunpack.c.l.b16 %v2040
      %v2089 = vunpack.c.l.b16 %v2041
      %v2090 = vunpack.c.l.b16 %v2042
      %v2091 = vunpack.c.l.b16 %v2043
      %v2092 = vunpack.c.l.b16 %v2044
      %v2093 = vunpack.c.l.b16 %v2045
      %v2094 = vunpack.c.l.b16 %v2046
      %v2095 = vunpack.c.l.b16 %v2047
      %v2096 = vpack.c.b16 %v2081, %v2080
      %v2097 = vpack.c.b16 %v2083, %v2082
      %v2098 = vpack.c.b16 %v2085, %v2084
      %v2099 = vpack.c.b16 %v2087, %v2086
      %v2100 = vpack.c.b16 %v2089, %v2088
      %v2101 = vpack.c.b16 %v2091, %v2090
      %v2102 = vpack.c.b16 %v2093, %v2092
      %v2103 = vpack.c.b16 %v2095, %v2094
      %2112 = vmatprep.subr.bf16.mxu0 0
      %2113 = vmatpush1.bf16.msra.mxu0 %v2103
      %2114 = vmatprep.subr.bf16.mxu0 0
      %2115 = vmatpush1.bf16.msra.mxu0 %v2102
      %2116 = vmatprep.subr.bf16.mxu0 0
      %2117 = vmatpush1.bf16.msra.mxu0 %v2101
      %2118 = vmatprep.subr.bf16.mxu0 0
      %2119 = vmatpush1.bf16.msra.mxu0 %v2100
      %2120 = vmatprep.subr.bf16.mxu0 0
      %2121 = vmatpush1.bf16.msra.mxu0 %v2099
      %2122 = vmatprep.subr.bf16.mxu0 0
      %2123 = vmatpush1.bf16.msra.mxu0 %v2098
      %2124 = vmatprep.subr.bf16.mxu0 0
      %2125 = vmatpush1.bf16.msra.mxu0 %v2097
      %2126 = vmatprep.subr.bf16.mxu0 0
      %2127 = vmatpush1.bf16.msra.mxu0 %v2096
      %2128 = vmatprep.subr.bf16.mxu0 0
      %2129 = vmatpush2.bf16.msra.mxu0 0
      %2130 = vmatprep.subr.bf16.mxu0 0
      %2131 = vmatpush2.bf16.msra.mxu0 0
      %2132 = vmatprep.subr.bf16.mxu0 0
      %2133 = vmatpush2.bf16.msra.mxu0 0
      %2134 = vmatprep.subr.bf16.mxu0 0
      %2135 = vmatpush2.bf16.msra.mxu0 0
      %2136 = vmatprep.subr.bf16.mxu0 0
      %2137 = vmatpush2.bf16.msra.mxu0 0
      %2138 = vmatprep.subr.bf16.mxu0 0
      %2139 = vmatpush2.bf16.msra.mxu0 0
      %2140 = vmatprep.subr.bf16.mxu0 0
      %2141 = vmatpush2.bf16.msra.mxu0 0
      %2142 = vmatprep.subr.bf16.mxu0 0
      %2143 = vmatpush2.bf16.msra.mxu0 0
      %2144 = vmatprep.mubr.bf16.mxu0 0
      %2145 = vmatmul.mubr.bf16.gmra.mxu0 %v2056
      %v2146 = vpop.f32.mrf.mxu0
      %v2147 = vadd.f32 0.0, %v2146
      %v2148 = vpop.f32.mrf.mxu0
      %v2149 = vpop.f32.mrf.mxu0
      %v2150 = vadd.f32 0.0, %v2149
      %v2151 = vpop.f32.mrf.mxu0
      %2152 = vmatprep.mubr.bf16.mxu0 0
      %2153 = vmatmul.mubr.bf16.gmra.mxu0 %v2057
      %v2154 = vpop.f32.mrf.mxu0
      %v2155 = vadd.f32 0.0, %v2154
      %v2156 = vpop.f32.mrf.mxu0
      %v2157 = vpop.f32.mrf.mxu0
      %v2158 = vadd.f32 0.0, %v2157
      %v2159 = vpop.f32.mrf.mxu0
      %2160 = vmatprep.mubr.bf16.mxu0 0
      %2161 = vmatmul.mubr.bf16.gmra.mxu0 %v2058
      %v2162 = vpop.f32.mrf.mxu0
      %v2163 = vadd.f32 0.0, %v2162
      %v2164 = vpop.f32.mrf.mxu0
      %v2165 = vpop.f32.mrf.mxu0
      %v2166 = vadd.f32 0.0, %v2165
      %v2167 = vpop.f32.mrf.mxu0
      %2168 = vmatprep.mubr.bf16.mxu0 0
      %2169 = vmatmul.mubr.bf16.gmra.mxu0 %v2059
      %v2170 = vpop.f32.mrf.mxu0
      %v2171 = vadd.f32 0.0, %v2170
      %v2172 = vpop.f32.mrf.mxu0
      %v2173 = vpop.f32.mrf.mxu0
      %v2174 = vadd.f32 0.0, %v2173
      %v2175 = vpop.f32.mrf.mxu0
      %2176 = vdwg.mxu0
      %v2177 = vadd.f32 %v1967, %v2147
      %v2178 = vadd.f32 %v1968, %v2150
      %v2179 = vadd.f32 %v1969, %v2155
      %v2180 = vadd.f32 %v1970, %v2158
      %v2181 = vadd.f32 %v1971, %v2163
      %v2182 = vadd.f32 %v1972, %v2166
      %v2183 = vadd.f32 %v1973, %v2171
      %v2184 = vadd.f32 %v1974, %v2174
      %v2185 = vpack.c.bf16 %v2178, %v2177
      %v2186 = vpack.c.bf16 %v2180, %v2179
      %v2187 = vpack.c.bf16 %v2182, %v2181
      %v2188 = vpack.c.bf16 %v2184, %v2183
      %v2193 = vunpack.c.l.b16 %v2185
      %v2194 = vunpack.c.h.b16 %v2185
      %v2195 = vunpack.c.l.b16 %v2186
      %v2196 = vunpack.c.h.b16 %v2186
      %v2197 = vunpack.c.l.b16 %v2187
      %v2198 = vunpack.c.h.b16 %v2187
      %v2199 = vunpack.c.l.b16 %v2188
      %v2200 = vunpack.c.h.b16 %v2188
      %v2201 = vpack.c.b16 %v2193, %v2193
      %v2202 = vpack.c.b16 %v2194, %v2194
      %v2203 = vpack.c.b16 %v2195, %v2195
      %v2204 = vpack.c.b16 %v2196, %v2196
      %v2205 = vpack.c.b16 %v2197, %v2197
      %v2206 = vpack.c.b16 %v2198, %v2198
      %v2207 = vpack.c.b16 %v2199, %v2199
      %v2208 = vpack.c.b16 %v2200, %v2200
      %2217 = vst [vmem:[%s208] sm:$0xf] %v2201
      %2218 = vst [vmem:[%s208 + $0x4] sm:$0xf] %v2202
      %2219 = vst [vmem:[%s208 + $0x8] sm:$0xf] %v2203
      %2220 = vst [vmem:[%s208 + $0xc] sm:$0xf] %v2204
      %2221 = vst [vmem:[%s208 + $0x10] sm:$0xf] %v2205
      %2222 = vst [vmem:[%s208 + $0x14] sm:$0xf] %v2206
      %2223 = vst [vmem:[%s208 + $0x18] sm:$0xf] %v2207
      %2224 = vst [vmem:[%s208 + $0x1c] sm:$0xf] %v2208
      %v2225 = vadd.f32 %v2177, %v2178
      %v2226 = vadd.f32 %v2225, %v2179
      %v2227 = vadd.f32 %v2226, %v2180
      %v2228 = vadd.f32 %v2227, %v2181
      %v2229 = vadd.f32 %v2228, %v2182
      %v2230 = vadd.f32 %v2229, %v2183
      %v2231 = vadd.f32 %v2230, %v2184
      %v2232 = vrot.slane %v2231, 4
      %v2233 = vadd.f32 %v2231, %v2232
      %v2234 = vrot.slane %v2233, 2
      %v2235 = vadd.f32 %v2233, %v2234
      %v2236 = vrot.slane %v2235, 1
      %v2237 = vadd.f32 %v2235, %v2236
      %2238 = vst [vmem:[%s211] sm:$0x1] %v2237
      %v2239 = vmul.f32 %v2177, %v2177
      %v2240 = vmul.f32 %v2178, %v2178
      %v2241 = vmul.f32 %v2179, %v2179
      %v2242 = vmul.f32 %v2180, %v2180
      %v2243 = vmul.f32 %v2181, %v2181
      %v2244 = vmul.f32 %v2182, %v2182
      %v2245 = vmul.f32 %v2183, %v2183
      %v2246 = vmul.f32 %v2184, %v2184
      %v2247 = vadd.f32 %v2239, %v2240
      %v2248 = vadd.f32 %v2247, %v2241
      %v2249 = vadd.f32 %v2248, %v2242
      %v2250 = vadd.f32 %v2249, %v2243
      %v2251 = vadd.f32 %v2250, %v2244
      %v2252 = vadd.f32 %v2251, %v2245
      %v2253 = vadd.f32 %v2252, %v2246
      %v2254 = vrot.slane %v2253, 4
      %v2255 = vadd.f32 %v2253, %v2254
      %v2256 = vrot.slane %v2255, 2
      %v2257 = vadd.f32 %v2255, %v2256
      %v2258 = vrot.slane %v2257, 1
      %v2259 = vadd.f32 %v2257, %v2258
      %2260 = vst [vmem:[%s214] sm:$0x1] %v2259
      %p2261 = scmp.lt.s32.totalorder %s16, 1
      %s2262 = scalar_select %p2261, %s16, 1
      %s2263 = smul.addr %s2262, 8
      %s2264 = smul.addr %s2263, 4
      %s2265 = scalar_lea.vmem %s2, %s2264
      %p2266 = scmp.lt.s32.totalorder %s16, 1
      %s2267 = scalar_select %p2266, %s16, 1
      %s2268 = scalar_lea.vmem %s3, %s2267
      %p2269 = scmp.lt.s32.totalorder %s16, 1
      %s2270 = scalar_select %p2269, %s16, 1
      %s2271 = scalar_lea.vmem %s4, %s2270
      // Predicated region
      $region29: #{basic_block_forward.10} parent=27 // pred_check
        %p2272 = pneg %p81
      $region30: #{basic_block_forward.10} parent=27 // pred_check_branch
        %2274 = sbr.rel (%p2272) target = $region32
      $region31: #{basic_block_forward.10} parent=27 // pred_region
        _
      $region32: #{basic_block_forward.10} parent=27 // pred_fallthru
        _
      // Predicated region
      $region33: #{basic_block_forward.10} parent=27 // pred_check
        %p2275 = pneg %p107
      $region34: #{basic_block_forward.10} parent=27 // pred_check_branch
        %2277 = sbr.rel (%p2275) target = $region36
      $region35: #{basic_block_forward.10} parent=27 // pred_region
        _
      $region36: #{basic_block_forward.10} parent=27 // pred_fallthru
        _
      // Predicated region
      $region37: #{basic_block_forward.10} parent=27 // pred_check
        %p2278 = pneg %p133
      $region38: #{basic_block_forward.10} parent=27 // pred_check_branch
        %2280 = sbr.rel (%p2278) target = $region40
      $region39: #{basic_block_forward.10} parent=27 // pred_region
        _
      $region40: #{basic_block_forward.10} parent=27 // pred_fallthru
        _
    $region28: #{basic_block_forward.10} parent=5 // pred_fallthru
      _
    %p2281 = scmp.le.s32.totalorder 2, %s11
    // Predicated region
    $region41: #{basic_block_forward.10} parent=5 // pred_check
      %p2282 = pneg %p2281
    $region42: #{basic_block_forward.10} parent=5 // pred_check_branch
      %2284 = sbr.rel (%p2282) target = $region44
    $region43: #{basic_block_forward.10} parent=5 // pred_region
      %s2285 = ssub.s32 %s11, 2
      // Predicated region
      $region45: #{basic_block_forward.10} parent=43 // pred_check
        %p2286 = pneg %p87
      $region46: #{basic_block_forward.10} parent=43 // pred_check_branch
        %2288 = sbr.rel (%p2286) target = $region48
      $region47: #{basic_block_forward.10} parent=43 // pred_region
        %p2289 = scmp.lt.s32.totalorder %s17, 1
        %s2290 = scalar_select %p2289, %s17, 1
        %s2291 = smul.addr %s2290, 8
        %s2292 = smul.addr %s2291, 4
        %s2293 = scalar_lea.vmem %s2, %s2292
      $region48: #{basic_block_forward.10} parent=43 // pred_fallthru
        _
      // Predicated region
      $region49: #{basic_block_forward.10} parent=43 // pred_check
        %p2294 = pneg %p113
      $region50: #{basic_block_forward.10} parent=43 // pred_check_branch
        %2296 = sbr.rel (%p2294) target = $region52
      $region51: #{basic_block_forward.10} parent=43 // pred_region
        %p2297 = scmp.lt.s32.totalorder %s17, 1
        %s2298 = scalar_select %p2297, %s17, 1
        %s2299 = scalar_lea.vmem %s3, %s2298
      $region52: #{basic_block_forward.10} parent=43 // pred_fallthru
        _
      // Predicated region
      $region53: #{basic_block_forward.10} parent=43 // pred_check
        %p2300 = pneg %p139
      $region54: #{basic_block_forward.10} parent=43 // pred_check_branch
        %2302 = sbr.rel (%p2300) target = $region56
      $region55: #{basic_block_forward.10} parent=43 // pred_region
        %p2303 = scmp.lt.s32.totalorder %s17, 1
        %s2304 = scalar_select %p2303, %s17, 1
        %s2305 = scalar_lea.vmem %s4, %s2304
      $region56: #{basic_block_forward.10} parent=43 // pred_fallthru
        _
    $region44: #{basic_block_forward.10} parent=5 // pred_fallthru
      _
  $region6: #{basic_block_forward.10} parent=0 // loop_footer
    %s15 = sadd.s32 1, %s11
  $region7: #{basic_block_forward.10} parent=0 // loop_footer_branch
    %10 = sbr.rel target = $region3
  $region8: #{basic_block_forward.10} parent=0 // loop_exit
    _

</llo_original>
